<compile_context>
chip_gen: v6e
topology: v6e:2x2x1
jax: 0.10.0
libtpu: 0.0.40
codegen_flags: <defaults>
</compile_context>

<pallas_src>
import functools

import jax
import jax.numpy as jnp
import numpy as np
from jax.experimental import pallas as pl
from jax.experimental.pallas import tpu as pltpu


# ---------------------------------------------------------------------------
# Fused bidirectional CRNN recurrence kernel: one grid step = one (direction, frame)
# ---------------------------------------------------------------------------
def _bcrnn_step_kernel(*refs, nb, nx, ny, hid, k, dil, pad, pad_y, iteration):
    """refs = (xcol, [xip,] whh, wx, eye, out, lhs_scratch, hpad_scratch).

    xcol : (1, m, k*k*nc + 1)  i2h im2col columns + ones column (bias fold), m=nb*nx*ny
    xip  : (1, nb, nx+2, ny+2, hid)  padded channel-last iteration hidden (optional)
    whh  : (k*k*hid*(2 if iteration else 1), hid)  h2h [+ ih2ih] taps folded into K
    wx   : (k*k*nc + 1, hid)  i2h taps + total conv bias as the last row
    eye  : (hid, hid) identity (MXU transpose of the per-step result)
    out  : (1, 1, nb, hid, nx*ny)  channel-major, lane-dense output block
    lhs  : VMEM (nb, nx, ny, Kh)   folded-K im2col staging (rebuilt every step)
    hpad : VMEM (nb, nx+2*pad, ny+2*pad_y, hid)  zero-halo hidden state, persists
           across the time axis (never leaves VMEM).
    """
    if iteration:
        xcol_ref, xip_ref, whh_ref, wx_ref, eye_ref, o_ref, lhs_ref, hpad_ref = refs
    else:
        xcol_ref, whh_ref, wx_ref, eye_ref, o_ref, lhs_ref, hpad_ref = refs
        xip_ref = None

    t = pl.program_id(1)
    kk = k * k
    m = nb * nx * ny
    s = nx * ny
    kh = kk * hid * (2 if iteration else 1)

    # Reset the hidden state at the start of each sweep.  This is what makes the
    # forward and backward sweeps independent (required for the "parallel" direction
    # axis / the backward sweep's correctness) -- do not remove.
    @pl.when(t == 0)
    def _init():
        hpad_ref[...] = jnp.zeros_like(hpad_ref)

    # ---- stage the folded-K im2col LHS (aligned reads feed ONE MXU dot) ----------
    # h2h region: 9 shifted slices of the zero-halo hidden (h_{t-1}).
    for ky in range(k):
        x0 = ky * dil
        for kx in range(k):
            y0 = pad_y - pad + kx * dil
            c0 = (ky * k + kx) * hid
            lhs_ref[:, :, :, c0:c0 + hid] = hpad_ref[:, x0:x0 + nx, y0:y0 + ny, :]
    # ih2ih region (iteration path): in-kernel im2col of the streamed padded frame,
    # so the 9x-expanded hid-sized im2col never touches HBM.
    if iteration:
        base = kk * hid
        for ky in range(k):
            for kx in range(k):
                c0 = base + (ky * k + kx) * hid
                lhs_ref[:, :, :, c0:c0 + hid] = xip_ref[0, :, ky:ky + nx, kx:kx + ny, :]

    # ---- one folded-K dot (h2h [+ ih2ih]) + one tiny dot (i2h + biases) ----------
    lhs2 = lhs_ref[...].reshape(m, kh)
    acc = jnp.dot(lhs2, whh_ref[...], preferred_element_type=jnp.float32)
    acc = acc + jnp.dot(xcol_ref[0], wx_ref[...], preferred_element_type=jnp.float32)
    h = jnp.where(acc >= 0.0, acc, 0.01 * acc)            # LeakyReLU(0.01)

    # ---- write the new hidden into the interior of the zero-halo state -----------
    # (pad_y is 8-aligned so this is a sublane-aligned store).
    hpad_ref[:, pad:pad + nx, pad_y:pad_y + ny, :] = h.reshape(nb, nx, ny, hid)

    # ---- lane-dense channel-major output store ------------------------------------
    # (hid, m) transpose done on the MXU via an identity matmul (robust path), then
    # per-batch 128-aligned lane slices -> the final NCHW result is a free reshape.
    h_cm = jax.lax.dot_general(eye_ref[...], h, (((1,), (1,)), ((), ())),
                               preferred_element_type=jnp.float32)      # (hid, m)
    for b in range(nb):
        o_ref[0, 0, b] = h_cm[:, b * s:(b + 1) * s]


# ---------------------------------------------------------------------------
# BCRNNlayer forward (Pallas)
# ---------------------------------------------------------------------------
def bcrnn_forward(params, inp_nchw, inp_it_nchw=None, *, hidden_size, kernel_size,
                  dilation):
    """inp_nchw: (nt, nb, nc, nx, ny); inp_it_nchw: (nt, nb, hidden, nx, ny) or None.
    Returns (nt, nb, hidden, nx, ny), matching the PyTorch module."""
    nt, nb, nc, nx, ny = inp_nchw.shape
    k, dil, hid = kernel_size, dilation, hidden_size
    pad = dil                                   # i2h / h2h conv padding (module spec)
    assert 2 * pad == dil * (k - 1), "recurrence requires a 'same' h2h conv (kernel_size=3)"
    iteration = inp_it_nchw is not None
    kk = k * k
    m = nb * nx * ny
    s = nx * ny
    f32 = jnp.float32

    # ---- i2h columns (+ ones column folding ALL conv biases); nc is tiny so this
    #      small im2col stays in HBM.  TODO(synk): stage in-kernel for large nc.
    x = jnp.transpose(inp_nchw, (0, 1, 3, 4, 2)).astype(f32)      # (nt, nb, nx, ny, nc)
    xpad = jnp.pad(x, ((0, 0), (0, 0), (pad, pad), (pad, pad), (0, 0)))
    cols = [xpad[:, :, ky * dil:ky * dil + nx, kx * dil:kx * dil + ny, :]
            for ky in range(k) for kx in range(k)]
    xcol = jnp.stack(cols, axis=4).reshape(nt, m, kk * nc)
    xcol = jnp.concatenate([xcol, jnp.ones((nt, m, 1), f32)], axis=-1)
    kx_dim = kk * nc + 1

    bias = params["b_i2h"] + params["b_h2h"]
    if iteration:
        bias = bias + params["b_ih2ih"]
    wx = jnp.concatenate([params["w_i2h"].reshape(kk * nc, hid).astype(f32),
                          bias.reshape(1, hid).astype(f32)], axis=0)   # (kx_dim, hid)

    whh_parts = [params["w_h2h"].reshape(kk * hid, hid).astype(f32)]
    if iteration:
        whh_parts.append(params["w_ih2ih"].reshape(kk * hid, hid).astype(f32))
    whh = jnp.concatenate(whh_parts, axis=0)                           # (kh_dim, hid)
    kh_dim = whh.shape[0]

    eye = jnp.eye(hid, dtype=f32)
    pad_y = -(-pad // 8) * 8                    # 8-aligned y halo for the state write

    def tidx(d, t):                             # reversed time for the backward sweep
        return d * (nt - 1) + (1 - 2 * d) * t

    in_specs = [pl.BlockSpec((1, m, kx_dim), lambda d, t: (tidx(d, t), 0, 0))]
    args = [xcol]
    if iteration:
        pi = k // 2                             # ih2ih conv padding
        xi = jnp.transpose(inp_it_nchw, (0, 1, 3, 4, 2)).astype(f32)
        xip = jnp.pad(xi, ((0, 0), (0, 0), (pi, pi), (pi, pi), (0, 0)))
        in_specs.append(pl.BlockSpec((1, nb, nx + 2 * pi, ny + 2 * pi, hid),
                                     lambda d, t: (tidx(d, t), 0, 0, 0, 0)))
        args.append(xip)
    in_specs += [pl.BlockSpec((kh_dim, hid), lambda d, t: (0, 0)),
                 pl.BlockSpec((kx_dim, hid), lambda d, t: (0, 0)),
                 pl.BlockSpec((hid, hid), lambda d, t: (0, 0))]
    args += [whh, wx, eye]

    out_spec = pl.BlockSpec((1, 1, nb, hid, s),
                            lambda d, t: (d, tidx(d, t), 0, 0, 0))

    kern = functools.partial(_bcrnn_step_kernel, nb=nb, nx=nx, ny=ny, hid=hid,
                             k=k, dil=dil, pad=pad, pad_y=pad_y, iteration=iteration)

    out2 = pl.pallas_call(
        kern,
        out_shape=jax.ShapeDtypeStruct((2, nt, nb, hid, s), f32),
        grid=(2, nt),                            # (direction, time)
        in_specs=in_specs,
        out_specs=out_spec,
        scratch_shapes=[pltpu.VMEM((nb, nx, ny, kh_dim), f32),
                        pltpu.VMEM((nb, nx + 2 * pad, ny + 2 * pad_y, hid), f32)],
        compiler_params=pltpu.CompilerParams(
            dimension_semantics=("parallel", "arbitrary"),
            vmem_limit_bytes=32 * 1024 * 1024),
    )(*args)

    # forward + backward sum; the NCHW result is a free reshape of the channel-major
    # kernel output (no external transpose pass).
    # TODO(synk): `test` flag / torch.no_grad / .cuda() placement have no kernel-side effect.
    return (out2[0] + out2[1]).reshape(nt, nb, hid, nx, ny)


# ---------------------------------------------------------------------------
# Pure-JAX reference (for correctness check only)
# ---------------------------------------------------------------------------
def _conv_ref(x_nchw, w_hwio, b, dil, pad):
    w = jnp.transpose(w_hwio, (3, 2, 0, 1))  # OIHW
    y = jax.lax.conv_general_dilated(
        x_nchw, w, window_strides=(1, 1),
        padding=[(pad, pad), (pad, pad)],
        rhs_dilation=(dil, dil),
        dimension_numbers=("NCHW", "OIHW", "NCHW"),
        precision=jax.lax.Precision.HIGHEST)
    return y + b[None, :, None, None]


def bcrnn_ref(params, inp, inp_it, *, hidden_size, kernel_size, dilation):
    nt, nb, nc, nx, ny = inp.shape

    def lrelu(v):
        return jnp.where(v >= 0, v, 0.01 * v)

    def cell(x, h, hi):
        y = _conv_ref(x, params["w_i2h"], params["b_i2h"], dilation, dilation)
        y = y + _conv_ref(h, params["w_h2h"], params["b_h2h"], dilation, dilation)
        if hi is not None:
            y = y + _conv_ref(hi, params["w_ih2ih"], params["b_ih2ih"], 1, kernel_size // 2)
        return lrelu(y)

    hid0 = jnp.zeros((nb, hidden_size, nx, ny), jnp.float32)
    out_f, out_b = [], []
    h = hid0
    for i in range(nt):
        h = cell(inp[i], h, None if inp_it is None else inp_it[i])
        out_f.append(h)
    h = hid0
    for i in range(nt):
        j = nt - i - 1
        h = cell(inp[j], h, None if inp_it is None else inp_it[j])
        out_b.append(h)
    return jnp.stack(out_f, 0) + jnp.stack(out_b[::-1], 0)


# ---------------------------------------------------------------------------
if __name__ == "__main__":
    key = jax.random.PRNGKey(0)
    nt, nb, nc, nx, ny = 4, 2, 2, 16, 16
    hidden, k, dil = 32, 3, 2

    ks = jax.random.split(key, 8)
    params = {
        "w_i2h":   0.1 * jax.random.normal(ks[0], (k, k, nc, hidden), jnp.float32),
        "b_i2h":  0.05 * jax.random.normal(ks[1], (hidden,), jnp.float32),
        "w_h2h":   0.1 * jax.random.normal(ks[2], (k, k, hidden, hidden), jnp.float32),
        "b_h2h":  0.05 * jax.random.normal(ks[3], (hidden,), jnp.float32),
        "w_ih2ih": 0.1 * jax.random.normal(ks[4], (k, k, hidden, hidden), jnp.float32),
        "b_ih2ih": 0.05 * jax.random.normal(ks[5], (hidden,), jnp.float32),
    }
    inp = jax.random.normal(ks[6], (nt, nb, nc, nx, ny), jnp.float32)
    inp_it = jax.random.normal(ks[7], (nt, nb, hidden, nx, ny), jnp.float32)

    fwd = jax.jit(functools.partial(bcrnn_forward, hidden_size=hidden,
                                    kernel_size=k, dilation=dil))

    # iteration=False path (input_iteration=None) and iteration=True path
    out1 = fwd(params, inp, None)
    out2 = fwd(params, inp, inp_it)
    jax.block_until_ready((out1, out2))

    ref1 = bcrnn_ref(params, inp, None, hidden_size=hidden, kernel_size=k, dilation=dil)
    ref2 = bcrnn_ref(params, inp, inp_it, hidden_size=hidden, kernel_size=k, dilation=dil)

    # Tolerance documented: in-kernel dots run at the MXU's default f32 precision
    # while the reference uses Precision.HIGHEST (per perf review, looser tolerance).
    tol = dict(atol=5e-3, rtol=5e-3)
    ok = (out1.shape == (nt, nb, hidden, nx, ny)
          and out2.shape == (nt, nb, hidden, nx, ny)
          and np.allclose(np.asarray(out1), np.asarray(ref1), **tol)
          and np.allclose(np.asarray(out2), np.asarray(ref2), **tol))
    if not ok:
        raise SystemExit("BCRNN Pallas kernel mismatch vs reference")
    print("KERNEL_OK")
</pallas_src>

<mosaic_0001>
module attributes {stable_mosaic.version = 11 : i64} {
  func.func @_bcrnn_step_kernel(%arg0: i32, %arg1: i32, %arg2: memref<1x512x19xf32, #tpu.memory_space<vmem>>, %arg3: memref<288x32xf32, #tpu.memory_space<vmem>>, %arg4: memref<19x32xf32, #tpu.memory_space<vmem>>, %arg5: memref<32x32xf32, #tpu.memory_space<vmem>>, %arg6: memref<1x1x2x32x256xf32, #tpu.memory_space<vmem>>, %arg7: memref<2x16x16x288xf32, #tpu.memory_space<vmem>>, %arg8: memref<2x20x32x32xf32, #tpu.memory_space<vmem>>) attributes {dimension_semantics = [#tpu.dimension_semantics<parallel>, #tpu.dimension_semantics<arbitrary>], iteration_bounds = array<i64: 2, 4>, scalar_prefetch = 0 : i64, scratch_operands = 2 : i64, tpu.core_type = #tpu.core_type<tc>, window_params = [{transform_indices = @transform_0, window_bounds = array<i64: 1, 512, 19>}, {pipeline_mode = #tpu.pipeline_mode<synchronous>, transform_indices = @transform_1, window_bounds = array<i64: 288, 32>}, {pipeline_mode = #tpu.pipeline_mode<synchronous>, transform_indices = @transform_2, window_bounds = array<i64: 19, 32>}, {pipeline_mode = #tpu.pipeline_mode<synchronous>, transform_indices = @transform_3, window_bounds = array<i64: 32, 32>}, {transform_indices = @transform_4, window_bounds = array<i64: 1, 1, 2, 32, 256>}]} {
    %c0_i32 = arith.constant 0 : i32
    %0 = arith.cmpi eq, %arg1, %c0_i32 : i32
    %1 = arith.extui %0 : i1 to i32
    %c0_i32_0 = arith.constant 0 : i32
    %2 = arith.cmpi ne, %1, %c0_i32_0 : i32
    scf.if %2 {
      %cst_89 = arith.constant 0.000000e+00 : f32
      %47 = vector.broadcast %cst_89 : f32 to vector<2x20x32x32xf32>
      %c0_90 = arith.constant 0 : index
      %c0_91 = arith.constant 0 : index
      %c0_92 = arith.constant 0 : index
      %c0_93 = arith.constant 0 : index
      %48 = vector.load %arg8[%c0_90, %c0_91, %c0_92, %c0_93] : memref<2x20x32x32xf32, #tpu.memory_space<vmem>>, vector<2x20x32x32xf32>
      tpu.vector_store %arg8[%c0_90, %c0_91, %c0_92, %c0_93], %47 {strides = array<i32>} : memref<2x20x32x32xf32, #tpu.memory_space<vmem>>, vector<2x20x32x32xf32>,
    } else {
    }
    %c0 = arith.constant 0 : index
    %c0_1 = arith.constant 0 : index
    %c6 = arith.constant 6 : index
    %c0_2 = arith.constant 0 : index
    %3 = vector.load %arg8[%c0, %c0_1, %c6, %c0_2] : memref<2x20x32x32xf32, #tpu.memory_space<vmem>>, vector<2x16x16x32xf32>
    %c0_3 = arith.constant 0 : index
    %c0_4 = arith.constant 0 : index
    %c0_5 = arith.constant 0 : index
    %c0_6 = arith.constant 0 : index
    %4 = vector.load %arg7[%c0_3, %c0_4, %c0_5, %c0_6] : memref<2x16x16x288xf32, #tpu.memory_space<vmem>>, vector<2x16x16x32xf32>
    tpu.vector_store %arg7[%c0_3, %c0_4, %c0_5, %c0_6], %3 {strides = array<i32>} : memref<2x16x16x288xf32, #tpu.memory_space<vmem>>, vector<2x16x16x32xf32>,
    %c0_7 = arith.constant 0 : index
    %c0_8 = arith.constant 0 : index
    %c8 = arith.constant 8 : index
    %c0_9 = arith.constant 0 : index
    %5 = vector.load %arg8[%c0_7, %c0_8, %c8, %c0_9] : memref<2x20x32x32xf32, #tpu.memory_space<vmem>>, vector<2x16x16x32xf32>
    %c0_10 = arith.constant 0 : index
    %c0_11 = arith.constant 0 : index
    %c0_12 = arith.constant 0 : index
    %c32 = arith.constant 32 : index
    %6 = vector.load %arg7[%c0_10, %c0_11, %c0_12, %c32] : memref<2x16x16x288xf32, #tpu.memory_space<vmem>>, vector<2x16x16x32xf32>
    tpu.vector_store %arg7[%c0_10, %c0_11, %c0_12, %c32], %5 {strides = array<i32>} : memref<2x16x16x288xf32, #tpu.memory_space<vmem>>, vector<2x16x16x32xf32>,
    %c0_13 = arith.constant 0 : index
    %c0_14 = arith.constant 0 : index
    %c10 = arith.constant 10 : index
    %c0_15 = arith.constant 0 : index
    %7 = vector.load %arg8[%c0_13, %c0_14, %c10, %c0_15] : memref<2x20x32x32xf32, #tpu.memory_space<vmem>>, vector<2x16x16x32xf32>
    %c0_16 = arith.constant 0 : index
    %c0_17 = arith.constant 0 : index
    %c0_18 = arith.constant 0 : index
    %c64 = arith.constant 64 : index
    %8 = vector.load %arg7[%c0_16, %c0_17, %c0_18, %c64] : memref<2x16x16x288xf32, #tpu.memory_space<vmem>>, vector<2x16x16x32xf32>
    tpu.vector_store %arg7[%c0_16, %c0_17, %c0_18, %c64], %7 {strides = array<i32>} : memref<2x16x16x288xf32, #tpu.memory_space<vmem>>, vector<2x16x16x32xf32>,
    %c0_19 = arith.constant 0 : index
    %c2 = arith.constant 2 : index
    %c6_20 = arith.constant 6 : index
    %c0_21 = arith.constant 0 : index
    %9 = vector.load %arg8[%c0_19, %c2, %c6_20, %c0_21] : memref<2x20x32x32xf32, #tpu.memory_space<vmem>>, vector<2x16x16x32xf32>
    %c0_22 = arith.constant 0 : index
    %c0_23 = arith.constant 0 : index
    %c0_24 = arith.constant 0 : index
    %c96 = arith.constant 96 : index
    %10 = vector.load %arg7[%c0_22, %c0_23, %c0_24, %c96] : memref<2x16x16x288xf32, #tpu.memory_space<vmem>>, vector<2x16x16x32xf32>
    tpu.vector_store %arg7[%c0_22, %c0_23, %c0_24, %c96], %9 {strides = array<i32>} : memref<2x16x16x288xf32, #tpu.memory_space<vmem>>, vector<2x16x16x32xf32>,
    %c0_25 = arith.constant 0 : index
    %c2_26 = arith.constant 2 : index
    %c8_27 = arith.constant 8 : index
    %c0_28 = arith.constant 0 : index
    %11 = vector.load %arg8[%c0_25, %c2_26, %c8_27, %c0_28] : memref<2x20x32x32xf32, #tpu.memory_space<vmem>>, vector<2x16x16x32xf32>
    %c0_29 = arith.constant 0 : index
    %c0_30 = arith.constant 0 : index
    %c0_31 = arith.constant 0 : index
    %c128 = arith.constant 128 : index
    %12 = vector.load %arg7[%c0_29, %c0_30, %c0_31, %c128] : memref<2x16x16x288xf32, #tpu.memory_space<vmem>>, vector<2x16x16x32xf32>
    tpu.vector_store %arg7[%c0_29, %c0_30, %c0_31, %c128], %11 {strides = array<i32>} : memref<2x16x16x288xf32, #tpu.memory_space<vmem>>, vector<2x16x16x32xf32>,
    %c0_32 = arith.constant 0 : index
    %c2_33 = arith.constant 2 : index
    %c10_34 = arith.constant 10 : index
    %c0_35 = arith.constant 0 : index
    %13 = vector.load %arg8[%c0_32, %c2_33, %c10_34, %c0_35] : memref<2x20x32x32xf32, #tpu.memory_space<vmem>>, vector<2x16x16x32xf32>
    %c0_36 = arith.constant 0 : index
    %c0_37 = arith.constant 0 : index
    %c0_38 = arith.constant 0 : index
    %c160 = arith.constant 160 : index
    %14 = vector.load %arg7[%c0_36, %c0_37, %c0_38, %c160] : memref<2x16x16x288xf32, #tpu.memory_space<vmem>>, vector<2x16x16x32xf32>
    tpu.vector_store %arg7[%c0_36, %c0_37, %c0_38, %c160], %13 {strides = array<i32>} : memref<2x16x16x288xf32, #tpu.memory_space<vmem>>, vector<2x16x16x32xf32>,
    %c0_39 = arith.constant 0 : index
    %c4 = arith.constant 4 : index
    %c6_40 = arith.constant 6 : index
    %c0_41 = arith.constant 0 : index
    %15 = vector.load %arg8[%c0_39, %c4, %c6_40, %c0_41] : memref<2x20x32x32xf32, #tpu.memory_space<vmem>>, vector<2x16x16x32xf32>
    %c0_42 = arith.constant 0 : index
    %c0_43 = arith.constant 0 : index
    %c0_44 = arith.constant 0 : index
    %c192 = arith.constant 192 : index
    %16 = vector.load %arg7[%c0_42, %c0_43, %c0_44, %c192] : memref<2x16x16x288xf32, #tpu.memory_space<vmem>>, vector<2x16x16x32xf32>
    tpu.vector_store %arg7[%c0_42, %c0_43, %c0_44, %c192], %15 {strides = array<i32>} : memref<2x16x16x288xf32, #tpu.memory_space<vmem>>, vector<2x16x16x32xf32>,
    %c0_45 = arith.constant 0 : index
    %c4_46 = arith.constant 4 : index
    %c8_47 = arith.constant 8 : index
    %c0_48 = arith.constant 0 : index
    %17 = vector.load %arg8[%c0_45, %c4_46, %c8_47, %c0_48] : memref<2x20x32x32xf32, #tpu.memory_space<vmem>>, vector<2x16x16x32xf32>
    %c0_49 = arith.constant 0 : index
    %c0_50 = arith.constant 0 : index
    %c0_51 = arith.constant 0 : index
    %c224 = arith.constant 224 : index
    %18 = vector.load %arg7[%c0_49, %c0_50, %c0_51, %c224] : memref<2x16x16x288xf32, #tpu.memory_space<vmem>>, vector<2x16x16x32xf32>
    tpu.vector_store %arg7[%c0_49, %c0_50, %c0_51, %c224], %17 {strides = array<i32>} : memref<2x16x16x288xf32, #tpu.memory_space<vmem>>, vector<2x16x16x32xf32>,
    %c0_52 = arith.constant 0 : index
    %c4_53 = arith.constant 4 : index
    %c10_54 = arith.constant 10 : index
    %c0_55 = arith.constant 0 : index
    %19 = vector.load %arg8[%c0_52, %c4_53, %c10_54, %c0_55] : memref<2x20x32x32xf32, #tpu.memory_space<vmem>>, vector<2x16x16x32xf32>
    %c0_56 = arith.constant 0 : index
    %c0_57 = arith.constant 0 : index
    %c0_58 = arith.constant 0 : index
    %c256 = arith.constant 256 : index
    %20 = vector.load %arg7[%c0_56, %c0_57, %c0_58, %c256] : memref<2x16x16x288xf32, #tpu.memory_space<vmem>>, vector<2x16x16x32xf32>
    tpu.vector_store %arg7[%c0_56, %c0_57, %c0_58, %c256], %19 {strides = array<i32>} : memref<2x16x16x288xf32, #tpu.memory_space<vmem>>, vector<2x16x16x32xf32>,
    %c0_59 = arith.constant 0 : index
    %c0_60 = arith.constant 0 : index
    %c0_61 = arith.constant 0 : index
    %c0_62 = arith.constant 0 : index
    %21 = vector.load %arg7[%c0_59, %c0_60, %c0_61, %c0_62] : memref<2x16x16x288xf32, #tpu.memory_space<vmem>>, vector<2x16x16x288xf32>
    %22 = vector.shape_cast %21 : vector<2x16x16x288xf32> to vector<512x288xf32>
    %c0_63 = arith.constant 0 : index
    %c0_64 = arith.constant 0 : index
    %23 = vector.load %arg3[%c0_63, %c0_64] : memref<288x32xf32, #tpu.memory_space<vmem>>, vector<288x32xf32>
    %cst = arith.constant dense<0.000000e+00> : vector<512x32xf32>
    %24 = tpu.matmul %22, %23, %cst {dimension_numbers = #tpu.dot_dimension_numbers<[1], [0], [0], [1], [0, 0, 1, 1], [], []>} : vector<512x288xf32>, vector<288x32xf32>, vector<512x32xf32> -> vector<512x32xf32>
    %c0_65 = arith.constant 0 : index
    %c0_66 = arith.constant 0 : index
    %c0_67 = arith.constant 0 : index
    %25 = vector.load %arg2[%c0_65, %c0_66, %c0_67] : memref<1x512x19xf32, #tpu.memory_space<vmem>>, vector<1x512x19xf32>
    %26 = vector.shape_cast %25 : vector<1x512x19xf32> to vector<512x19xf32>
    %c0_68 = arith.constant 0 : index
    %c0_69 = arith.constant 0 : index
    %27 = vector.load %arg4[%c0_68, %c0_69] : memref<19x32xf32, #tpu.memory_space<vmem>>, vector<19x32xf32>
    %cst_70 = arith.constant dense<0.000000e+00> : vector<512x32xf32>
    %28 = tpu.matmul %26, %27, %cst_70 {dimension_numbers = #tpu.dot_dimension_numbers<[1], [0], [0], [1], [0, 0, 1, 1], [], []>} : vector<512x19xf32>, vector<19x32xf32>, vector<512x32xf32> -> vector<512x32xf32>
    %29 = arith.addf %24, %28 : vector<512x32xf32>
    %cst_71 = arith.constant 0.000000e+00 : f32
    %30 = vector.broadcast %cst_71 : f32 to vector<512x32xf32>
    %31 = arith.cmpf oge, %29, %30 : vector<512x32xf32>
    %cst_72 = arith.constant 0.00999999977 : f32
    %32 = vector.broadcast %cst_72 : f32 to vector<512x32xf32>
    %33 = arith.mulf %32, %29 : vector<512x32xf32>
    %34 = arith.select %31, %29, %33 : vector<512x32xi1>, vector<512x32xf32>
    %35 = vector.shape_cast %34 : vector<512x32xf32> to vector<2x16x16x32xf32>
    %c0_73 = arith.constant 0 : index
    %c2_74 = arith.constant 2 : index
    %c8_75 = arith.constant 8 : index
    %c0_76 = arith.constant 0 : index
    %36 = vector.load %arg8[%c0_73, %c2_74, %c8_75, %c0_76] : memref<2x20x32x32xf32, #tpu.memory_space<vmem>>, vector<2x16x16x32xf32>
    tpu.vector_store %arg8[%c0_73, %c2_74, %c8_75, %c0_76], %35 {strides = array<i32>} : memref<2x20x32x32xf32, #tpu.memory_space<vmem>>, vector<2x16x16x32xf32>,
    %c0_77 = arith.constant 0 : index
    %c0_78 = arith.constant 0 : index
    %37 = vector.load %arg5[%c0_77, %c0_78] : memref<32x32xf32, #tpu.memory_space<vmem>>, vector<32x32xf32>
    %cst_79 = arith.constant dense<0.000000e+00> : vector<32x512xf32>
    %38 = tpu.matmul %37, %34, %cst_79 {dimension_numbers = #tpu.dot_dimension_numbers<[1], [1], [0], [0], [0, 0, 1, 0], [], []>} : vector<32x32xf32>, vector<512x32xf32>, vector<32x512xf32> -> vector<32x512xf32>
    %39 = vector.extract_strided_slice %38 {offsets = [0, 0], sizes = [32, 256], strides = [1, 1]} : vector<32x512xf32> to vector<32x256xf32>
    %c0_80 = arith.constant 0 : index
    %c0_81 = arith.constant 0 : index
    %c0_82 = arith.constant 0 : index
    %c0_83 = arith.constant 0 : index
    %c0_84 = arith.constant 0 : index
    %40 = vector.load %arg6[%c0_80, %c0_81, %c0_82, %c0_83, %c0_84] : memref<1x1x2x32x256xf32, #tpu.memory_space<vmem>>, vector<1x1x1x32x256xf32>
    %41 = vector.shape_cast %40 : vector<1x1x1x32x256xf32> to vector<32x256xf32>
    %42 = vector.shape_cast %39 : vector<32x256xf32> to vector<1x1x1x32x256xf32>
    tpu.vector_store %arg6[%c0_80, %c0_81, %c0_82, %c0_83, %c0_84], %42 {strides = array<i32>} : memref<1x1x2x32x256xf32, #tpu.memory_space<vmem>>, vector<1x1x1x32x256xf32>,
    %43 = vector.extract_strided_slice %38 {offsets = [0, 256], sizes = [32, 256], strides = [1, 1]} : vector<32x512xf32> to vector<32x256xf32>
    %c0_85 = arith.constant 0 : index
    %c0_86 = arith.constant 0 : index
    %c1 = arith.constant 1 : index
    %c0_87 = arith.constant 0 : index
    %c0_88 = arith.constant 0 : index
    %44 = vector.load %arg6[%c0_85, %c0_86, %c1, %c0_87, %c0_88] : memref<1x1x2x32x256xf32, #tpu.memory_space<vmem>>, vector<1x1x1x32x256xf32>
    %45 = vector.shape_cast %44 : vector<1x1x1x32x256xf32> to vector<32x256xf32>
    %46 = vector.shape_cast %43 : vector<32x256xf32> to vector<1x1x1x32x256xf32>
    tpu.vector_store %arg6[%c0_85, %c0_86, %c1, %c0_87, %c0_88], %46 {strides = array<i32>} : memref<1x1x2x32x256xf32, #tpu.memory_space<vmem>>, vector<1x1x1x32x256xf32>,
    return
  }
  func.func @transform_0(%arg0: i32, %arg1: i32) -> (i32, i32, i32) {
    %c3_i32 = arith.constant 3 : i32
    %0 = arith.muli %arg0, %c3_i32 : i32
    %c2_i32 = arith.constant 2 : i32
    %1 = arith.muli %c2_i32, %arg0 : i32
    %c1_i32 = arith.constant 1 : i32
    %2 = arith.subi %c1_i32, %1 : i32
    %3 = arith.muli %2, %arg1 : i32
    %4 = arith.addi %0, %3 : i32
    %c0_i32 = arith.constant 0 : i32
    %c0_i32_0 = arith.constant 0 : i32
    %c0_i32_1 = arith.constant 0 : i32
    return %4, %c0_i32, %c0_i32_0 : i32, i32, i32
  }
  func.func @transform_1(%arg0: i32, %arg1: i32) -> (i32, i32) {
    %c0_i32 = arith.constant 0 : i32
    %c0_i32_0 = arith.constant 0 : i32
    %c0_i32_1 = arith.constant 0 : i32
    return %c0_i32, %c0_i32_0 : i32, i32
  }
  func.func @transform_2(%arg0: i32, %arg1: i32) -> (i32, i32) {
    %c0_i32 = arith.constant 0 : i32
    %c0_i32_0 = arith.constant 0 : i32
    %c0_i32_1 = arith.constant 0 : i32
    return %c0_i32, %c0_i32_0 : i32, i32
  }
  func.func @transform_3(%arg0: i32, %arg1: i32) -> (i32, i32) {
    %c0_i32 = arith.constant 0 : i32
    %c0_i32_0 = arith.constant 0 : i32
    %c0_i32_1 = arith.constant 0 : i32
    return %c0_i32, %c0_i32_0 : i32, i32
  }
  func.func @transform_4(%arg0: i32, %arg1: i32) -> (i32, i32, i32, i32, i32) {
    %c3_i32 = arith.constant 3 : i32
    %0 = arith.muli %arg0, %c3_i32 : i32
    %c2_i32 = arith.constant 2 : i32
    %1 = arith.muli %c2_i32, %arg0 : i32
    %c1_i32 = arith.constant 1 : i32
    %2 = arith.subi %c1_i32, %1 : i32
    %3 = arith.muli %2, %arg1 : i32
    %4 = arith.addi %0, %3 : i32
    %c0_i32 = arith.constant 0 : i32
    %c0_i32_0 = arith.constant 0 : i32
    %c0_i32_1 = arith.constant 0 : i32
    %c0_i32_2 = arith.constant 0 : i32
    return %arg0, %4, %c0_i32, %c0_i32_0, %c0_i32_1 : i32, i32, i32, i32, i32
  }
}

</mosaic_0001>

<llo_original>
// kernel: bcrnn_forward.1
$region0: #{bcrnn_forward.1}
  #allocation0 [shape = 'u32[]', space=smem, size = 0x4, offset = 0x4, fixed_abs, tag = 'smem constant byte address 0x4 - core index']
  #allocation1 [shape = 'u32[144,128]{1,0:T(1,128)}', space=vmem, size = 0x12000, scoped, tag = 'internal scratch']
  #allocation2 [shape = 'f32[2,16,16,288]{3,2,1,0:T(8,128)}', space=vmem, size = 0xc0000, scoped, tag = 'scratch operand']
  #allocation3 [shape = 'f32[2,20,32,32]{3,2,1,0:T(8,128)}', space=vmem, size = 0xa0000, scoped, tag = 'scratch operand']
  %s0 = inlined_call_operand.vmem [shape: f32[4,512,19], index: 0, kind: input, shape index: {}]
  %s1 = inlined_call_operand.vmem [shape: f32[288,32], index: 1, kind: input, shape index: {}]
  %s2 = inlined_call_operand.vmem [shape: f32[19,32], index: 2, kind: input, shape index: {}]
  %s3 = inlined_call_operand.vmem [shape: f32[32,32], index: 3, kind: input, shape index: {}]
  %s4 = inlined_call_operand.vmem [shape: f32[2,4,2,32,256], index: 4, kind: output, shape index: {}]
  %s5 = sld [smem:[#allocation0]]
  $region53: #{bcrnn_forward.1} parent=0
    _
  %s7 = ssub.s32 1, %s5
  %s8 = scalar_select 0, %s7, %s5
  loop: start=0, step=1, limit=10
  $region2: #{bcrnn_forward.1} parent=0 // loop_pre_header
    _
  $region3: #{bcrnn_forward.1} parent=0 // loop_header
    %s10 = sphi 0, %s14
    %p11 = scmp.ge.s32.totalorder %s10, 10
    %s17 = sphi 0, %s29
    %s18 = sphi 0, %s25
    %s19 = sphi 0, %s17
    %s20 = sphi 0, %s18
    %s21 = sphi 0, %s19
    %s22 = sphi 0, %s20
    %s42 = sphi 0, %s44
    %s45 = sphi 0, %s42
    %s46 = sphi 0, %s45
    %s62 = sphi 0, %s46
    %s66 = sphi 0, %s66
    %s68 = sphi 0, %s66
    %s69 = sphi 0, %s68
    %s83 = sphi 0, %s69
    %s87 = sphi 0, %s87
    %s89 = sphi 0, %s87
    %s90 = sphi 0, %s89
    %s104 = sphi 0, %s90
    %s108 = sphi 0, %s108
    %s110 = sphi 0, %s108
    %s111 = sphi 0, %s110
    %s125 = sphi 0, %s111
    %s143 = sphi 0, %s145
    %s146 = sphi 0, %s143
    %s147 = sphi 0, %s146
    %s163 = sphi 0, %s147
  $region4: #{bcrnn_forward.1} parent=0 // loop_header_branch
    %13 = sbr.rel (%p11) target = $region8
  $region5: #{bcrnn_forward.1} parent=0 // loop_body
    %s15 = ssub.s32 %s10, 1
    %s16 = ssub.s32 %s10, 2
    %s23 = sadd.s32 1, %s18
    %p24 = scmp.ge.s32.totalorder %s23, 4
    %s25 = scalar_select %p24, 0, %s23
    %s26 = sadd.s32 1, %s17
    %s27 = scalar_select %p24, %s26, %s17
    %p28 = scmp.ge.s32.totalorder %s27, 2
    %s29 = scalar_select %p28, 0, %s27
    %s30 = smul.u32 %s17, 3
    %s31 = smul.u32 %s17, 2
    %s32 = ssub.s32 1, %s31
    %s33 = smul.u32 %s32, %s18
    %s34 = sadd.s32 %s30, %s33
    %s35 = smul.u32 %s29, 3
    %s36 = smul.u32 %s29, 2
    %s37 = ssub.s32 1, %s36
    %s38 = smul.u32 %s37, %s25
    %s39 = sadd.s32 %s35, %s38
    %s40 = ssub.s32 %s34, %s39
    %p41 = scmp.eq.s32.totalorder %s40, 0
    %s43 = sadd.s32 %s42, 1
    %s44 = scalar_select %p41, %s42, %s43
    %p47 = pneg %p41
    %p48 = scmp.eq.s32.totalorder %s10, 7
    %p49 = por %p47, %p48
    %p50 = scmp.ne.s32.totalorder %s42, %s45
    %p51 = scmp.eq.s32.totalorder %s10, 0
    %p52 = por %p50, %p51
    %p53 = scmp.ne.s32.totalorder %s42, %s45
    %p54 = scmp.eq.s32.totalorder %s15, 7
    %p55 = por %p53, %p54
    %p56 = scmp.ne.s32.totalorder %s45, %s46
    %p57 = scmp.eq.s32.totalorder %s15, 0
    %p58 = por %p56, %p57
    %p59 = scmp.ne.s32.totalorder %s45, %s46
    %p60 = scmp.eq.s32.totalorder %s16, 7
    %p61 = por %p59, %p60
    %p63 = scmp.ne.s32.totalorder %s46, %s62
    %p64 = scmp.eq.s32.totalorder %s16, 0
    %p65 = por %p63, %p64
    %s67 = sadd.s32 %s66, 1
    %p70 = scmp.eq.s32.totalorder %s10, 7
    %p71 = scmp.ne.s32.totalorder %s66, %s68
    %p72 = scmp.eq.s32.totalorder %s10, 0
    %p73 = por %p71, %p72
    %p74 = scmp.ne.s32.totalorder %s66, %s68
    %p75 = scmp.eq.s32.totalorder %s15, 7
    %p76 = por %p74, %p75
    %p77 = scmp.ne.s32.totalorder %s68, %s69
    %p78 = scmp.eq.s32.totalorder %s15, 0
    %p79 = por %p77, %p78
    %p80 = scmp.ne.s32.totalorder %s68, %s69
    %p81 = scmp.eq.s32.totalorder %s16, 7
    %p82 = por %p80, %p81
    %p84 = scmp.ne.s32.totalorder %s69, %s83
    %p85 = scmp.eq.s32.totalorder %s16, 0
    %p86 = por %p84, %p85
    %s88 = sadd.s32 %s87, 1
    %p91 = scmp.eq.s32.totalorder %s10, 7
    %p92 = scmp.ne.s32.totalorder %s87, %s89
    %p93 = scmp.eq.s32.totalorder %s10, 0
    %p94 = por %p92, %p93
    %p95 = scmp.ne.s32.totalorder %s87, %s89
    %p96 = scmp.eq.s32.totalorder %s15, 7
    %p97 = por %p95, %p96
    %p98 = scmp.ne.s32.totalorder %s89, %s90
    %p99 = scmp.eq.s32.totalorder %s15, 0
    %p100 = por %p98, %p99
    %p101 = scmp.ne.s32.totalorder %s89, %s90
    %p102 = scmp.eq.s32.totalorder %s16, 7
    %p103 = por %p101, %p102
    %p105 = scmp.ne.s32.totalorder %s90, %s104
    %p106 = scmp.eq.s32.totalorder %s16, 0
    %p107 = por %p105, %p106
    %s109 = sadd.s32 %s108, 1
    %p112 = scmp.eq.s32.totalorder %s10, 7
    %p113 = scmp.ne.s32.totalorder %s108, %s110
    %p114 = scmp.eq.s32.totalorder %s10, 0
    %p115 = por %p113, %p114
    %p116 = scmp.ne.s32.totalorder %s108, %s110
    %p117 = scmp.eq.s32.totalorder %s15, 7
    %p118 = por %p116, %p117
    %p119 = scmp.ne.s32.totalorder %s110, %s111
    %p120 = scmp.eq.s32.totalorder %s15, 0
    %p121 = por %p119, %p120
    %p122 = scmp.ne.s32.totalorder %s110, %s111
    %p123 = scmp.eq.s32.totalorder %s16, 7
    %p124 = por %p122, %p123
    %p126 = scmp.ne.s32.totalorder %s111, %s125
    %p127 = scmp.eq.s32.totalorder %s16, 0
    %p128 = por %p126, %p127
    %s129 = smul.u32 %s17, 3
    %s130 = smul.u32 %s17, 2
    %s131 = ssub.s32 1, %s130
    %s132 = smul.u32 %s131, %s18
    %s133 = sadd.s32 %s129, %s132
    %s134 = smul.u32 %s29, 3
    %s135 = smul.u32 %s29, 2
    %s136 = ssub.s32 1, %s135
    %s137 = smul.u32 %s136, %s25
    %s138 = sadd.s32 %s134, %s137
    %s139 = ssub.s32 %s17, %s29
    %s140 = ssub.s32 %s133, %s138
    %s141 = sor.u32 %s139, %s140
    %p142 = scmp.eq.s32.totalorder %s141, 0
    %s144 = sadd.s32 %s143, 1
    %s145 = scalar_select %p142, %s143, %s144
    %p148 = pneg %p142
    %p149 = scmp.eq.s32.totalorder %s10, 7
    %p150 = por %p148, %p149
    %p151 = scmp.ne.s32.totalorder %s143, %s146
    %p152 = scmp.eq.s32.totalorder %s10, 0
    %p153 = por %p151, %p152
    %p154 = scmp.ne.s32.totalorder %s143, %s146
    %p155 = scmp.eq.s32.totalorder %s15, 7
    %p156 = por %p154, %p155
    %p157 = scmp.ne.s32.totalorder %s146, %s147
    %p158 = scmp.eq.s32.totalorder %s15, 0
    %p159 = por %p157, %p158
    %p160 = scmp.ne.s32.totalorder %s146, %s147
    %p161 = scmp.eq.s32.totalorder %s16, 7
    %p162 = por %p160, %p161
    %p164 = scmp.ne.s32.totalorder %s147, %s163
    %p165 = scmp.eq.s32.totalorder %s16, 0
    %p166 = por %p164, %p165
    %p167 = scmp.le.s32.totalorder 1, %s10
    %p168 = scmp.lt.s32.totalorder %s10, 9
    %p169 = pnand %p167, %p168
    %p170 = pneg %p169
    // Predicated region
    $region9: #{bcrnn_forward.1} parent=5 // pred_check
      _
    $region10: #{bcrnn_forward.1} parent=5 // pred_check_branch
      %172 = sbr.rel (%p169) target = $region12
    $region11: #{bcrnn_forward.1} parent=5 // pred_region
      %s173 = ssub.s32 %s10, 1
      // Predicated region
      $region13: #{bcrnn_forward.1} parent=11 // pred_check
        %p174 = pneg %p79
      $region14: #{bcrnn_forward.1} parent=11 // pred_check_branch
        %176 = sbr.rel (%p174) target = $region16
      $region15: #{bcrnn_forward.1} parent=11 // pred_region
        _
      $region16: #{bcrnn_forward.1} parent=11 // pred_fallthru
        _
      // Predicated region
      $region17: #{bcrnn_forward.1} parent=11 // pred_check
        %p177 = pneg %p100
      $region18: #{bcrnn_forward.1} parent=11 // pred_check_branch
        %179 = sbr.rel (%p177) target = $region20
      $region19: #{bcrnn_forward.1} parent=11 // pred_region
        _
      $region20: #{bcrnn_forward.1} parent=11 // pred_fallthru
        _
      // Predicated region
      $region21: #{bcrnn_forward.1} parent=11 // pred_check
        %p180 = pneg %p121
      $region22: #{bcrnn_forward.1} parent=11 // pred_check_branch
        %182 = sbr.rel (%p180) target = $region24
      $region23: #{bcrnn_forward.1} parent=11 // pred_region
        _
      $region24: #{bcrnn_forward.1} parent=11 // pred_fallthru
        _
    $region12: #{bcrnn_forward.1} parent=5 // pred_fallthru
      _
    %p183 = scmp.lt.s32.totalorder %s10, 8
    // Predicated region
    $region25: #{bcrnn_forward.1} parent=5 // pred_check
      %p184 = pneg %p183
    $region26: #{bcrnn_forward.1} parent=5 // pred_check_branch
      %186 = sbr.rel (%p184) target = $region28
    $region27: #{bcrnn_forward.1} parent=5 // pred_region
      // Predicated region
      $region29: #{bcrnn_forward.1} parent=27 // pred_check
        %p187 = pneg %p52
      $region30: #{bcrnn_forward.1} parent=27 // pred_check_branch
        %189 = sbr.rel (%p187) target = $region32
      $region31: #{bcrnn_forward.1} parent=27 // pred_region
        %s190 = smul.u32 %s17, 3
        %s191 = smul.u32 %s17, 2
        %s192 = ssub.s32 1, %s191
        %s193 = smul.u32 %s192, %s18
        %s194 = sadd.s32 %s190, %s193
        %p195 = scmp.lt.s32.totalorder %s194, 3
        %s196 = scalar_select %p195, %s194, 3
        %s197 = smul.addr %s196, 64
        %s198 = smul.addr %s197, 8
        %s199 = scalar_lea.vmem %s0, %s198
        %s200 = smul.u32 %s17, 3
        %s201 = smul.u32 %s17, 2
        %s202 = ssub.s32 1, %s201
        %s203 = smul.u32 %s202, %s18
        %s204 = sadd.s32 %s200, %s203
      $region32: #{bcrnn_forward.1} parent=27 // pred_fallthru
        _
    $region28: #{bcrnn_forward.1} parent=5 // pred_fallthru
      _
    %p205 = scmp.le.s32.totalorder 1, %s10
    %p206 = scmp.lt.s32.totalorder %s10, 9
    %p207 = pnand %p205, %p206
    %p208 = pneg %p207
    // Predicated region
    $region33: #{bcrnn_forward.1} parent=5 // pred_check
      _
    $region34: #{bcrnn_forward.1} parent=5 // pred_check_branch
      %210 = sbr.rel (%p207) target = $region36
    $region35: #{bcrnn_forward.1} parent=5 // pred_region
      %s211 = ssub.s32 %s10, 1
      %s212 = smul.u32 %s19, 3
      %s213 = smul.u32 %s19, 2
      %s214 = ssub.s32 1, %s213
      %s215 = smul.u32 %s214, %s20
      %s216 = sadd.s32 %s212, %s215
      %p217 = scmp.lt.s32.totalorder %s216, 3
      %s218 = scalar_select %p217, %s216, 3
      %s219 = smul.addr %s218, 64
      %s220 = smul.addr %s219, 8
      %s221 = scalar_lea.vmem %s0, %s220
      %p222 = pneg %p58
      %p223 = pneg %p55
      %p224 = pneg %p79
      %p225 = pneg %p76
      %p226 = pneg %p100
      %p227 = pneg %p97
      %p228 = pneg %p121
      %p229 = pneg %p118
      %p230 = pneg %p159
      %p231 = pneg %p156
      %s232 = smul.u32 %s19, 3
      %s233 = smul.u32 %s19, 2
      %s234 = ssub.s32 1, %s233
      %s235 = smul.u32 %s234, %s20
      %s236 = sadd.s32 %s232, %s235
      %p237 = scmp.lt.s32.totalorder %s19, 1
      %s238 = scalar_select %p237, %s19, 1
      %p239 = scmp.lt.s32.totalorder %s236, 3
      %s240 = scalar_select %p239, %s236, 3
      %s241 = smul.addr %s240, 16
      %s242 = smul.addr %s238, 64
      %s243 = sadd.s32 %s241, %s242
      %s244 = smul.addr %s243, 8
      %s245 = scalar_lea.vmem %s4, %s244
      %s246 = smul.u32 %s19, 3
      %s247 = smul.u32 %s19, 2
      %s248 = ssub.s32 1, %s247
      %s249 = smul.u32 %s248, %s20
      %s250 = sadd.s32 %s246, %s249
      %p251 = scmp.lt.s32.totalorder %s250, 3
      %s252 = scalar_select %p251, %s250, 3
      %s253 = smul.addr %s252, 64
      %s254 = smul.addr %s253, 8
      %s255 = scalar_lea.vmem %s0, %s254
      %s256 = smul.u32 %s19, 3
      %s257 = smul.u32 %s19, 2
      %s258 = ssub.s32 1, %s257
      %s259 = smul.u32 %s258, %s20
      %s260 = sadd.s32 %s256, %s259
      %s261 = smul.u32 %s19, 3
      %s262 = smul.u32 %s19, 2
      %s263 = ssub.s32 1, %s262
      %s264 = smul.u32 %s263, %s20
      %s265 = sadd.s32 %s261, %s264
      %p266 = scmp.lt.s32.totalorder %s19, 1
      %s267 = scalar_select %p266, %s19, 1
      %p268 = scmp.lt.s32.totalorder %s265, 3
      %s269 = scalar_select %p268, %s265, 3
      %s270 = smul.addr %s269, 16
      %s271 = smul.addr %s267, 64
      %s272 = sadd.s32 %s270, %s271
      %s273 = smul.addr %s272, 8
      %s274 = scalar_lea.vmem %s4, %s273
      %s275 = smul.u32 %s19, 3
      %s276 = smul.u32 %s19, 2
      %s277 = ssub.s32 1, %s276
      %s278 = smul.u32 %s277, %s20
      %s279 = sadd.s32 %s275, %s278
      %p280 = scmp.eq.s32.totalorder %s20, 0
      // Predicated region
      $region37: #{bcrnn_forward.1} parent=35 // pred_check
        %p281 = pneg %p280
      $region38: #{bcrnn_forward.1} parent=35 // pred_check_branch
        %283 = sbr.rel (%p281) target = $region40
      $region39: #{bcrnn_forward.1} parent=35 // pred_region
        %vm284 = vcmask 261120
        %285 = vst.msk [vmem:[#allocation3] sm:$0xff] %vm284, 0.0
        %286 = vst.msk [vmem:[#allocation3 + $0x8] sm:$0xff] %vm284, 0.0
        %287 = vst.msk [vmem:[#allocation3 + $0x10] sm:$0xff] %vm284, 0.0
        %288 = vst.msk [vmem:[#allocation3 + $0x18] sm:$0xff] %vm284, 0.0
        %289 = vst.msk [vmem:[#allocation3 + $0x20] sm:$0xff] %vm284, 0.0
        %290 = vst.msk [vmem:[#allocation3 + $0x28] sm:$0xff] %vm284, 0.0
        %291 = vst.msk [vmem:[#allocation3 + $0x30] sm:$0xff] %vm284, 0.0
        %292 = vst.msk [vmem:[#allocation3 + $0x38] sm:$0xff] %vm284, 0.0
        %293 = vst.msk [vmem:[#allocation3 + $0x40] sm:$0xff] %vm284, 0.0
        %294 = vst.msk [vmem:[#allocation3 + $0x48] sm:$0xff] %vm284, 0.0
        %295 = vst.msk [vmem:[#allocation3 + $0x50] sm:$0xff] %vm284, 0.0
        %296 = vst.msk [vmem:[#allocation3 + $0x58] sm:$0xff] %vm284, 0.0
        %297 = vst.msk [vmem:[#allocation3 + $0x60] sm:$0xff] %vm284, 0.0
        %298 = vst.msk [vmem:[#allocation3 + $0x68] sm:$0xff] %vm284, 0.0
        %299 = vst.msk [vmem:[#allocation3 + $0x70] sm:$0xff] %vm284, 0.0
        %300 = vst.msk [vmem:[#allocation3 + $0x78] sm:$0xff] %vm284, 0.0
        %301 = vst.msk [vmem:[#allocation3 + $0x80] sm:$0xff] %vm284, 0.0
        %302 = vst.msk [vmem:[#allocation3 + $0x88] sm:$0xff] %vm284, 0.0
        %303 = vst.msk [vmem:[#allocation3 + $0x90] sm:$0xff] %vm284, 0.0
        %304 = vst.msk [vmem:[#allocation3 + $0x98] sm:$0xff] %vm284, 0.0
        %305 = vst.msk [vmem:[#allocation3 + $0xa0] sm:$0xff] %vm284, 0.0
        %306 = vst.msk [vmem:[#allocation3 + $0xa8] sm:$0xff] %vm284, 0.0
        %307 = vst.msk [vmem:[#allocation3 + $0xb0] sm:$0xff] %vm284, 0.0
        %308 = vst.msk [vmem:[#allocation3 + $0xb8] sm:$0xff] %vm284, 0.0
        %309 = vst.msk [vmem:[#allocation3 + $0xc0] sm:$0xff] %vm284, 0.0
        %310 = vst.msk [vmem:[#allocation3 + $0xc8] sm:$0xff] %vm284, 0.0
        %311 = vst.msk [vmem:[#allocation3 + $0xd0] sm:$0xff] %vm284, 0.0
        %312 = vst.msk [vmem:[#allocation3 + $0xd8] sm:$0xff] %vm284, 0.0
        %313 = vst.msk [vmem:[#allocation3 + $0xe0] sm:$0xff] %vm284, 0.0
        %314 = vst.msk [vmem:[#allocation3 + $0xe8] sm:$0xff] %vm284, 0.0
        %315 = vst.msk [vmem:[#allocation3 + $0xf0] sm:$0xff] %vm284, 0.0
        %316 = vst.msk [vmem:[#allocation3 + $0xf8] sm:$0xff] %vm284, 0.0
        %317 = vst.msk [vmem:[#allocation3 + $0x100] sm:$0xff] %vm284, 0.0
        %318 = vst.msk [vmem:[#allocation3 + $0x108] sm:$0xff] %vm284, 0.0
        %319 = vst.msk [vmem:[#allocation3 + $0x110] sm:$0xff] %vm284, 0.0
        %320 = vst.msk [vmem:[#allocation3 + $0x118] sm:$0xff] %vm284, 0.0
        %321 = vst.msk [vmem:[#allocation3 + $0x120] sm:$0xff] %vm284, 0.0
        %322 = vst.msk [vmem:[#allocation3 + $0x128] sm:$0xff] %vm284, 0.0
        %323 = vst.msk [vmem:[#allocation3 + $0x130] sm:$0xff] %vm284, 0.0
        %324 = vst.msk [vmem:[#allocation3 + $0x138] sm:$0xff] %vm284, 0.0
        %325 = vst.msk [vmem:[#allocation3 + $0x140] sm:$0xff] %vm284, 0.0
        %326 = vst.msk [vmem:[#allocation3 + $0x148] sm:$0xff] %vm284, 0.0
        %327 = vst.msk [vmem:[#allocation3 + $0x150] sm:$0xff] %vm284, 0.0
        %328 = vst.msk [vmem:[#allocation3 + $0x158] sm:$0xff] %vm284, 0.0
        %329 = vst.msk [vmem:[#allocation3 + $0x160] sm:$0xff] %vm284, 0.0
        %330 = vst.msk [vmem:[#allocation3 + $0x168] sm:$0xff] %vm284, 0.0
        %331 = vst.msk [vmem:[#allocation3 + $0x170] sm:$0xff] %vm284, 0.0
        %332 = vst.msk [vmem:[#allocation3 + $0x178] sm:$0xff] %vm284, 0.0
        %333 = vst.msk [vmem:[#allocation3 + $0x180] sm:$0xff] %vm284, 0.0
        %334 = vst.msk [vmem:[#allocation3 + $0x188] sm:$0xff] %vm284, 0.0
        %335 = vst.msk [vmem:[#allocation3 + $0x190] sm:$0xff] %vm284, 0.0
        %336 = vst.msk [vmem:[#allocation3 + $0x198] sm:$0xff] %vm284, 0.0
        %337 = vst.msk [vmem:[#allocation3 + $0x1a0] sm:$0xff] %vm284, 0.0
        %338 = vst.msk [vmem:[#allocation3 + $0x1a8] sm:$0xff] %vm284, 0.0
        %339 = vst.msk [vmem:[#allocation3 + $0x1b0] sm:$0xff] %vm284, 0.0
        %340 = vst.msk [vmem:[#allocation3 + $0x1b8] sm:$0xff] %vm284, 0.0
        %341 = vst.msk [vmem:[#allocation3 + $0x1c0] sm:$0xff] %vm284, 0.0
        %342 = vst.msk [vmem:[#allocation3 + $0x1c8] sm:$0xff] %vm284, 0.0
        %343 = vst.msk [vmem:[#allocation3 + $0x1d0] sm:$0xff] %vm284, 0.0
        %344 = vst.msk [vmem:[#allocation3 + $0x1d8] sm:$0xff] %vm284, 0.0
        %345 = vst.msk [vmem:[#allocation3 + $0x1e0] sm:$0xff] %vm284, 0.0
        %346 = vst.msk [vmem:[#allocation3 + $0x1e8] sm:$0xff] %vm284, 0.0
        %347 = vst.msk [vmem:[#allocation3 + $0x1f0] sm:$0xff] %vm284, 0.0
        %348 = vst.msk [vmem:[#allocation3 + $0x1f8] sm:$0xff] %vm284, 0.0
        %349 = vst.msk [vmem:[#allocation3 + $0x200] sm:$0xff] %vm284, 0.0
        %350 = vst.msk [vmem:[#allocation3 + $0x208] sm:$0xff] %vm284, 0.0
        %351 = vst.msk [vmem:[#allocation3 + $0x210] sm:$0xff] %vm284, 0.0
        %352 = vst.msk [vmem:[#allocation3 + $0x218] sm:$0xff] %vm284, 0.0
        %353 = vst.msk [vmem:[#allocation3 + $0x220] sm:$0xff] %vm284, 0.0
        %354 = vst.msk [vmem:[#allocation3 + $0x228] sm:$0xff] %vm284, 0.0
        %355 = vst.msk [vmem:[#allocation3 + $0x230] sm:$0xff] %vm284, 0.0
        %356 = vst.msk [vmem:[#allocation3 + $0x238] sm:$0xff] %vm284, 0.0
        %357 = vst.msk [vmem:[#allocation3 + $0x240] sm:$0xff] %vm284, 0.0
        %358 = vst.msk [vmem:[#allocation3 + $0x248] sm:$0xff] %vm284, 0.0
        %359 = vst.msk [vmem:[#allocation3 + $0x250] sm:$0xff] %vm284, 0.0
        %360 = vst.msk [vmem:[#allocation3 + $0x258] sm:$0xff] %vm284, 0.0
        %361 = vst.msk [vmem:[#allocation3 + $0x260] sm:$0xff] %vm284, 0.0
        %362 = vst.msk [vmem:[#allocation3 + $0x268] sm:$0xff] %vm284, 0.0
        %363 = vst.msk [vmem:[#allocation3 + $0x270] sm:$0xff] %vm284, 0.0
        %364 = vst.msk [vmem:[#allocation3 + $0x278] sm:$0xff] %vm284, 0.0
        %365 = vst.msk [vmem:[#allocation3 + $0x280] sm:$0xff] %vm284, 0.0
        %366 = vst.msk [vmem:[#allocation3 + $0x288] sm:$0xff] %vm284, 0.0
        %367 = vst.msk [vmem:[#allocation3 + $0x290] sm:$0xff] %vm284, 0.0
        %368 = vst.msk [vmem:[#allocation3 + $0x298] sm:$0xff] %vm284, 0.0
        %369 = vst.msk [vmem:[#allocation3 + $0x2a0] sm:$0xff] %vm284, 0.0
        %370 = vst.msk [vmem:[#allocation3 + $0x2a8] sm:$0xff] %vm284, 0.0
        %371 = vst.msk [vmem:[#allocation3 + $0x2b0] sm:$0xff] %vm284, 0.0
        %372 = vst.msk [vmem:[#allocation3 + $0x2b8] sm:$0xff] %vm284, 0.0
        %373 = vst.msk [vmem:[#allocation3 + $0x2c0] sm:$0xff] %vm284, 0.0
        %374 = vst.msk [vmem:[#allocation3 + $0x2c8] sm:$0xff] %vm284, 0.0
        %375 = vst.msk [vmem:[#allocation3 + $0x2d0] sm:$0xff] %vm284, 0.0
        %376 = vst.msk [vmem:[#allocation3 + $0x2d8] sm:$0xff] %vm284, 0.0
        %377 = vst.msk [vmem:[#allocation3 + $0x2e0] sm:$0xff] %vm284, 0.0
        %378 = vst.msk [vmem:[#allocation3 + $0x2e8] sm:$0xff] %vm284, 0.0
        %379 = vst.msk [vmem:[#allocation3 + $0x2f0] sm:$0xff] %vm284, 0.0
        %380 = vst.msk [vmem:[#allocation3 + $0x2f8] sm:$0xff] %vm284, 0.0
        %381 = vst.msk [vmem:[#allocation3 + $0x300] sm:$0xff] %vm284, 0.0
        %382 = vst.msk [vmem:[#allocation3 + $0x308] sm:$0xff] %vm284, 0.0
        %383 = vst.msk [vmem:[#allocation3 + $0x310] sm:$0xff] %vm284, 0.0
        %384 = vst.msk [vmem:[#allocation3 + $0x318] sm:$0xff] %vm284, 0.0
        %385 = vst.msk [vmem:[#allocation3 + $0x320] sm:$0xff] %vm284, 0.0
        %386 = vst.msk [vmem:[#allocation3 + $0x328] sm:$0xff] %vm284, 0.0
        %387 = vst.msk [vmem:[#allocation3 + $0x330] sm:$0xff] %vm284, 0.0
        %388 = vst.msk [vmem:[#allocation3 + $0x338] sm:$0xff] %vm284, 0.0
        %389 = vst.msk [vmem:[#allocation3 + $0x340] sm:$0xff] %vm284, 0.0
        %390 = vst.msk [vmem:[#allocation3 + $0x348] sm:$0xff] %vm284, 0.0
        %391 = vst.msk [vmem:[#allocation3 + $0x350] sm:$0xff] %vm284, 0.0
        %392 = vst.msk [vmem:[#allocation3 + $0x358] sm:$0xff] %vm284, 0.0
        %393 = vst.msk [vmem:[#allocation3 + $0x360] sm:$0xff] %vm284, 0.0
        %394 = vst.msk [vmem:[#allocation3 + $0x368] sm:$0xff] %vm284, 0.0
        %395 = vst.msk [vmem:[#allocation3 + $0x370] sm:$0xff] %vm284, 0.0
        %396 = vst.msk [vmem:[#allocation3 + $0x378] sm:$0xff] %vm284, 0.0
        %397 = vst.msk [vmem:[#allocation3 + $0x380] sm:$0xff] %vm284, 0.0
        %398 = vst.msk [vmem:[#allocation3 + $0x388] sm:$0xff] %vm284, 0.0
        %399 = vst.msk [vmem:[#allocation3 + $0x390] sm:$0xff] %vm284, 0.0
        %400 = vst.msk [vmem:[#allocation3 + $0x398] sm:$0xff] %vm284, 0.0
        %401 = vst.msk [vmem:[#allocation3 + $0x3a0] sm:$0xff] %vm284, 0.0
        %402 = vst.msk [vmem:[#allocation3 + $0x3a8] sm:$0xff] %vm284, 0.0
        %403 = vst.msk [vmem:[#allocation3 + $0x3b0] sm:$0xff] %vm284, 0.0
        %404 = vst.msk [vmem:[#allocation3 + $0x3b8] sm:$0xff] %vm284, 0.0
        %405 = vst.msk [vmem:[#allocation3 + $0x3c0] sm:$0xff] %vm284, 0.0
        %406 = vst.msk [vmem:[#allocation3 + $0x3c8] sm:$0xff] %vm284, 0.0
        %407 = vst.msk [vmem:[#allocation3 + $0x3d0] sm:$0xff] %vm284, 0.0
        %408 = vst.msk [vmem:[#allocation3 + $0x3d8] sm:$0xff] %vm284, 0.0
        %409 = vst.msk [vmem:[#allocation3 + $0x3e0] sm:$0xff] %vm284, 0.0
        %410 = vst.msk [vmem:[#allocation3 + $0x3e8] sm:$0xff] %vm284, 0.0
        %411 = vst.msk [vmem:[#allocation3 + $0x3f0] sm:$0xff] %vm284, 0.0
        %412 = vst.msk [vmem:[#allocation3 + $0x3f8] sm:$0xff] %vm284, 0.0
        %413 = vst.msk [vmem:[#allocation3 + $0x400] sm:$0xff] %vm284, 0.0
        %414 = vst.msk [vmem:[#allocation3 + $0x408] sm:$0xff] %vm284, 0.0
        %415 = vst.msk [vmem:[#allocation3 + $0x410] sm:$0xff] %vm284, 0.0
        %416 = vst.msk [vmem:[#allocation3 + $0x418] sm:$0xff] %vm284, 0.0
        %417 = vst.msk [vmem:[#allocation3 + $0x420] sm:$0xff] %vm284, 0.0
        %418 = vst.msk [vmem:[#allocation3 + $0x428] sm:$0xff] %vm284, 0.0
        %419 = vst.msk [vmem:[#allocation3 + $0x430] sm:$0xff] %vm284, 0.0
        %420 = vst.msk [vmem:[#allocation3 + $0x438] sm:$0xff] %vm284, 0.0
        %421 = vst.msk [vmem:[#allocation3 + $0x440] sm:$0xff] %vm284, 0.0
        %422 = vst.msk [vmem:[#allocation3 + $0x448] sm:$0xff] %vm284, 0.0
        %423 = vst.msk [vmem:[#allocation3 + $0x450] sm:$0xff] %vm284, 0.0
        %424 = vst.msk [vmem:[#allocation3 + $0x458] sm:$0xff] %vm284, 0.0
        %425 = vst.msk [vmem:[#allocation3 + $0x460] sm:$0xff] %vm284, 0.0
        %426 = vst.msk [vmem:[#allocation3 + $0x468] sm:$0xff] %vm284, 0.0
        %427 = vst.msk [vmem:[#allocation3 + $0x470] sm:$0xff] %vm284, 0.0
        %428 = vst.msk [vmem:[#allocation3 + $0x478] sm:$0xff] %vm284, 0.0
        %429 = vst.msk [vmem:[#allocation3 + $0x480] sm:$0xff] %vm284, 0.0
        %430 = vst.msk [vmem:[#allocation3 + $0x488] sm:$0xff] %vm284, 0.0
        %431 = vst.msk [vmem:[#allocation3 + $0x490] sm:$0xff] %vm284, 0.0
        %432 = vst.msk [vmem:[#allocation3 + $0x498] sm:$0xff] %vm284, 0.0
        %433 = vst.msk [vmem:[#allocation3 + $0x4a0] sm:$0xff] %vm284, 0.0
        %434 = vst.msk [vmem:[#allocation3 + $0x4a8] sm:$0xff] %vm284, 0.0
        %435 = vst.msk [vmem:[#allocation3 + $0x4b0] sm:$0xff] %vm284, 0.0
        %436 = vst.msk [vmem:[#allocation3 + $0x4b8] sm:$0xff] %vm284, 0.0
        %437 = vst.msk [vmem:[#allocation3 + $0x4c0] sm:$0xff] %vm284, 0.0
        %438 = vst.msk [vmem:[#allocation3 + $0x4c8] sm:$0xff] %vm284, 0.0
        %439 = vst.msk [vmem:[#allocation3 + $0x4d0] sm:$0xff] %vm284, 0.0
        %440 = vst.msk [vmem:[#allocation3 + $0x4d8] sm:$0xff] %vm284, 0.0
        %441 = vst.msk [vmem:[#allocation3 + $0x4e0] sm:$0xff] %vm284, 0.0
        %442 = vst.msk [vmem:[#allocation3 + $0x4e8] sm:$0xff] %vm284, 0.0
        %443 = vst.msk [vmem:[#allocation3 + $0x4f0] sm:$0xff] %vm284, 0.0
        %444 = vst.msk [vmem:[#allocation3 + $0x4f8] sm:$0xff] %vm284, 0.0
      $region40: #{bcrnn_forward.1} parent=35 // pred_fallthru
        _
      %v445 = vld [vmem:[#allocation3 + $0x6] sm:$0xff]
      %v446 = vld [vmem:[#allocation3 + $0xe] sm:$0xff]
      %v447 = vld [vmem:[#allocation3 + $0x26] sm:$0xff]
      %v448 = vld [vmem:[#allocation3 + $0x2e] sm:$0xff]
      %v449 = vld [vmem:[#allocation3 + $0x46] sm:$0xff]
      %v450 = vld [vmem:[#allocation3 + $0x4e] sm:$0xff]
      %v451 = vld [vmem:[#allocation3 + $0x66] sm:$0xff]
      %v452 = vld [vmem:[#allocation3 + $0x6e] sm:$0xff]
      %v453 = vld [vmem:[#allocation3 + $0x86] sm:$0xff]
      %v454 = vld [vmem:[#allocation3 + $0x8e] sm:$0xff]
      %v455 = vld [vmem:[#allocation3 + $0xa6] sm:$0xff]
      %v456 = vld [vmem:[#allocation3 + $0xae] sm:$0xff]
      %v457 = vld [vmem:[#allocation3 + $0xc6] sm:$0xff]
      %v458 = vld [vmem:[#allocation3 + $0xce] sm:$0xff]
      %v459 = vld [vmem:[#allocation3 + $0xe6] sm:$0xff]
      %v460 = vld [vmem:[#allocation3 + $0xee] sm:$0xff]
      %v461 = vld [vmem:[#allocation3 + $0x106] sm:$0xff]
      %v462 = vld [vmem:[#allocation3 + $0x10e] sm:$0xff]
      %v463 = vld [vmem:[#allocation3 + $0x126] sm:$0xff]
      %v464 = vld [vmem:[#allocation3 + $0x12e] sm:$0xff]
      %v465 = vld [vmem:[#allocation3 + $0x146] sm:$0xff]
      %v466 = vld [vmem:[#allocation3 + $0x14e] sm:$0xff]
      %v467 = vld [vmem:[#allocation3 + $0x166] sm:$0xff]
      %v468 = vld [vmem:[#allocation3 + $0x16e] sm:$0xff]
      %v469 = vld [vmem:[#allocation3 + $0x186] sm:$0xff]
      %v470 = vld [vmem:[#allocation3 + $0x18e] sm:$0xff]
      %v471 = vld [vmem:[#allocation3 + $0x1a6] sm:$0xff]
      %v472 = vld [vmem:[#allocation3 + $0x1ae] sm:$0xff]
      %v473 = vld [vmem:[#allocation3 + $0x1c6] sm:$0xff]
      %v474 = vld [vmem:[#allocation3 + $0x1ce] sm:$0xff]
      %v475 = vld [vmem:[#allocation3 + $0x1e6] sm:$0xff]
      %v476 = vld [vmem:[#allocation3 + $0x1ee] sm:$0xff]
      %v477 = vld [vmem:[#allocation3 + $0x286] sm:$0xff]
      %v478 = vld [vmem:[#allocation3 + $0x28e] sm:$0xff]
      %v479 = vld [vmem:[#allocation3 + $0x2a6] sm:$0xff]
      %v480 = vld [vmem:[#allocation3 + $0x2ae] sm:$0xff]
      %v481 = vld [vmem:[#allocation3 + $0x2c6] sm:$0xff]
      %v482 = vld [vmem:[#allocation3 + $0x2ce] sm:$0xff]
      %v483 = vld [vmem:[#allocation3 + $0x2e6] sm:$0xff]
      %v484 = vld [vmem:[#allocation3 + $0x2ee] sm:$0xff]
      %v485 = vld [vmem:[#allocation3 + $0x306] sm:$0xff]
      %v486 = vld [vmem:[#allocation3 + $0x30e] sm:$0xff]
      %v487 = vld [vmem:[#allocation3 + $0x326] sm:$0xff]
      %v488 = vld [vmem:[#allocation3 + $0x32e] sm:$0xff]
      %v489 = vld [vmem:[#allocation3 + $0x346] sm:$0xff]
      %v490 = vld [vmem:[#allocation3 + $0x34e] sm:$0xff]
      %v491 = vld [vmem:[#allocation3 + $0x366] sm:$0xff]
      %v492 = vld [vmem:[#allocation3 + $0x36e] sm:$0xff]
      %v493 = vld [vmem:[#allocation3 + $0x386] sm:$0xff]
      %v494 = vld [vmem:[#allocation3 + $0x38e] sm:$0xff]
      %v495 = vld [vmem:[#allocation3 + $0x3a6] sm:$0xff]
      %v496 = vld [vmem:[#allocation3 + $0x3ae] sm:$0xff]
      %v497 = vld [vmem:[#allocation3 + $0x3c6] sm:$0xff]
      %v498 = vld [vmem:[#allocation3 + $0x3ce] sm:$0xff]
      %v499 = vld [vmem:[#allocation3 + $0x3e6] sm:$0xff]
      %v500 = vld [vmem:[#allocation3 + $0x3ee] sm:$0xff]
      %v501 = vld [vmem:[#allocation3 + $0x406] sm:$0xff]
      %v502 = vld [vmem:[#allocation3 + $0x40e] sm:$0xff]
      %v503 = vld [vmem:[#allocation3 + $0x426] sm:$0xff]
      %v504 = vld [vmem:[#allocation3 + $0x42e] sm:$0xff]
      %v505 = vld [vmem:[#allocation3 + $0x446] sm:$0xff]
      %v506 = vld [vmem:[#allocation3 + $0x44e] sm:$0xff]
      %v507 = vld [vmem:[#allocation3 + $0x466] sm:$0xff]
      %v508 = vld [vmem:[#allocation3 + $0x46e] sm:$0xff]
      %vm509 = vcmask 261120
      %510 = vst.msk [vmem:[#allocation2] sm:$0xff] %vm509, %v445
      %511 = vst.msk [vmem:[#allocation2 + $0x18] sm:$0xff] %vm509, %v446
      %512 = vst.msk [vmem:[#allocation2 + $0x30] sm:$0xff] %vm509, %v447
      %513 = vst.msk [vmem:[#allocation2 + $0x48] sm:$0xff] %vm509, %v448
      %514 = vst.msk [vmem:[#allocation2 + $0x60] sm:$0xff] %vm509, %v449
      %515 = vst.msk [vmem:[#allocation2 + $0x78] sm:$0xff] %vm509, %v450
      %516 = vst.msk [vmem:[#allocation2 + $0x90] sm:$0xff] %vm509, %v451
      %517 = vst.msk [vmem:[#allocation2 + $0xa8] sm:$0xff] %vm509, %v452
      %518 = vst.msk [vmem:[#allocation2 + $0xc0] sm:$0xff] %vm509, %v453
      %519 = vst.msk [vmem:[#allocation2 + $0xd8] sm:$0xff] %vm509, %v454
      %520 = vst.msk [vmem:[#allocation2 + $0xf0] sm:$0xff] %vm509, %v455
      %521 = vst.msk [vmem:[#allocation2 + $0x108] sm:$0xff] %vm509, %v456
      %522 = vst.msk [vmem:[#allocation2 + $0x120] sm:$0xff] %vm509, %v457
      %523 = vst.msk [vmem:[#allocation2 + $0x138] sm:$0xff] %vm509, %v458
      %524 = vst.msk [vmem:[#allocation2 + $0x150] sm:$0xff] %vm509, %v459
      %525 = vst.msk [vmem:[#allocation2 + $0x168] sm:$0xff] %vm509, %v460
      %526 = vst.msk [vmem:[#allocation2 + $0x180] sm:$0xff] %vm509, %v461
      %527 = vst.msk [vmem:[#allocation2 + $0x198] sm:$0xff] %vm509, %v462
      %528 = vst.msk [vmem:[#allocation2 + $0x1b0] sm:$0xff] %vm509, %v463
      %529 = vst.msk [vmem:[#allocation2 + $0x1c8] sm:$0xff] %vm509, %v464
      %530 = vst.msk [vmem:[#allocation2 + $0x1e0] sm:$0xff] %vm509, %v465
      %531 = vst.msk [vmem:[#allocation2 + $0x1f8] sm:$0xff] %vm509, %v466
      %532 = vst.msk [vmem:[#allocation2 + $0x210] sm:$0xff] %vm509, %v467
      %533 = vst.msk [vmem:[#allocation2 + $0x228] sm:$0xff] %vm509, %v468
      %534 = vst.msk [vmem:[#allocation2 + $0x240] sm:$0xff] %vm509, %v469
      %535 = vst.msk [vmem:[#allocation2 + $0x258] sm:$0xff] %vm509, %v470
      %536 = vst.msk [vmem:[#allocation2 + $0x270] sm:$0xff] %vm509, %v471
      %537 = vst.msk [vmem:[#allocation2 + $0x288] sm:$0xff] %vm509, %v472
      %538 = vst.msk [vmem:[#allocation2 + $0x2a0] sm:$0xff] %vm509, %v473
      %539 = vst.msk [vmem:[#allocation2 + $0x2b8] sm:$0xff] %vm509, %v474
      %540 = vst.msk [vmem:[#allocation2 + $0x2d0] sm:$0xff] %vm509, %v475
      %541 = vst.msk [vmem:[#allocation2 + $0x2e8] sm:$0xff] %vm509, %v476
      %542 = vst.msk [vmem:[#allocation2 + $0x300] sm:$0xff] %vm509, %v477
      %543 = vst.msk [vmem:[#allocation2 + $0x318] sm:$0xff] %vm509, %v478
      %544 = vst.msk [vmem:[#allocation2 + $0x330] sm:$0xff] %vm509, %v479
      %545 = vst.msk [vmem:[#allocation2 + $0x348] sm:$0xff] %vm509, %v480
      %546 = vst.msk [vmem:[#allocation2 + $0x360] sm:$0xff] %vm509, %v481
      %547 = vst.msk [vmem:[#allocation2 + $0x378] sm:$0xff] %vm509, %v482
      %548 = vst.msk [vmem:[#allocation2 + $0x390] sm:$0xff] %vm509, %v483
      %549 = vst.msk [vmem:[#allocation2 + $0x3a8] sm:$0xff] %vm509, %v484
      %550 = vst.msk [vmem:[#allocation2 + $0x3c0] sm:$0xff] %vm509, %v485
      %551 = vst.msk [vmem:[#allocation2 + $0x3d8] sm:$0xff] %vm509, %v486
      %552 = vst.msk [vmem:[#allocation2 + $0x3f0] sm:$0xff] %vm509, %v487
      %553 = vst.msk [vmem:[#allocation2 + $0x408] sm:$0xff] %vm509, %v488
      %554 = vst.msk [vmem:[#allocation2 + $0x420] sm:$0xff] %vm509, %v489
      %555 = vst.msk [vmem:[#allocation2 + $0x438] sm:$0xff] %vm509, %v490
      %556 = vst.msk [vmem:[#allocation2 + $0x450] sm:$0xff] %vm509, %v491
      %557 = vst.msk [vmem:[#allocation2 + $0x468] sm:$0xff] %vm509, %v492
      %558 = vst.msk [vmem:[#allocation2 + $0x480] sm:$0xff] %vm509, %v493
      %559 = vst.msk [vmem:[#allocation2 + $0x498] sm:$0xff] %vm509, %v494
      %560 = vst.msk [vmem:[#allocation2 + $0x4b0] sm:$0xff] %vm509, %v495
      %561 = vst.msk [vmem:[#allocation2 + $0x4c8] sm:$0xff] %vm509, %v496
      %562 = vst.msk [vmem:[#allocation2 + $0x4e0] sm:$0xff] %vm509, %v497
      %563 = vst.msk [vmem:[#allocation2 + $0x4f8] sm:$0xff] %vm509, %v498
      %564 = vst.msk [vmem:[#allocation2 + $0x510] sm:$0xff] %vm509, %v499
      %565 = vst.msk [vmem:[#allocation2 + $0x528] sm:$0xff] %vm509, %v500
      %566 = vst.msk [vmem:[#allocation2 + $0x540] sm:$0xff] %vm509, %v501
      %567 = vst.msk [vmem:[#allocation2 + $0x558] sm:$0xff] %vm509, %v502
      %568 = vst.msk [vmem:[#allocation2 + $0x570] sm:$0xff] %vm509, %v503
      %569 = vst.msk [vmem:[#allocation2 + $0x588] sm:$0xff] %vm509, %v504
      %570 = vst.msk [vmem:[#allocation2 + $0x5a0] sm:$0xff] %vm509, %v505
      %571 = vst.msk [vmem:[#allocation2 + $0x5b8] sm:$0xff] %vm509, %v506
      %572 = vst.msk [vmem:[#allocation2 + $0x5d0] sm:$0xff] %vm509, %v507
      %573 = vst.msk [vmem:[#allocation2 + $0x5e8] sm:$0xff] %vm509, %v508
      %v574 = vld [vmem:[#allocation3 + $0x8] sm:$0xff]
      %v575 = vld [vmem:[#allocation3 + $0x10] sm:$0xff]
      %v576 = vld [vmem:[#allocation3 + $0x28] sm:$0xff]
      %v577 = vld [vmem:[#allocation3 + $0x30] sm:$0xff]
      %v578 = vld [vmem:[#allocation3 + $0x48] sm:$0xff]
      %v579 = vld [vmem:[#allocation3 + $0x50] sm:$0xff]
      %v580 = vld [vmem:[#allocation3 + $0x68] sm:$0xff]
      %v581 = vld [vmem:[#allocation3 + $0x70] sm:$0xff]
      %v582 = vld [vmem:[#allocation3 + $0x88] sm:$0xff]
      %v583 = vld [vmem:[#allocation3 + $0x90] sm:$0xff]
      %v584 = vld [vmem:[#allocation3 + $0xa8] sm:$0xff]
      %v585 = vld [vmem:[#allocation3 + $0xb0] sm:$0xff]
      %v586 = vld [vmem:[#allocation3 + $0xc8] sm:$0xff]
      %v587 = vld [vmem:[#allocation3 + $0xd0] sm:$0xff]
      %v588 = vld [vmem:[#allocation3 + $0xe8] sm:$0xff]
      %v589 = vld [vmem:[#allocation3 + $0xf0] sm:$0xff]
      %v590 = vld [vmem:[#allocation3 + $0x108] sm:$0xff]
      %v591 = vld [vmem:[#allocation3 + $0x110] sm:$0xff]
      %v592 = vld [vmem:[#allocation3 + $0x128] sm:$0xff]
      %v593 = vld [vmem:[#allocation3 + $0x130] sm:$0xff]
      %v594 = vld [vmem:[#allocation3 + $0x148] sm:$0xff]
      %v595 = vld [vmem:[#allocation3 + $0x150] sm:$0xff]
      %v596 = vld [vmem:[#allocation3 + $0x168] sm:$0xff]
      %v597 = vld [vmem:[#allocation3 + $0x170] sm:$0xff]
      %v598 = vld [vmem:[#allocation3 + $0x188] sm:$0xff]
      %v599 = vld [vmem:[#allocation3 + $0x190] sm:$0xff]
      %v600 = vld [vmem:[#allocation3 + $0x1a8] sm:$0xff]
      %v601 = vld [vmem:[#allocation3 + $0x1b0] sm:$0xff]
      %v602 = vld [vmem:[#allocation3 + $0x1c8] sm:$0xff]
      %v603 = vld [vmem:[#allocation3 + $0x1d0] sm:$0xff]
      %v604 = vld [vmem:[#allocation3 + $0x1e8] sm:$0xff]
      %v605 = vld [vmem:[#allocation3 + $0x1f0] sm:$0xff]
      %v606 = vld [vmem:[#allocation3 + $0x288] sm:$0xff]
      %v607 = vld [vmem:[#allocation3 + $0x290] sm:$0xff]
      %v608 = vld [vmem:[#allocation3 + $0x2a8] sm:$0xff]
      %v609 = vld [vmem:[#allocation3 + $0x2b0] sm:$0xff]
      %v610 = vld [vmem:[#allocation3 + $0x2c8] sm:$0xff]
      %v611 = vld [vmem:[#allocation3 + $0x2d0] sm:$0xff]
      %v612 = vld [vmem:[#allocation3 + $0x2e8] sm:$0xff]
      %v613 = vld [vmem:[#allocation3 + $0x2f0] sm:$0xff]
      %v614 = vld [vmem:[#allocation3 + $0x308] sm:$0xff]
      %v615 = vld [vmem:[#allocation3 + $0x310] sm:$0xff]
      %v616 = vld [vmem:[#allocation3 + $0x328] sm:$0xff]
      %v617 = vld [vmem:[#allocation3 + $0x330] sm:$0xff]
      %v618 = vld [vmem:[#allocation3 + $0x348] sm:$0xff]
      %v619 = vld [vmem:[#allocation3 + $0x350] sm:$0xff]
      %v620 = vld [vmem:[#allocation3 + $0x368] sm:$0xff]
      %v621 = vld [vmem:[#allocation3 + $0x370] sm:$0xff]
      %v622 = vld [vmem:[#allocation3 + $0x388] sm:$0xff]
      %v623 = vld [vmem:[#allocation3 + $0x390] sm:$0xff]
      %v624 = vld [vmem:[#allocation3 + $0x3a8] sm:$0xff]
      %v625 = vld [vmem:[#allocation3 + $0x3b0] sm:$0xff]
      %v626 = vld [vmem:[#allocation3 + $0x3c8] sm:$0xff]
      %v627 = vld [vmem:[#allocation3 + $0x3d0] sm:$0xff]
      %v628 = vld [vmem:[#allocation3 + $0x3e8] sm:$0xff]
      %v629 = vld [vmem:[#allocation3 + $0x3f0] sm:$0xff]
      %v630 = vld [vmem:[#allocation3 + $0x408] sm:$0xff]
      %v631 = vld [vmem:[#allocation3 + $0x410] sm:$0xff]
      %v632 = vld [vmem:[#allocation3 + $0x428] sm:$0xff]
      %v633 = vld [vmem:[#allocation3 + $0x430] sm:$0xff]
      %v634 = vld [vmem:[#allocation3 + $0x448] sm:$0xff]
      %v635 = vld [vmem:[#allocation3 + $0x450] sm:$0xff]
      %v636 = vld [vmem:[#allocation3 + $0x468] sm:$0xff]
      %v637 = vld [vmem:[#allocation3 + $0x470] sm:$0xff]
      %702 = vrot.lane.b32.xlu0 %v574, 32
      %v703 = vpop.permute.xlu0 %702
      %704 = vrot.lane.b32.xlu0 %v575, 32
      %v705 = vpop.permute.xlu0 %704
      %706 = vrot.lane.b32.xlu0 %v576, 32
      %v707 = vpop.permute.xlu0 %706
      %708 = vrot.lane.b32.xlu0 %v577, 32
      %v709 = vpop.permute.xlu0 %708
      %710 = vrot.lane.b32.xlu0 %v578, 32
      %v711 = vpop.permute.xlu0 %710
      %712 = vrot.lane.b32.xlu0 %v579, 32
      %v713 = vpop.permute.xlu0 %712
      %714 = vrot.lane.b32.xlu0 %v580, 32
      %v715 = vpop.permute.xlu0 %714
      %716 = vrot.lane.b32.xlu0 %v581, 32
      %v717 = vpop.permute.xlu0 %716
      %718 = vrot.lane.b32.xlu0 %v582, 32
      %v719 = vpop.permute.xlu0 %718
      %720 = vrot.lane.b32.xlu0 %v583, 32
      %v721 = vpop.permute.xlu0 %720
      %722 = vrot.lane.b32.xlu0 %v584, 32
      %v723 = vpop.permute.xlu0 %722
      %724 = vrot.lane.b32.xlu0 %v585, 32
      %v725 = vpop.permute.xlu0 %724
      %726 = vrot.lane.b32.xlu0 %v586, 32
      %v727 = vpop.permute.xlu0 %726
      %728 = vrot.lane.b32.xlu0 %v587, 32
      %v729 = vpop.permute.xlu0 %728
      %730 = vrot.lane.b32.xlu0 %v588, 32
      %v731 = vpop.permute.xlu0 %730
      %732 = vrot.lane.b32.xlu0 %v589, 32
      %v733 = vpop.permute.xlu0 %732
      %734 = vrot.lane.b32.xlu0 %v590, 32
      %v735 = vpop.permute.xlu0 %734
      %736 = vrot.lane.b32.xlu0 %v591, 32
      %v737 = vpop.permute.xlu0 %736
      %738 = vrot.lane.b32.xlu0 %v592, 32
      %v739 = vpop.permute.xlu0 %738
      %740 = vrot.lane.b32.xlu0 %v593, 32
      %v741 = vpop.permute.xlu0 %740
      %742 = vrot.lane.b32.xlu0 %v594, 32
      %v743 = vpop.permute.xlu0 %742
      %744 = vrot.lane.b32.xlu0 %v595, 32
      %v745 = vpop.permute.xlu0 %744
      %746 = vrot.lane.b32.xlu0 %v596, 32
      %v747 = vpop.permute.xlu0 %746
      %748 = vrot.lane.b32.xlu0 %v597, 32
      %v749 = vpop.permute.xlu0 %748
      %750 = vrot.lane.b32.xlu0 %v598, 32
      %v751 = vpop.permute.xlu0 %750
      %752 = vrot.lane.b32.xlu0 %v599, 32
      %v753 = vpop.permute.xlu0 %752
      %754 = vrot.lane.b32.xlu0 %v600, 32
      %v755 = vpop.permute.xlu0 %754
      %756 = vrot.lane.b32.xlu0 %v601, 32
      %v757 = vpop.permute.xlu0 %756
      %758 = vrot.lane.b32.xlu0 %v602, 32
      %v759 = vpop.permute.xlu0 %758
      %760 = vrot.lane.b32.xlu0 %v603, 32
      %v761 = vpop.permute.xlu0 %760
      %762 = vrot.lane.b32.xlu0 %v604, 32
      %v763 = vpop.permute.xlu0 %762
      %764 = vrot.lane.b32.xlu0 %v605, 32
      %v765 = vpop.permute.xlu0 %764
      %766 = vrot.lane.b32.xlu0 %v606, 32
      %v767 = vpop.permute.xlu0 %766
      %768 = vrot.lane.b32.xlu0 %v607, 32
      %v769 = vpop.permute.xlu0 %768
      %770 = vrot.lane.b32.xlu0 %v608, 32
      %v771 = vpop.permute.xlu0 %770
      %772 = vrot.lane.b32.xlu0 %v609, 32
      %v773 = vpop.permute.xlu0 %772
      %774 = vrot.lane.b32.xlu0 %v610, 32
      %v775 = vpop.permute.xlu0 %774
      %776 = vrot.lane.b32.xlu0 %v611, 32
      %v777 = vpop.permute.xlu0 %776
      %778 = vrot.lane.b32.xlu0 %v612, 32
      %v779 = vpop.permute.xlu0 %778
      %780 = vrot.lane.b32.xlu0 %v613, 32
      %v781 = vpop.permute.xlu0 %780
      %782 = vrot.lane.b32.xlu0 %v614, 32
      %v783 = vpop.permute.xlu0 %782
      %784 = vrot.lane.b32.xlu0 %v615, 32
      %v785 = vpop.permute.xlu0 %784
      %786 = vrot.lane.b32.xlu0 %v616, 32
      %v787 = vpop.permute.xlu0 %786
      %788 = vrot.lane.b32.xlu0 %v617, 32
      %v789 = vpop.permute.xlu0 %788
      %790 = vrot.lane.b32.xlu0 %v618, 32
      %v791 = vpop.permute.xlu0 %790
      %792 = vrot.lane.b32.xlu0 %v619, 32
      %v793 = vpop.permute.xlu0 %792
      %794 = vrot.lane.b32.xlu0 %v620, 32
      %v795 = vpop.permute.xlu0 %794
      %796 = vrot.lane.b32.xlu0 %v621, 32
      %v797 = vpop.permute.xlu0 %796
      %798 = vrot.lane.b32.xlu0 %v622, 32
      %v799 = vpop.permute.xlu0 %798
      %800 = vrot.lane.b32.xlu0 %v623, 32
      %v801 = vpop.permute.xlu0 %800
      %802 = vrot.lane.b32.xlu0 %v624, 32
      %v803 = vpop.permute.xlu0 %802
      %804 = vrot.lane.b32.xlu0 %v625, 32
      %v805 = vpop.permute.xlu0 %804
      %806 = vrot.lane.b32.xlu0 %v626, 32
      %v807 = vpop.permute.xlu0 %806
      %808 = vrot.lane.b32.xlu0 %v627, 32
      %v809 = vpop.permute.xlu0 %808
      %810 = vrot.lane.b32.xlu0 %v628, 32
      %v811 = vpop.permute.xlu0 %810
      %812 = vrot.lane.b32.xlu0 %v629, 32
      %v813 = vpop.permute.xlu0 %812
      %814 = vrot.lane.b32.xlu0 %v630, 32
      %v815 = vpop.permute.xlu0 %814
      %816 = vrot.lane.b32.xlu0 %v631, 32
      %v817 = vpop.permute.xlu0 %816
      %818 = vrot.lane.b32.xlu0 %v632, 32
      %v819 = vpop.permute.xlu0 %818
      %820 = vrot.lane.b32.xlu0 %v633, 32
      %v821 = vpop.permute.xlu0 %820
      %822 = vrot.lane.b32.xlu0 %v634, 32
      %v823 = vpop.permute.xlu0 %822
      %824 = vrot.lane.b32.xlu0 %v635, 32
      %v825 = vpop.permute.xlu0 %824
      %826 = vrot.lane.b32.xlu0 %v636, 32
      %v827 = vpop.permute.xlu0 %826
      %828 = vrot.lane.b32.xlu0 %v637, 32
      %v829 = vpop.permute.xlu0 %828
      %vm894 = vcmask 523520
      %895 = vst.msk [vmem:[#allocation2] sm:$0xff] %vm894, %v703
      %896 = vst.msk [vmem:[#allocation2 + $0x18] sm:$0xff] %vm894, %v705
      %897 = vst.msk [vmem:[#allocation2 + $0x30] sm:$0xff] %vm894, %v707
      %898 = vst.msk [vmem:[#allocation2 + $0x48] sm:$0xff] %vm894, %v709
      %899 = vst.msk [vmem:[#allocation2 + $0x60] sm:$0xff] %vm894, %v711
      %900 = vst.msk [vmem:[#allocation2 + $0x78] sm:$0xff] %vm894, %v713
      %901 = vst.msk [vmem:[#allocation2 + $0x90] sm:$0xff] %vm894, %v715
      %902 = vst.msk [vmem:[#allocation2 + $0xa8] sm:$0xff] %vm894, %v717
      %903 = vst.msk [vmem:[#allocation2 + $0xc0] sm:$0xff] %vm894, %v719
      %904 = vst.msk [vmem:[#allocation2 + $0xd8] sm:$0xff] %vm894, %v721
      %905 = vst.msk [vmem:[#allocation2 + $0xf0] sm:$0xff] %vm894, %v723
      %906 = vst.msk [vmem:[#allocation2 + $0x108] sm:$0xff] %vm894, %v725
      %907 = vst.msk [vmem:[#allocation2 + $0x120] sm:$0xff] %vm894, %v727
      %908 = vst.msk [vmem:[#allocation2 + $0x138] sm:$0xff] %vm894, %v729
      %909 = vst.msk [vmem:[#allocation2 + $0x150] sm:$0xff] %vm894, %v731
      %910 = vst.msk [vmem:[#allocation2 + $0x168] sm:$0xff] %vm894, %v733
      %911 = vst.msk [vmem:[#allocation2 + $0x180] sm:$0xff] %vm894, %v735
      %912 = vst.msk [vmem:[#allocation2 + $0x198] sm:$0xff] %vm894, %v737
      %913 = vst.msk [vmem:[#allocation2 + $0x1b0] sm:$0xff] %vm894, %v739
      %914 = vst.msk [vmem:[#allocation2 + $0x1c8] sm:$0xff] %vm894, %v741
      %915 = vst.msk [vmem:[#allocation2 + $0x1e0] sm:$0xff] %vm894, %v743
      %916 = vst.msk [vmem:[#allocation2 + $0x1f8] sm:$0xff] %vm894, %v745
      %917 = vst.msk [vmem:[#allocation2 + $0x210] sm:$0xff] %vm894, %v747
      %918 = vst.msk [vmem:[#allocation2 + $0x228] sm:$0xff] %vm894, %v749
      %919 = vst.msk [vmem:[#allocation2 + $0x240] sm:$0xff] %vm894, %v751
      %920 = vst.msk [vmem:[#allocation2 + $0x258] sm:$0xff] %vm894, %v753
      %921 = vst.msk [vmem:[#allocation2 + $0x270] sm:$0xff] %vm894, %v755
      %922 = vst.msk [vmem:[#allocation2 + $0x288] sm:$0xff] %vm894, %v757
      %923 = vst.msk [vmem:[#allocation2 + $0x2a0] sm:$0xff] %vm894, %v759
      %924 = vst.msk [vmem:[#allocation2 + $0x2b8] sm:$0xff] %vm894, %v761
      %925 = vst.msk [vmem:[#allocation2 + $0x2d0] sm:$0xff] %vm894, %v763
      %926 = vst.msk [vmem:[#allocation2 + $0x2e8] sm:$0xff] %vm894, %v765
      %927 = vst.msk [vmem:[#allocation2 + $0x300] sm:$0xff] %vm894, %v767
      %928 = vst.msk [vmem:[#allocation2 + $0x318] sm:$0xff] %vm894, %v769
      %929 = vst.msk [vmem:[#allocation2 + $0x330] sm:$0xff] %vm894, %v771
      %930 = vst.msk [vmem:[#allocation2 + $0x348] sm:$0xff] %vm894, %v773
      %931 = vst.msk [vmem:[#allocation2 + $0x360] sm:$0xff] %vm894, %v775
      %932 = vst.msk [vmem:[#allocation2 + $0x378] sm:$0xff] %vm894, %v777
      %933 = vst.msk [vmem:[#allocation2 + $0x390] sm:$0xff] %vm894, %v779
      %934 = vst.msk [vmem:[#allocation2 + $0x3a8] sm:$0xff] %vm894, %v781
      %935 = vst.msk [vmem:[#allocation2 + $0x3c0] sm:$0xff] %vm894, %v783
      %936 = vst.msk [vmem:[#allocation2 + $0x3d8] sm:$0xff] %vm894, %v785
      %937 = vst.msk [vmem:[#allocation2 + $0x3f0] sm:$0xff] %vm894, %v787
      %938 = vst.msk [vmem:[#allocation2 + $0x408] sm:$0xff] %vm894, %v789
      %939 = vst.msk [vmem:[#allocation2 + $0x420] sm:$0xff] %vm894, %v791
      %940 = vst.msk [vmem:[#allocation2 + $0x438] sm:$0xff] %vm894, %v793
      %941 = vst.msk [vmem:[#allocation2 + $0x450] sm:$0xff] %vm894, %v795
      %942 = vst.msk [vmem:[#allocation2 + $0x468] sm:$0xff] %vm894, %v797
      %943 = vst.msk [vmem:[#allocation2 + $0x480] sm:$0xff] %vm894, %v799
      %944 = vst.msk [vmem:[#allocation2 + $0x498] sm:$0xff] %vm894, %v801
      %945 = vst.msk [vmem:[#allocation2 + $0x4b0] sm:$0xff] %vm894, %v803
      %946 = vst.msk [vmem:[#allocation2 + $0x4c8] sm:$0xff] %vm894, %v805
      %947 = vst.msk [vmem:[#allocation2 + $0x4e0] sm:$0xff] %vm894, %v807
      %948 = vst.msk [vmem:[#allocation2 + $0x4f8] sm:$0xff] %vm894, %v809
      %949 = vst.msk [vmem:[#allocation2 + $0x510] sm:$0xff] %vm894, %v811
      %950 = vst.msk [vmem:[#allocation2 + $0x528] sm:$0xff] %vm894, %v813
      %951 = vst.msk [vmem:[#allocation2 + $0x540] sm:$0xff] %vm894, %v815
      %952 = vst.msk [vmem:[#allocation2 + $0x558] sm:$0xff] %vm894, %v817
      %953 = vst.msk [vmem:[#allocation2 + $0x570] sm:$0xff] %vm894, %v819
      %954 = vst.msk [vmem:[#allocation2 + $0x588] sm:$0xff] %vm894, %v821
      %955 = vst.msk [vmem:[#allocation2 + $0x5a0] sm:$0xff] %vm894, %v823
      %956 = vst.msk [vmem:[#allocation2 + $0x5b8] sm:$0xff] %vm894, %v825
      %957 = vst.msk [vmem:[#allocation2 + $0x5d0] sm:$0xff] %vm894, %v827
      %958 = vst.msk [vmem:[#allocation2 + $0x5e8] sm:$0xff] %vm894, %v829
      %v959 = vld [vmem:[#allocation3 + $0xa] sm:$0xff]
      %v960 = vld [vmem:[#allocation3 + $0x12] sm:$0xff]
      %v961 = vld [vmem:[#allocation3 + $0x2a] sm:$0xff]
      %v962 = vld [vmem:[#allocation3 + $0x32] sm:$0xff]
      %v963 = vld [vmem:[#allocation3 + $0x4a] sm:$0xff]
      %v964 = vld [vmem:[#allocation3 + $0x52] sm:$0xff]
      %v965 = vld [vmem:[#allocation3 + $0x6a] sm:$0xff]
      %v966 = vld [vmem:[#allocation3 + $0x72] sm:$0xff]
      %v967 = vld [vmem:[#allocation3 + $0x8a] sm:$0xff]
      %v968 = vld [vmem:[#allocation3 + $0x92] sm:$0xff]
      %v969 = vld [vmem:[#allocation3 + $0xaa] sm:$0xff]
      %v970 = vld [vmem:[#allocation3 + $0xb2] sm:$0xff]
      %v971 = vld [vmem:[#allocation3 + $0xca] sm:$0xff]
      %v972 = vld [vmem:[#allocation3 + $0xd2] sm:$0xff]
      %v973 = vld [vmem:[#allocation3 + $0xea] sm:$0xff]
      %v974 = vld [vmem:[#allocation3 + $0xf2] sm:$0xff]
      %v975 = vld [vmem:[#allocation3 + $0x10a] sm:$0xff]
      %v976 = vld [vmem:[#allocation3 + $0x112] sm:$0xff]
      %v977 = vld [vmem:[#allocation3 + $0x12a] sm:$0xff]
      %v978 = vld [vmem:[#allocation3 + $0x132] sm:$0xff]
      %v979 = vld [vmem:[#allocation3 + $0x14a] sm:$0xff]
      %v980 = vld [vmem:[#allocation3 + $0x152] sm:$0xff]
      %v981 = vld [vmem:[#allocation3 + $0x16a] sm:$0xff]
      %v982 = vld [vmem:[#allocation3 + $0x172] sm:$0xff]
      %v983 = vld [vmem:[#allocation3 + $0x18a] sm:$0xff]
      %v984 = vld [vmem:[#allocation3 + $0x192] sm:$0xff]
      %v985 = vld [vmem:[#allocation3 + $0x1aa] sm:$0xff]
      %v986 = vld [vmem:[#allocation3 + $0x1b2] sm:$0xff]
      %v987 = vld [vmem:[#allocation3 + $0x1ca] sm:$0xff]
      %v988 = vld [vmem:[#allocation3 + $0x1d2] sm:$0xff]
      %v989 = vld [vmem:[#allocation3 + $0x1ea] sm:$0xff]
      %v990 = vld [vmem:[#allocation3 + $0x1f2] sm:$0xff]
      %v991 = vld [vmem:[#allocation3 + $0x28a] sm:$0xff]
      %v992 = vld [vmem:[#allocation3 + $0x292] sm:$0xff]
      %v993 = vld [vmem:[#allocation3 + $0x2aa] sm:$0xff]
      %v994 = vld [vmem:[#allocation3 + $0x2b2] sm:$0xff]
      %v995 = vld [vmem:[#allocation3 + $0x2ca] sm:$0xff]
      %v996 = vld [vmem:[#allocation3 + $0x2d2] sm:$0xff]
      %v997 = vld [vmem:[#allocation3 + $0x2ea] sm:$0xff]
      %v998 = vld [vmem:[#allocation3 + $0x2f2] sm:$0xff]
      %v999 = vld [vmem:[#allocation3 + $0x30a] sm:$0xff]
      %v1000 = vld [vmem:[#allocation3 + $0x312] sm:$0xff]
      %v1001 = vld [vmem:[#allocation3 + $0x32a] sm:$0xff]
      %v1002 = vld [vmem:[#allocation3 + $0x332] sm:$0xff]
      %v1003 = vld [vmem:[#allocation3 + $0x34a] sm:$0xff]
      %v1004 = vld [vmem:[#allocation3 + $0x352] sm:$0xff]
      %v1005 = vld [vmem:[#allocation3 + $0x36a] sm:$0xff]
      %v1006 = vld [vmem:[#allocation3 + $0x372] sm:$0xff]
      %v1007 = vld [vmem:[#allocation3 + $0x38a] sm:$0xff]
      %v1008 = vld [vmem:[#allocation3 + $0x392] sm:$0xff]
      %v1009 = vld [vmem:[#allocation3 + $0x3aa] sm:$0xff]
      %v1010 = vld [vmem:[#allocation3 + $0x3b2] sm:$0xff]
      %v1011 = vld [vmem:[#allocation3 + $0x3ca] sm:$0xff]
      %v1012 = vld [vmem:[#allocation3 + $0x3d2] sm:$0xff]
      %v1013 = vld [vmem:[#allocation3 + $0x3ea] sm:$0xff]
      %v1014 = vld [vmem:[#allocation3 + $0x3f2] sm:$0xff]
      %v1015 = vld [vmem:[#allocation3 + $0x40a] sm:$0xff]
      %v1016 = vld [vmem:[#allocation3 + $0x412] sm:$0xff]
      %v1017 = vld [vmem:[#allocation3 + $0x42a] sm:$0xff]
      %v1018 = vld [vmem:[#allocation3 + $0x432] sm:$0xff]
      %v1019 = vld [vmem:[#allocation3 + $0x44a] sm:$0xff]
      %v1020 = vld [vmem:[#allocation3 + $0x452] sm:$0xff]
      %v1021 = vld [vmem:[#allocation3 + $0x46a] sm:$0xff]
      %v1022 = vld [vmem:[#allocation3 + $0x472] sm:$0xff]
      %1087 = vrot.lane.b32.xlu0 %v959, 64
      %v1088 = vpop.permute.xlu0 %1087
      %1089 = vrot.lane.b32.xlu0 %v960, 64
      %v1090 = vpop.permute.xlu0 %1089
      %1091 = vrot.lane.b32.xlu0 %v961, 64
      %v1092 = vpop.permute.xlu0 %1091
      %1093 = vrot.lane.b32.xlu0 %v962, 64
      %v1094 = vpop.permute.xlu0 %1093
      %1095 = vrot.lane.b32.xlu0 %v963, 64
      %v1096 = vpop.permute.xlu0 %1095
      %1097 = vrot.lane.b32.xlu0 %v964, 64
      %v1098 = vpop.permute.xlu0 %1097
      %1099 = vrot.lane.b32.xlu0 %v965, 64
      %v1100 = vpop.permute.xlu0 %1099
      %1101 = vrot.lane.b32.xlu0 %v966, 64
      %v1102 = vpop.permute.xlu0 %1101
      %1103 = vrot.lane.b32.xlu0 %v967, 64
      %v1104 = vpop.permute.xlu0 %1103
      %1105 = vrot.lane.b32.xlu0 %v968, 64
      %v1106 = vpop.permute.xlu0 %1105
      %1107 = vrot.lane.b32.xlu0 %v969, 64
      %v1108 = vpop.permute.xlu0 %1107
      %1109 = vrot.lane.b32.xlu0 %v970, 64
      %v1110 = vpop.permute.xlu0 %1109
      %1111 = vrot.lane.b32.xlu0 %v971, 64
      %v1112 = vpop.permute.xlu0 %1111
      %1113 = vrot.lane.b32.xlu0 %v972, 64
      %v1114 = vpop.permute.xlu0 %1113
      %1115 = vrot.lane.b32.xlu0 %v973, 64
      %v1116 = vpop.permute.xlu0 %1115
      %1117 = vrot.lane.b32.xlu0 %v974, 64
      %v1118 = vpop.permute.xlu0 %1117
      %1119 = vrot.lane.b32.xlu0 %v975, 64
      %v1120 = vpop.permute.xlu0 %1119
      %1121 = vrot.lane.b32.xlu0 %v976, 64
      %v1122 = vpop.permute.xlu0 %1121
      %1123 = vrot.lane.b32.xlu0 %v977, 64
      %v1124 = vpop.permute.xlu0 %1123
      %1125 = vrot.lane.b32.xlu0 %v978, 64
      %v1126 = vpop.permute.xlu0 %1125
      %1127 = vrot.lane.b32.xlu0 %v979, 64
      %v1128 = vpop.permute.xlu0 %1127
      %1129 = vrot.lane.b32.xlu0 %v980, 64
      %v1130 = vpop.permute.xlu0 %1129
      %1131 = vrot.lane.b32.xlu0 %v981, 64
      %v1132 = vpop.permute.xlu0 %1131
      %1133 = vrot.lane.b32.xlu0 %v982, 64
      %v1134 = vpop.permute.xlu0 %1133
      %1135 = vrot.lane.b32.xlu0 %v983, 64
      %v1136 = vpop.permute.xlu0 %1135
      %1137 = vrot.lane.b32.xlu0 %v984, 64
      %v1138 = vpop.permute.xlu0 %1137
      %1139 = vrot.lane.b32.xlu0 %v985, 64
      %v1140 = vpop.permute.xlu0 %1139
      %1141 = vrot.lane.b32.xlu0 %v986, 64
      %v1142 = vpop.permute.xlu0 %1141
      %1143 = vrot.lane.b32.xlu0 %v987, 64
      %v1144 = vpop.permute.xlu0 %1143
      %1145 = vrot.lane.b32.xlu0 %v988, 64
      %v1146 = vpop.permute.xlu0 %1145
      %1147 = vrot.lane.b32.xlu0 %v989, 64
      %v1148 = vpop.permute.xlu0 %1147
      %1149 = vrot.lane.b32.xlu0 %v990, 64
      %v1150 = vpop.permute.xlu0 %1149
      %1151 = vrot.lane.b32.xlu0 %v991, 64
      %v1152 = vpop.permute.xlu0 %1151
      %1153 = vrot.lane.b32.xlu0 %v992, 64
      %v1154 = vpop.permute.xlu0 %1153
      %1155 = vrot.lane.b32.xlu0 %v993, 64
      %v1156 = vpop.permute.xlu0 %1155
      %1157 = vrot.lane.b32.xlu0 %v994, 64
      %v1158 = vpop.permute.xlu0 %1157
      %1159 = vrot.lane.b32.xlu0 %v995, 64
      %v1160 = vpop.permute.xlu0 %1159
      %1161 = vrot.lane.b32.xlu0 %v996, 64
      %v1162 = vpop.permute.xlu0 %1161
      %1163 = vrot.lane.b32.xlu0 %v997, 64
      %v1164 = vpop.permute.xlu0 %1163
      %1165 = vrot.lane.b32.xlu0 %v998, 64
      %v1166 = vpop.permute.xlu0 %1165
      %1167 = vrot.lane.b32.xlu0 %v999, 64
      %v1168 = vpop.permute.xlu0 %1167
      %1169 = vrot.lane.b32.xlu0 %v1000, 64
      %v1170 = vpop.permute.xlu0 %1169
      %1171 = vrot.lane.b32.xlu0 %v1001, 64
      %v1172 = vpop.permute.xlu0 %1171
      %1173 = vrot.lane.b32.xlu0 %v1002, 64
      %v1174 = vpop.permute.xlu0 %1173
      %1175 = vrot.lane.b32.xlu0 %v1003, 64
      %v1176 = vpop.permute.xlu0 %1175
      %1177 = vrot.lane.b32.xlu0 %v1004, 64
      %v1178 = vpop.permute.xlu0 %1177
      %1179 = vrot.lane.b32.xlu0 %v1005, 64
      %v1180 = vpop.permute.xlu0 %1179
      %1181 = vrot.lane.b32.xlu0 %v1006, 64
      %v1182 = vpop.permute.xlu0 %1181
      %1183 = vrot.lane.b32.xlu0 %v1007, 64
      %v1184 = vpop.permute.xlu0 %1183
      %1185 = vrot.lane.b32.xlu0 %v1008, 64
      %v1186 = vpop.permute.xlu0 %1185
      %1187 = vrot.lane.b32.xlu0 %v1009, 64
      %v1188 = vpop.permute.xlu0 %1187
      %1189 = vrot.lane.b32.xlu0 %v1010, 64
      %v1190 = vpop.permute.xlu0 %1189
      %1191 = vrot.lane.b32.xlu0 %v1011, 64
      %v1192 = vpop.permute.xlu0 %1191
      %1193 = vrot.lane.b32.xlu0 %v1012, 64
      %v1194 = vpop.permute.xlu0 %1193
      %1195 = vrot.lane.b32.xlu0 %v1013, 64
      %v1196 = vpop.permute.xlu0 %1195
      %1197 = vrot.lane.b32.xlu0 %v1014, 64
      %v1198 = vpop.permute.xlu0 %1197
      %1199 = vrot.lane.b32.xlu0 %v1015, 64
      %v1200 = vpop.permute.xlu0 %1199
      %1201 = vrot.lane.b32.xlu0 %v1016, 64
      %v1202 = vpop.permute.xlu0 %1201
      %1203 = vrot.lane.b32.xlu0 %v1017, 64
      %v1204 = vpop.permute.xlu0 %1203
      %1205 = vrot.lane.b32.xlu0 %v1018, 64
      %v1206 = vpop.permute.xlu0 %1205
      %1207 = vrot.lane.b32.xlu0 %v1019, 64
      %v1208 = vpop.permute.xlu0 %1207
      %1209 = vrot.lane.b32.xlu0 %v1020, 64
      %v1210 = vpop.permute.xlu0 %1209
      %1211 = vrot.lane.b32.xlu0 %v1021, 64
      %v1212 = vpop.permute.xlu0 %1211
      %1213 = vrot.lane.b32.xlu0 %v1022, 64
      %v1214 = vpop.permute.xlu0 %1213
      %vm1279 = vcmask 785920
      %1280 = vst.msk [vmem:[#allocation2] sm:$0xff] %vm1279, %v1088
      %1281 = vst.msk [vmem:[#allocation2 + $0x18] sm:$0xff] %vm1279, %v1090
      %1282 = vst.msk [vmem:[#allocation2 + $0x30] sm:$0xff] %vm1279, %v1092
      %1283 = vst.msk [vmem:[#allocation2 + $0x48] sm:$0xff] %vm1279, %v1094
      %1284 = vst.msk [vmem:[#allocation2 + $0x60] sm:$0xff] %vm1279, %v1096
      %1285 = vst.msk [vmem:[#allocation2 + $0x78] sm:$0xff] %vm1279, %v1098
      %1286 = vst.msk [vmem:[#allocation2 + $0x90] sm:$0xff] %vm1279, %v1100
      %1287 = vst.msk [vmem:[#allocation2 + $0xa8] sm:$0xff] %vm1279, %v1102
      %1288 = vst.msk [vmem:[#allocation2 + $0xc0] sm:$0xff] %vm1279, %v1104
      %1289 = vst.msk [vmem:[#allocation2 + $0xd8] sm:$0xff] %vm1279, %v1106
      %1290 = vst.msk [vmem:[#allocation2 + $0xf0] sm:$0xff] %vm1279, %v1108
      %1291 = vst.msk [vmem:[#allocation2 + $0x108] sm:$0xff] %vm1279, %v1110
      %1292 = vst.msk [vmem:[#allocation2 + $0x120] sm:$0xff] %vm1279, %v1112
      %1293 = vst.msk [vmem:[#allocation2 + $0x138] sm:$0xff] %vm1279, %v1114
      %1294 = vst.msk [vmem:[#allocation2 + $0x150] sm:$0xff] %vm1279, %v1116
      %1295 = vst.msk [vmem:[#allocation2 + $0x168] sm:$0xff] %vm1279, %v1118
      %1296 = vst.msk [vmem:[#allocation2 + $0x180] sm:$0xff] %vm1279, %v1120
      %1297 = vst.msk [vmem:[#allocation2 + $0x198] sm:$0xff] %vm1279, %v1122
      %1298 = vst.msk [vmem:[#allocation2 + $0x1b0] sm:$0xff] %vm1279, %v1124
      %1299 = vst.msk [vmem:[#allocation2 + $0x1c8] sm:$0xff] %vm1279, %v1126
      %1300 = vst.msk [vmem:[#allocation2 + $0x1e0] sm:$0xff] %vm1279, %v1128
      %1301 = vst.msk [vmem:[#allocation2 + $0x1f8] sm:$0xff] %vm1279, %v1130
      %1302 = vst.msk [vmem:[#allocation2 + $0x210] sm:$0xff] %vm1279, %v1132
      %1303 = vst.msk [vmem:[#allocation2 + $0x228] sm:$0xff] %vm1279, %v1134
      %1304 = vst.msk [vmem:[#allocation2 + $0x240] sm:$0xff] %vm1279, %v1136
      %1305 = vst.msk [vmem:[#allocation2 + $0x258] sm:$0xff] %vm1279, %v1138
      %1306 = vst.msk [vmem:[#allocation2 + $0x270] sm:$0xff] %vm1279, %v1140
      %1307 = vst.msk [vmem:[#allocation2 + $0x288] sm:$0xff] %vm1279, %v1142
      %1308 = vst.msk [vmem:[#allocation2 + $0x2a0] sm:$0xff] %vm1279, %v1144
      %1309 = vst.msk [vmem:[#allocation2 + $0x2b8] sm:$0xff] %vm1279, %v1146
      %1310 = vst.msk [vmem:[#allocation2 + $0x2d0] sm:$0xff] %vm1279, %v1148
      %1311 = vst.msk [vmem:[#allocation2 + $0x2e8] sm:$0xff] %vm1279, %v1150
      %1312 = vst.msk [vmem:[#allocation2 + $0x300] sm:$0xff] %vm1279, %v1152
      %1313 = vst.msk [vmem:[#allocation2 + $0x318] sm:$0xff] %vm1279, %v1154
      %1314 = vst.msk [vmem:[#allocation2 + $0x330] sm:$0xff] %vm1279, %v1156
      %1315 = vst.msk [vmem:[#allocation2 + $0x348] sm:$0xff] %vm1279, %v1158
      %1316 = vst.msk [vmem:[#allocation2 + $0x360] sm:$0xff] %vm1279, %v1160
      %1317 = vst.msk [vmem:[#allocation2 + $0x378] sm:$0xff] %vm1279, %v1162
      %1318 = vst.msk [vmem:[#allocation2 + $0x390] sm:$0xff] %vm1279, %v1164
      %1319 = vst.msk [vmem:[#allocation2 + $0x3a8] sm:$0xff] %vm1279, %v1166
      %1320 = vst.msk [vmem:[#allocation2 + $0x3c0] sm:$0xff] %vm1279, %v1168
      %1321 = vst.msk [vmem:[#allocation2 + $0x3d8] sm:$0xff] %vm1279, %v1170
      %1322 = vst.msk [vmem:[#allocation2 + $0x3f0] sm:$0xff] %vm1279, %v1172
      %1323 = vst.msk [vmem:[#allocation2 + $0x408] sm:$0xff] %vm1279, %v1174
      %1324 = vst.msk [vmem:[#allocation2 + $0x420] sm:$0xff] %vm1279, %v1176
      %1325 = vst.msk [vmem:[#allocation2 + $0x438] sm:$0xff] %vm1279, %v1178
      %1326 = vst.msk [vmem:[#allocation2 + $0x450] sm:$0xff] %vm1279, %v1180
      %1327 = vst.msk [vmem:[#allocation2 + $0x468] sm:$0xff] %vm1279, %v1182
      %1328 = vst.msk [vmem:[#allocation2 + $0x480] sm:$0xff] %vm1279, %v1184
      %1329 = vst.msk [vmem:[#allocation2 + $0x498] sm:$0xff] %vm1279, %v1186
      %1330 = vst.msk [vmem:[#allocation2 + $0x4b0] sm:$0xff] %vm1279, %v1188
      %1331 = vst.msk [vmem:[#allocation2 + $0x4c8] sm:$0xff] %vm1279, %v1190
      %1332 = vst.msk [vmem:[#allocation2 + $0x4e0] sm:$0xff] %vm1279, %v1192
      %1333 = vst.msk [vmem:[#allocation2 + $0x4f8] sm:$0xff] %vm1279, %v1194
      %1334 = vst.msk [vmem:[#allocation2 + $0x510] sm:$0xff] %vm1279, %v1196
      %1335 = vst.msk [vmem:[#allocation2 + $0x528] sm:$0xff] %vm1279, %v1198
      %1336 = vst.msk [vmem:[#allocation2 + $0x540] sm:$0xff] %vm1279, %v1200
      %1337 = vst.msk [vmem:[#allocation2 + $0x558] sm:$0xff] %vm1279, %v1202
      %1338 = vst.msk [vmem:[#allocation2 + $0x570] sm:$0xff] %vm1279, %v1204
      %1339 = vst.msk [vmem:[#allocation2 + $0x588] sm:$0xff] %vm1279, %v1206
      %1340 = vst.msk [vmem:[#allocation2 + $0x5a0] sm:$0xff] %vm1279, %v1208
      %1341 = vst.msk [vmem:[#allocation2 + $0x5b8] sm:$0xff] %vm1279, %v1210
      %1342 = vst.msk [vmem:[#allocation2 + $0x5d0] sm:$0xff] %vm1279, %v1212
      %1343 = vst.msk [vmem:[#allocation2 + $0x5e8] sm:$0xff] %vm1279, %v1214
      %s1344 = scalar_lea.vmem [#allocation3], 64
      %v1345 = vld [vmem:[%s1344 + $0x6] sm:$0xff]
      %v1346 = vld [vmem:[%s1344 + $0xe] sm:$0xff]
      %v1347 = vld [vmem:[%s1344 + $0x26] sm:$0xff]
      %v1348 = vld [vmem:[%s1344 + $0x2e] sm:$0xff]
      %v1349 = vld [vmem:[%s1344 + $0x46] sm:$0xff]
      %v1350 = vld [vmem:[%s1344 + $0x4e] sm:$0xff]
      %v1351 = vld [vmem:[%s1344 + $0x66] sm:$0xff]
      %v1352 = vld [vmem:[%s1344 + $0x6e] sm:$0xff]
      %v1353 = vld [vmem:[%s1344 + $0x86] sm:$0xff]
      %v1354 = vld [vmem:[%s1344 + $0x8e] sm:$0xff]
      %v1355 = vld [vmem:[%s1344 + $0xa6] sm:$0xff]
      %v1356 = vld [vmem:[%s1344 + $0xae] sm:$0xff]
      %v1357 = vld [vmem:[%s1344 + $0xc6] sm:$0xff]
      %v1358 = vld [vmem:[%s1344 + $0xce] sm:$0xff]
      %v1359 = vld [vmem:[%s1344 + $0xe6] sm:$0xff]
      %v1360 = vld [vmem:[%s1344 + $0xee] sm:$0xff]
      %v1361 = vld [vmem:[%s1344 + $0x106] sm:$0xff]
      %v1362 = vld [vmem:[%s1344 + $0x10e] sm:$0xff]
      %v1363 = vld [vmem:[%s1344 + $0x126] sm:$0xff]
      %v1364 = vld [vmem:[%s1344 + $0x12e] sm:$0xff]
      %v1365 = vld [vmem:[%s1344 + $0x146] sm:$0xff]
      %v1366 = vld [vmem:[%s1344 + $0x14e] sm:$0xff]
      %v1367 = vld [vmem:[%s1344 + $0x166] sm:$0xff]
      %v1368 = vld [vmem:[%s1344 + $0x16e] sm:$0xff]
      %v1369 = vld [vmem:[%s1344 + $0x186] sm:$0xff]
      %v1370 = vld [vmem:[%s1344 + $0x18e] sm:$0xff]
      %v1371 = vld [vmem:[%s1344 + $0x1a6] sm:$0xff]
      %v1372 = vld [vmem:[%s1344 + $0x1ae] sm:$0xff]
      %v1373 = vld [vmem:[%s1344 + $0x1c6] sm:$0xff]
      %v1374 = vld [vmem:[%s1344 + $0x1ce] sm:$0xff]
      %v1375 = vld [vmem:[%s1344 + $0x1e6] sm:$0xff]
      %v1376 = vld [vmem:[%s1344 + $0x1ee] sm:$0xff]
      %v1377 = vld [vmem:[%s1344 + $0x286] sm:$0xff]
      %v1378 = vld [vmem:[%s1344 + $0x28e] sm:$0xff]
      %v1379 = vld [vmem:[%s1344 + $0x2a6] sm:$0xff]
      %v1380 = vld [vmem:[%s1344 + $0x2ae] sm:$0xff]
      %v1381 = vld [vmem:[%s1344 + $0x2c6] sm:$0xff]
      %v1382 = vld [vmem:[%s1344 + $0x2ce] sm:$0xff]
      %v1383 = vld [vmem:[%s1344 + $0x2e6] sm:$0xff]
      %v1384 = vld [vmem:[%s1344 + $0x2ee] sm:$0xff]
      %v1385 = vld [vmem:[%s1344 + $0x306] sm:$0xff]
      %v1386 = vld [vmem:[%s1344 + $0x30e] sm:$0xff]
      %v1387 = vld [vmem:[%s1344 + $0x326] sm:$0xff]
      %v1388 = vld [vmem:[%s1344 + $0x32e] sm:$0xff]
      %v1389 = vld [vmem:[%s1344 + $0x346] sm:$0xff]
      %v1390 = vld [vmem:[%s1344 + $0x34e] sm:$0xff]
      %v1391 = vld [vmem:[%s1344 + $0x366] sm:$0xff]
      %v1392 = vld [vmem:[%s1344 + $0x36e] sm:$0xff]
      %v1393 = vld [vmem:[%s1344 + $0x386] sm:$0xff]
      %v1394 = vld [vmem:[%s1344 + $0x38e] sm:$0xff]
      %v1395 = vld [vmem:[%s1344 + $0x3a6] sm:$0xff]
      %v1396 = vld [vmem:[%s1344 + $0x3ae] sm:$0xff]
      %v1397 = vld [vmem:[%s1344 + $0x3c6] sm:$0xff]
      %v1398 = vld [vmem:[%s1344 + $0x3ce] sm:$0xff]
      %v1399 = vld [vmem:[%s1344 + $0x3e6] sm:$0xff]
      %v1400 = vld [vmem:[%s1344 + $0x3ee] sm:$0xff]
      %v1401 = vld [vmem:[%s1344 + $0x406] sm:$0xff]
      %v1402 = vld [vmem:[%s1344 + $0x40e] sm:$0xff]
      %v1403 = vld [vmem:[%s1344 + $0x426] sm:$0xff]
      %v1404 = vld [vmem:[%s1344 + $0x42e] sm:$0xff]
      %v1405 = vld [vmem:[%s1344 + $0x446] sm:$0xff]
      %v1406 = vld [vmem:[%s1344 + $0x44e] sm:$0xff]
      %v1407 = vld [vmem:[%s1344 + $0x466] sm:$0xff]
      %v1408 = vld [vmem:[%s1344 + $0x46e] sm:$0xff]
      %1473 = vrot.lane.b32.xlu0 %v1345, 96
      %v1474 = vpop.permute.xlu0 %1473
      %1475 = vrot.lane.b32.xlu0 %v1346, 96
      %v1476 = vpop.permute.xlu0 %1475
      %1477 = vrot.lane.b32.xlu0 %v1347, 96
      %v1478 = vpop.permute.xlu0 %1477
      %1479 = vrot.lane.b32.xlu0 %v1348, 96
      %v1480 = vpop.permute.xlu0 %1479
      %1481 = vrot.lane.b32.xlu0 %v1349, 96
      %v1482 = vpop.permute.xlu0 %1481
      %1483 = vrot.lane.b32.xlu0 %v1350, 96
      %v1484 = vpop.permute.xlu0 %1483
      %1485 = vrot.lane.b32.xlu0 %v1351, 96
      %v1486 = vpop.permute.xlu0 %1485
      %1487 = vrot.lane.b32.xlu0 %v1352, 96
      %v1488 = vpop.permute.xlu0 %1487
      %1489 = vrot.lane.b32.xlu0 %v1353, 96
      %v1490 = vpop.permute.xlu0 %1489
      %1491 = vrot.lane.b32.xlu0 %v1354, 96
      %v1492 = vpop.permute.xlu0 %1491
      %1493 = vrot.lane.b32.xlu0 %v1355, 96
      %v1494 = vpop.permute.xlu0 %1493
      %1495 = vrot.lane.b32.xlu0 %v1356, 96
      %v1496 = vpop.permute.xlu0 %1495
      %1497 = vrot.lane.b32.xlu0 %v1357, 96
      %v1498 = vpop.permute.xlu0 %1497
      %1499 = vrot.lane.b32.xlu0 %v1358, 96
      %v1500 = vpop.permute.xlu0 %1499
      %1501 = vrot.lane.b32.xlu0 %v1359, 96
      %v1502 = vpop.permute.xlu0 %1501
      %1503 = vrot.lane.b32.xlu0 %v1360, 96
      %v1504 = vpop.permute.xlu0 %1503
      %1505 = vrot.lane.b32.xlu0 %v1361, 96
      %v1506 = vpop.permute.xlu0 %1505
      %1507 = vrot.lane.b32.xlu0 %v1362, 96
      %v1508 = vpop.permute.xlu0 %1507
      %1509 = vrot.lane.b32.xlu0 %v1363, 96
      %v1510 = vpop.permute.xlu0 %1509
      %1511 = vrot.lane.b32.xlu0 %v1364, 96
      %v1512 = vpop.permute.xlu0 %1511
      %1513 = vrot.lane.b32.xlu0 %v1365, 96
      %v1514 = vpop.permute.xlu0 %1513
      %1515 = vrot.lane.b32.xlu0 %v1366, 96
      %v1516 = vpop.permute.xlu0 %1515
      %1517 = vrot.lane.b32.xlu0 %v1367, 96
      %v1518 = vpop.permute.xlu0 %1517
      %1519 = vrot.lane.b32.xlu0 %v1368, 96
      %v1520 = vpop.permute.xlu0 %1519
      %1521 = vrot.lane.b32.xlu0 %v1369, 96
      %v1522 = vpop.permute.xlu0 %1521
      %1523 = vrot.lane.b32.xlu0 %v1370, 96
      %v1524 = vpop.permute.xlu0 %1523
      %1525 = vrot.lane.b32.xlu0 %v1371, 96
      %v1526 = vpop.permute.xlu0 %1525
      %1527 = vrot.lane.b32.xlu0 %v1372, 96
      %v1528 = vpop.permute.xlu0 %1527
      %1529 = vrot.lane.b32.xlu0 %v1373, 96
      %v1530 = vpop.permute.xlu0 %1529
      %1531 = vrot.lane.b32.xlu0 %v1374, 96
      %v1532 = vpop.permute.xlu0 %1531
      %1533 = vrot.lane.b32.xlu0 %v1375, 96
      %v1534 = vpop.permute.xlu0 %1533
      %1535 = vrot.lane.b32.xlu0 %v1376, 96
      %v1536 = vpop.permute.xlu0 %1535
      %1537 = vrot.lane.b32.xlu0 %v1377, 96
      %v1538 = vpop.permute.xlu0 %1537
      %1539 = vrot.lane.b32.xlu0 %v1378, 96
      %v1540 = vpop.permute.xlu0 %1539
      %1541 = vrot.lane.b32.xlu0 %v1379, 96
      %v1542 = vpop.permute.xlu0 %1541
      %1543 = vrot.lane.b32.xlu0 %v1380, 96
      %v1544 = vpop.permute.xlu0 %1543
      %1545 = vrot.lane.b32.xlu0 %v1381, 96
      %v1546 = vpop.permute.xlu0 %1545
      %1547 = vrot.lane.b32.xlu0 %v1382, 96
      %v1548 = vpop.permute.xlu0 %1547
      %1549 = vrot.lane.b32.xlu0 %v1383, 96
      %v1550 = vpop.permute.xlu0 %1549
      %1551 = vrot.lane.b32.xlu0 %v1384, 96
      %v1552 = vpop.permute.xlu0 %1551
      %1553 = vrot.lane.b32.xlu0 %v1385, 96
      %v1554 = vpop.permute.xlu0 %1553
      %1555 = vrot.lane.b32.xlu0 %v1386, 96
      %v1556 = vpop.permute.xlu0 %1555
      %1557 = vrot.lane.b32.xlu0 %v1387, 96
      %v1558 = vpop.permute.xlu0 %1557
      %1559 = vrot.lane.b32.xlu0 %v1388, 96
      %v1560 = vpop.permute.xlu0 %1559
      %1561 = vrot.lane.b32.xlu0 %v1389, 96
      %v1562 = vpop.permute.xlu0 %1561
      %1563 = vrot.lane.b32.xlu0 %v1390, 96
      %v1564 = vpop.permute.xlu0 %1563
      %1565 = vrot.lane.b32.xlu0 %v1391, 96
      %v1566 = vpop.permute.xlu0 %1565
      %1567 = vrot.lane.b32.xlu0 %v1392, 96
      %v1568 = vpop.permute.xlu0 %1567
      %1569 = vrot.lane.b32.xlu0 %v1393, 96
      %v1570 = vpop.permute.xlu0 %1569
      %1571 = vrot.lane.b32.xlu0 %v1394, 96
      %v1572 = vpop.permute.xlu0 %1571
      %1573 = vrot.lane.b32.xlu0 %v1395, 96
      %v1574 = vpop.permute.xlu0 %1573
      %1575 = vrot.lane.b32.xlu0 %v1396, 96
      %v1576 = vpop.permute.xlu0 %1575
      %1577 = vrot.lane.b32.xlu0 %v1397, 96
      %v1578 = vpop.permute.xlu0 %1577
      %1579 = vrot.lane.b32.xlu0 %v1398, 96
      %v1580 = vpop.permute.xlu0 %1579
      %1581 = vrot.lane.b32.xlu0 %v1399, 96
      %v1582 = vpop.permute.xlu0 %1581
      %1583 = vrot.lane.b32.xlu0 %v1400, 96
      %v1584 = vpop.permute.xlu0 %1583
      %1585 = vrot.lane.b32.xlu0 %v1401, 96
      %v1586 = vpop.permute.xlu0 %1585
      %1587 = vrot.lane.b32.xlu0 %v1402, 96
      %v1588 = vpop.permute.xlu0 %1587
      %1589 = vrot.lane.b32.xlu0 %v1403, 96
      %v1590 = vpop.permute.xlu0 %1589
      %1591 = vrot.lane.b32.xlu0 %v1404, 96
      %v1592 = vpop.permute.xlu0 %1591
      %1593 = vrot.lane.b32.xlu0 %v1405, 96
      %v1594 = vpop.permute.xlu0 %1593
      %1595 = vrot.lane.b32.xlu0 %v1406, 96
      %v1596 = vpop.permute.xlu0 %1595
      %1597 = vrot.lane.b32.xlu0 %v1407, 96
      %v1598 = vpop.permute.xlu0 %1597
      %1599 = vrot.lane.b32.xlu0 %v1408, 96
      %v1600 = vpop.permute.xlu0 %1599
      %vm1665 = vcmask 1048320
      %1666 = vst.msk [vmem:[#allocation2] sm:$0xff] %vm1665, %v1474
      %1667 = vst.msk [vmem:[#allocation2 + $0x18] sm:$0xff] %vm1665, %v1476
      %1668 = vst.msk [vmem:[#allocation2 + $0x30] sm:$0xff] %vm1665, %v1478
      %1669 = vst.msk [vmem:[#allocation2 + $0x48] sm:$0xff] %vm1665, %v1480
      %1670 = vst.msk [vmem:[#allocation2 + $0x60] sm:$0xff] %vm1665, %v1482
      %1671 = vst.msk [vmem:[#allocation2 + $0x78] sm:$0xff] %vm1665, %v1484
      %1672 = vst.msk [vmem:[#allocation2 + $0x90] sm:$0xff] %vm1665, %v1486
      %1673 = vst.msk [vmem:[#allocation2 + $0xa8] sm:$0xff] %vm1665, %v1488
      %1674 = vst.msk [vmem:[#allocation2 + $0xc0] sm:$0xff] %vm1665, %v1490
      %1675 = vst.msk [vmem:[#allocation2 + $0xd8] sm:$0xff] %vm1665, %v1492
      %1676 = vst.msk [vmem:[#allocation2 + $0xf0] sm:$0xff] %vm1665, %v1494
      %1677 = vst.msk [vmem:[#allocation2 + $0x108] sm:$0xff] %vm1665, %v1496
      %1678 = vst.msk [vmem:[#allocation2 + $0x120] sm:$0xff] %vm1665, %v1498
      %1679 = vst.msk [vmem:[#allocation2 + $0x138] sm:$0xff] %vm1665, %v1500
      %1680 = vst.msk [vmem:[#allocation2 + $0x150] sm:$0xff] %vm1665, %v1502
      %1681 = vst.msk [vmem:[#allocation2 + $0x168] sm:$0xff] %vm1665, %v1504
      %1682 = vst.msk [vmem:[#allocation2 + $0x180] sm:$0xff] %vm1665, %v1506
      %1683 = vst.msk [vmem:[#allocation2 + $0x198] sm:$0xff] %vm1665, %v1508
      %1684 = vst.msk [vmem:[#allocation2 + $0x1b0] sm:$0xff] %vm1665, %v1510
      %1685 = vst.msk [vmem:[#allocation2 + $0x1c8] sm:$0xff] %vm1665, %v1512
      %1686 = vst.msk [vmem:[#allocation2 + $0x1e0] sm:$0xff] %vm1665, %v1514
      %1687 = vst.msk [vmem:[#allocation2 + $0x1f8] sm:$0xff] %vm1665, %v1516
      %1688 = vst.msk [vmem:[#allocation2 + $0x210] sm:$0xff] %vm1665, %v1518
      %1689 = vst.msk [vmem:[#allocation2 + $0x228] sm:$0xff] %vm1665, %v1520
      %1690 = vst.msk [vmem:[#allocation2 + $0x240] sm:$0xff] %vm1665, %v1522
      %1691 = vst.msk [vmem:[#allocation2 + $0x258] sm:$0xff] %vm1665, %v1524
      %1692 = vst.msk [vmem:[#allocation2 + $0x270] sm:$0xff] %vm1665, %v1526
      %1693 = vst.msk [vmem:[#allocation2 + $0x288] sm:$0xff] %vm1665, %v1528
      %1694 = vst.msk [vmem:[#allocation2 + $0x2a0] sm:$0xff] %vm1665, %v1530
      %1695 = vst.msk [vmem:[#allocation2 + $0x2b8] sm:$0xff] %vm1665, %v1532
      %1696 = vst.msk [vmem:[#allocation2 + $0x2d0] sm:$0xff] %vm1665, %v1534
      %1697 = vst.msk [vmem:[#allocation2 + $0x2e8] sm:$0xff] %vm1665, %v1536
      %1698 = vst.msk [vmem:[#allocation2 + $0x300] sm:$0xff] %vm1665, %v1538
      %1699 = vst.msk [vmem:[#allocation2 + $0x318] sm:$0xff] %vm1665, %v1540
      %1700 = vst.msk [vmem:[#allocation2 + $0x330] sm:$0xff] %vm1665, %v1542
      %1701 = vst.msk [vmem:[#allocation2 + $0x348] sm:$0xff] %vm1665, %v1544
      %1702 = vst.msk [vmem:[#allocation2 + $0x360] sm:$0xff] %vm1665, %v1546
      %1703 = vst.msk [vmem:[#allocation2 + $0x378] sm:$0xff] %vm1665, %v1548
      %1704 = vst.msk [vmem:[#allocation2 + $0x390] sm:$0xff] %vm1665, %v1550
      %1705 = vst.msk [vmem:[#allocation2 + $0x3a8] sm:$0xff] %vm1665, %v1552
      %1706 = vst.msk [vmem:[#allocation2 + $0x3c0] sm:$0xff] %vm1665, %v1554
      %1707 = vst.msk [vmem:[#allocation2 + $0x3d8] sm:$0xff] %vm1665, %v1556
      %1708 = vst.msk [vmem:[#allocation2 + $0x3f0] sm:$0xff] %vm1665, %v1558
      %1709 = vst.msk [vmem:[#allocation2 + $0x408] sm:$0xff] %vm1665, %v1560
      %1710 = vst.msk [vmem:[#allocation2 + $0x420] sm:$0xff] %vm1665, %v1562
      %1711 = vst.msk [vmem:[#allocation2 + $0x438] sm:$0xff] %vm1665, %v1564
      %1712 = vst.msk [vmem:[#allocation2 + $0x450] sm:$0xff] %vm1665, %v1566
      %1713 = vst.msk [vmem:[#allocation2 + $0x468] sm:$0xff] %vm1665, %v1568
      %1714 = vst.msk [vmem:[#allocation2 + $0x480] sm:$0xff] %vm1665, %v1570
      %1715 = vst.msk [vmem:[#allocation2 + $0x498] sm:$0xff] %vm1665, %v1572
      %1716 = vst.msk [vmem:[#allocation2 + $0x4b0] sm:$0xff] %vm1665, %v1574
      %1717 = vst.msk [vmem:[#allocation2 + $0x4c8] sm:$0xff] %vm1665, %v1576
      %1718 = vst.msk [vmem:[#allocation2 + $0x4e0] sm:$0xff] %vm1665, %v1578
      %1719 = vst.msk [vmem:[#allocation2 + $0x4f8] sm:$0xff] %vm1665, %v1580
      %1720 = vst.msk [vmem:[#allocation2 + $0x510] sm:$0xff] %vm1665, %v1582
      %1721 = vst.msk [vmem:[#allocation2 + $0x528] sm:$0xff] %vm1665, %v1584
      %1722 = vst.msk [vmem:[#allocation2 + $0x540] sm:$0xff] %vm1665, %v1586
      %1723 = vst.msk [vmem:[#allocation2 + $0x558] sm:$0xff] %vm1665, %v1588
      %1724 = vst.msk [vmem:[#allocation2 + $0x570] sm:$0xff] %vm1665, %v1590
      %1725 = vst.msk [vmem:[#allocation2 + $0x588] sm:$0xff] %vm1665, %v1592
      %1726 = vst.msk [vmem:[#allocation2 + $0x5a0] sm:$0xff] %vm1665, %v1594
      %1727 = vst.msk [vmem:[#allocation2 + $0x5b8] sm:$0xff] %vm1665, %v1596
      %1728 = vst.msk [vmem:[#allocation2 + $0x5d0] sm:$0xff] %vm1665, %v1598
      %1729 = vst.msk [vmem:[#allocation2 + $0x5e8] sm:$0xff] %vm1665, %v1600
      %v1730 = vld [vmem:[%s1344 + $0x8] sm:$0xff]
      %v1731 = vld [vmem:[%s1344 + $0x10] sm:$0xff]
      %v1732 = vld [vmem:[%s1344 + $0x28] sm:$0xff]
      %v1733 = vld [vmem:[%s1344 + $0x30] sm:$0xff]
      %v1734 = vld [vmem:[%s1344 + $0x48] sm:$0xff]
      %v1735 = vld [vmem:[%s1344 + $0x50] sm:$0xff]
      %v1736 = vld [vmem:[%s1344 + $0x68] sm:$0xff]
      %v1737 = vld [vmem:[%s1344 + $0x70] sm:$0xff]
      %v1738 = vld [vmem:[%s1344 + $0x88] sm:$0xff]
      %v1739 = vld [vmem:[%s1344 + $0x90] sm:$0xff]
      %v1740 = vld [vmem:[%s1344 + $0xa8] sm:$0xff]
      %v1741 = vld [vmem:[%s1344 + $0xb0] sm:$0xff]
      %v1742 = vld [vmem:[%s1344 + $0xc8] sm:$0xff]
      %v1743 = vld [vmem:[%s1344 + $0xd0] sm:$0xff]
      %v1744 = vld [vmem:[%s1344 + $0xe8] sm:$0xff]
      %v1745 = vld [vmem:[%s1344 + $0xf0] sm:$0xff]
      %v1746 = vld [vmem:[%s1344 + $0x108] sm:$0xff]
      %v1747 = vld [vmem:[%s1344 + $0x110] sm:$0xff]
      %v1748 = vld [vmem:[%s1344 + $0x128] sm:$0xff]
      %v1749 = vld [vmem:[%s1344 + $0x130] sm:$0xff]
      %v1750 = vld [vmem:[%s1344 + $0x148] sm:$0xff]
      %v1751 = vld [vmem:[%s1344 + $0x150] sm:$0xff]
      %v1752 = vld [vmem:[%s1344 + $0x168] sm:$0xff]
      %v1753 = vld [vmem:[%s1344 + $0x170] sm:$0xff]
      %v1754 = vld [vmem:[%s1344 + $0x188] sm:$0xff]
      %v1755 = vld [vmem:[%s1344 + $0x190] sm:$0xff]
      %v1756 = vld [vmem:[%s1344 + $0x1a8] sm:$0xff]
      %v1757 = vld [vmem:[%s1344 + $0x1b0] sm:$0xff]
      %v1758 = vld [vmem:[%s1344 + $0x1c8] sm:$0xff]
      %v1759 = vld [vmem:[%s1344 + $0x1d0] sm:$0xff]
      %v1760 = vld [vmem:[%s1344 + $0x1e8] sm:$0xff]
      %v1761 = vld [vmem:[%s1344 + $0x1f0] sm:$0xff]
      %v1762 = vld [vmem:[%s1344 + $0x288] sm:$0xff]
      %v1763 = vld [vmem:[%s1344 + $0x290] sm:$0xff]
      %v1764 = vld [vmem:[%s1344 + $0x2a8] sm:$0xff]
      %v1765 = vld [vmem:[%s1344 + $0x2b0] sm:$0xff]
      %v1766 = vld [vmem:[%s1344 + $0x2c8] sm:$0xff]
      %v1767 = vld [vmem:[%s1344 + $0x2d0] sm:$0xff]
      %v1768 = vld [vmem:[%s1344 + $0x2e8] sm:$0xff]
      %v1769 = vld [vmem:[%s1344 + $0x2f0] sm:$0xff]
      %v1770 = vld [vmem:[%s1344 + $0x308] sm:$0xff]
      %v1771 = vld [vmem:[%s1344 + $0x310] sm:$0xff]
      %v1772 = vld [vmem:[%s1344 + $0x328] sm:$0xff]
      %v1773 = vld [vmem:[%s1344 + $0x330] sm:$0xff]
      %v1774 = vld [vmem:[%s1344 + $0x348] sm:$0xff]
      %v1775 = vld [vmem:[%s1344 + $0x350] sm:$0xff]
      %v1776 = vld [vmem:[%s1344 + $0x368] sm:$0xff]
      %v1777 = vld [vmem:[%s1344 + $0x370] sm:$0xff]
      %v1778 = vld [vmem:[%s1344 + $0x388] sm:$0xff]
      %v1779 = vld [vmem:[%s1344 + $0x390] sm:$0xff]
      %v1780 = vld [vmem:[%s1344 + $0x3a8] sm:$0xff]
      %v1781 = vld [vmem:[%s1344 + $0x3b0] sm:$0xff]
      %v1782 = vld [vmem:[%s1344 + $0x3c8] sm:$0xff]
      %v1783 = vld [vmem:[%s1344 + $0x3d0] sm:$0xff]
      %v1784 = vld [vmem:[%s1344 + $0x3e8] sm:$0xff]
      %v1785 = vld [vmem:[%s1344 + $0x3f0] sm:$0xff]
      %v1786 = vld [vmem:[%s1344 + $0x408] sm:$0xff]
      %v1787 = vld [vmem:[%s1344 + $0x410] sm:$0xff]
      %v1788 = vld [vmem:[%s1344 + $0x428] sm:$0xff]
      %v1789 = vld [vmem:[%s1344 + $0x430] sm:$0xff]
      %v1790 = vld [vmem:[%s1344 + $0x448] sm:$0xff]
      %v1791 = vld [vmem:[%s1344 + $0x450] sm:$0xff]
      %v1792 = vld [vmem:[%s1344 + $0x468] sm:$0xff]
      %v1793 = vld [vmem:[%s1344 + $0x470] sm:$0xff]
      %1794 = vst.msk [vmem:[#allocation2 + $0x8] sm:$0xff] %vm509, %v1730
      %1795 = vst.msk [vmem:[#allocation2 + $0x20] sm:$0xff] %vm509, %v1731
      %1796 = vst.msk [vmem:[#allocation2 + $0x38] sm:$0xff] %vm509, %v1732
      %1797 = vst.msk [vmem:[#allocation2 + $0x50] sm:$0xff] %vm509, %v1733
      %1798 = vst.msk [vmem:[#allocation2 + $0x68] sm:$0xff] %vm509, %v1734
      %1799 = vst.msk [vmem:[#allocation2 + $0x80] sm:$0xff] %vm509, %v1735
      %1800 = vst.msk [vmem:[#allocation2 + $0x98] sm:$0xff] %vm509, %v1736
      %1801 = vst.msk [vmem:[#allocation2 + $0xb0] sm:$0xff] %vm509, %v1737
      %1802 = vst.msk [vmem:[#allocation2 + $0xc8] sm:$0xff] %vm509, %v1738
      %1803 = vst.msk [vmem:[#allocation2 + $0xe0] sm:$0xff] %vm509, %v1739
      %1804 = vst.msk [vmem:[#allocation2 + $0xf8] sm:$0xff] %vm509, %v1740
      %1805 = vst.msk [vmem:[#allocation2 + $0x110] sm:$0xff] %vm509, %v1741
      %1806 = vst.msk [vmem:[#allocation2 + $0x128] sm:$0xff] %vm509, %v1742
      %1807 = vst.msk [vmem:[#allocation2 + $0x140] sm:$0xff] %vm509, %v1743
      %1808 = vst.msk [vmem:[#allocation2 + $0x158] sm:$0xff] %vm509, %v1744
      %1809 = vst.msk [vmem:[#allocation2 + $0x170] sm:$0xff] %vm509, %v1745
      %1810 = vst.msk [vmem:[#allocation2 + $0x188] sm:$0xff] %vm509, %v1746
      %1811 = vst.msk [vmem:[#allocation2 + $0x1a0] sm:$0xff] %vm509, %v1747
      %1812 = vst.msk [vmem:[#allocation2 + $0x1b8] sm:$0xff] %vm509, %v1748
      %1813 = vst.msk [vmem:[#allocation2 + $0x1d0] sm:$0xff] %vm509, %v1749
      %1814 = vst.msk [vmem:[#allocation2 + $0x1e8] sm:$0xff] %vm509, %v1750
      %1815 = vst.msk [vmem:[#allocation2 + $0x200] sm:$0xff] %vm509, %v1751
      %1816 = vst.msk [vmem:[#allocation2 + $0x218] sm:$0xff] %vm509, %v1752
      %1817 = vst.msk [vmem:[#allocation2 + $0x230] sm:$0xff] %vm509, %v1753
      %1818 = vst.msk [vmem:[#allocation2 + $0x248] sm:$0xff] %vm509, %v1754
      %1819 = vst.msk [vmem:[#allocation2 + $0x260] sm:$0xff] %vm509, %v1755
      %1820 = vst.msk [vmem:[#allocation2 + $0x278] sm:$0xff] %vm509, %v1756
      %1821 = vst.msk [vmem:[#allocation2 + $0x290] sm:$0xff] %vm509, %v1757
      %1822 = vst.msk [vmem:[#allocation2 + $0x2a8] sm:$0xff] %vm509, %v1758
      %1823 = vst.msk [vmem:[#allocation2 + $0x2c0] sm:$0xff] %vm509, %v1759
      %1824 = vst.msk [vmem:[#allocation2 + $0x2d8] sm:$0xff] %vm509, %v1760
      %1825 = vst.msk [vmem:[#allocation2 + $0x2f0] sm:$0xff] %vm509, %v1761
      %1826 = vst.msk [vmem:[#allocation2 + $0x308] sm:$0xff] %vm509, %v1762
      %1827 = vst.msk [vmem:[#allocation2 + $0x320] sm:$0xff] %vm509, %v1763
      %1828 = vst.msk [vmem:[#allocation2 + $0x338] sm:$0xff] %vm509, %v1764
      %1829 = vst.msk [vmem:[#allocation2 + $0x350] sm:$0xff] %vm509, %v1765
      %1830 = vst.msk [vmem:[#allocation2 + $0x368] sm:$0xff] %vm509, %v1766
      %1831 = vst.msk [vmem:[#allocation2 + $0x380] sm:$0xff] %vm509, %v1767
      %1832 = vst.msk [vmem:[#allocation2 + $0x398] sm:$0xff] %vm509, %v1768
      %1833 = vst.msk [vmem:[#allocation2 + $0x3b0] sm:$0xff] %vm509, %v1769
      %1834 = vst.msk [vmem:[#allocation2 + $0x3c8] sm:$0xff] %vm509, %v1770
      %1835 = vst.msk [vmem:[#allocation2 + $0x3e0] sm:$0xff] %vm509, %v1771
      %1836 = vst.msk [vmem:[#allocation2 + $0x3f8] sm:$0xff] %vm509, %v1772
      %1837 = vst.msk [vmem:[#allocation2 + $0x410] sm:$0xff] %vm509, %v1773
      %1838 = vst.msk [vmem:[#allocation2 + $0x428] sm:$0xff] %vm509, %v1774
      %1839 = vst.msk [vmem:[#allocation2 + $0x440] sm:$0xff] %vm509, %v1775
      %1840 = vst.msk [vmem:[#allocation2 + $0x458] sm:$0xff] %vm509, %v1776
      %1841 = vst.msk [vmem:[#allocation2 + $0x470] sm:$0xff] %vm509, %v1777
      %1842 = vst.msk [vmem:[#allocation2 + $0x488] sm:$0xff] %vm509, %v1778
      %1843 = vst.msk [vmem:[#allocation2 + $0x4a0] sm:$0xff] %vm509, %v1779
      %1844 = vst.msk [vmem:[#allocation2 + $0x4b8] sm:$0xff] %vm509, %v1780
      %1845 = vst.msk [vmem:[#allocation2 + $0x4d0] sm:$0xff] %vm509, %v1781
      %1846 = vst.msk [vmem:[#allocation2 + $0x4e8] sm:$0xff] %vm509, %v1782
      %1847 = vst.msk [vmem:[#allocation2 + $0x500] sm:$0xff] %vm509, %v1783
      %1848 = vst.msk [vmem:[#allocation2 + $0x518] sm:$0xff] %vm509, %v1784
      %1849 = vst.msk [vmem:[#allocation2 + $0x530] sm:$0xff] %vm509, %v1785
      %1850 = vst.msk [vmem:[#allocation2 + $0x548] sm:$0xff] %vm509, %v1786
      %1851 = vst.msk [vmem:[#allocation2 + $0x560] sm:$0xff] %vm509, %v1787
      %1852 = vst.msk [vmem:[#allocation2 + $0x578] sm:$0xff] %vm509, %v1788
      %1853 = vst.msk [vmem:[#allocation2 + $0x590] sm:$0xff] %vm509, %v1789
      %1854 = vst.msk [vmem:[#allocation2 + $0x5a8] sm:$0xff] %vm509, %v1790
      %1855 = vst.msk [vmem:[#allocation2 + $0x5c0] sm:$0xff] %vm509, %v1791
      %1856 = vst.msk [vmem:[#allocation2 + $0x5d8] sm:$0xff] %vm509, %v1792
      %1857 = vst.msk [vmem:[#allocation2 + $0x5f0] sm:$0xff] %vm509, %v1793
      %v1858 = vld [vmem:[%s1344 + $0xa] sm:$0xff]
      %v1859 = vld [vmem:[%s1344 + $0x12] sm:$0xff]
      %v1860 = vld [vmem:[%s1344 + $0x2a] sm:$0xff]
      %v1861 = vld [vmem:[%s1344 + $0x32] sm:$0xff]
      %v1862 = vld [vmem:[%s1344 + $0x4a] sm:$0xff]
      %v1863 = vld [vmem:[%s1344 + $0x52] sm:$0xff]
      %v1864 = vld [vmem:[%s1344 + $0x6a] sm:$0xff]
      %v1865 = vld [vmem:[%s1344 + $0x72] sm:$0xff]
      %v1866 = vld [vmem:[%s1344 + $0x8a] sm:$0xff]
      %v1867 = vld [vmem:[%s1344 + $0x92] sm:$0xff]
      %v1868 = vld [vmem:[%s1344 + $0xaa] sm:$0xff]
      %v1869 = vld [vmem:[%s1344 + $0xb2] sm:$0xff]
      %v1870 = vld [vmem:[%s1344 + $0xca] sm:$0xff]
      %v1871 = vld [vmem:[%s1344 + $0xd2] sm:$0xff]
      %v1872 = vld [vmem:[%s1344 + $0xea] sm:$0xff]
      %v1873 = vld [vmem:[%s1344 + $0xf2] sm:$0xff]
      %v1874 = vld [vmem:[%s1344 + $0x10a] sm:$0xff]
      %v1875 = vld [vmem:[%s1344 + $0x112] sm:$0xff]
      %v1876 = vld [vmem:[%s1344 + $0x12a] sm:$0xff]
      %v1877 = vld [vmem:[%s1344 + $0x132] sm:$0xff]
      %v1878 = vld [vmem:[%s1344 + $0x14a] sm:$0xff]
      %v1879 = vld [vmem:[%s1344 + $0x152] sm:$0xff]
      %v1880 = vld [vmem:[%s1344 + $0x16a] sm:$0xff]
      %v1881 = vld [vmem:[%s1344 + $0x172] sm:$0xff]
      %v1882 = vld [vmem:[%s1344 + $0x18a] sm:$0xff]
      %v1883 = vld [vmem:[%s1344 + $0x192] sm:$0xff]
      %v1884 = vld [vmem:[%s1344 + $0x1aa] sm:$0xff]
      %v1885 = vld [vmem:[%s1344 + $0x1b2] sm:$0xff]
      %v1886 = vld [vmem:[%s1344 + $0x1ca] sm:$0xff]
      %v1887 = vld [vmem:[%s1344 + $0x1d2] sm:$0xff]
      %v1888 = vld [vmem:[%s1344 + $0x1ea] sm:$0xff]
      %v1889 = vld [vmem:[%s1344 + $0x1f2] sm:$0xff]
      %v1890 = vld [vmem:[%s1344 + $0x28a] sm:$0xff]
      %v1891 = vld [vmem:[%s1344 + $0x292] sm:$0xff]
      %v1892 = vld [vmem:[%s1344 + $0x2aa] sm:$0xff]
      %v1893 = vld [vmem:[%s1344 + $0x2b2] sm:$0xff]
      %v1894 = vld [vmem:[%s1344 + $0x2ca] sm:$0xff]
      %v1895 = vld [vmem:[%s1344 + $0x2d2] sm:$0xff]
      %v1896 = vld [vmem:[%s1344 + $0x2ea] sm:$0xff]
      %v1897 = vld [vmem:[%s1344 + $0x2f2] sm:$0xff]
      %v1898 = vld [vmem:[%s1344 + $0x30a] sm:$0xff]
      %v1899 = vld [vmem:[%s1344 + $0x312] sm:$0xff]
      %v1900 = vld [vmem:[%s1344 + $0x32a] sm:$0xff]
      %v1901 = vld [vmem:[%s1344 + $0x332] sm:$0xff]
      %v1902 = vld [vmem:[%s1344 + $0x34a] sm:$0xff]
      %v1903 = vld [vmem:[%s1344 + $0x352] sm:$0xff]
      %v1904 = vld [vmem:[%s1344 + $0x36a] sm:$0xff]
      %v1905 = vld [vmem:[%s1344 + $0x372] sm:$0xff]
      %v1906 = vld [vmem:[%s1344 + $0x38a] sm:$0xff]
      %v1907 = vld [vmem:[%s1344 + $0x392] sm:$0xff]
      %v1908 = vld [vmem:[%s1344 + $0x3aa] sm:$0xff]
      %v1909 = vld [vmem:[%s1344 + $0x3b2] sm:$0xff]
      %v1910 = vld [vmem:[%s1344 + $0x3ca] sm:$0xff]
      %v1911 = vld [vmem:[%s1344 + $0x3d2] sm:$0xff]
      %v1912 = vld [vmem:[%s1344 + $0x3ea] sm:$0xff]
      %v1913 = vld [vmem:[%s1344 + $0x3f2] sm:$0xff]
      %v1914 = vld [vmem:[%s1344 + $0x40a] sm:$0xff]
      %v1915 = vld [vmem:[%s1344 + $0x412] sm:$0xff]
      %v1916 = vld [vmem:[%s1344 + $0x42a] sm:$0xff]
      %v1917 = vld [vmem:[%s1344 + $0x432] sm:$0xff]
      %v1918 = vld [vmem:[%s1344 + $0x44a] sm:$0xff]
      %v1919 = vld [vmem:[%s1344 + $0x452] sm:$0xff]
      %v1920 = vld [vmem:[%s1344 + $0x46a] sm:$0xff]
      %v1921 = vld [vmem:[%s1344 + $0x472] sm:$0xff]
      %1986 = vrot.lane.b32.xlu0 %v1858, 32
      %v1987 = vpop.permute.xlu0 %1986
      %1988 = vrot.lane.b32.xlu0 %v1859, 32
      %v1989 = vpop.permute.xlu0 %1988
      %1990 = vrot.lane.b32.xlu0 %v1860, 32
      %v1991 = vpop.permute.xlu0 %1990
      %1992 = vrot.lane.b32.xlu0 %v1861, 32
      %v1993 = vpop.permute.xlu0 %1992
      %1994 = vrot.lane.b32.xlu0 %v1862, 32
      %v1995 = vpop.permute.xlu0 %1994
      %1996 = vrot.lane.b32.xlu0 %v1863, 32
      %v1997 = vpop.permute.xlu0 %1996
      %1998 = vrot.lane.b32.xlu0 %v1864, 32
      %v1999 = vpop.permute.xlu0 %1998
      %2000 = vrot.lane.b32.xlu0 %v1865, 32
      %v2001 = vpop.permute.xlu0 %2000
      %2002 = vrot.lane.b32.xlu0 %v1866, 32
      %v2003 = vpop.permute.xlu0 %2002
      %2004 = vrot.lane.b32.xlu0 %v1867, 32
      %v2005 = vpop.permute.xlu0 %2004
      %2006 = vrot.lane.b32.xlu0 %v1868, 32
      %v2007 = vpop.permute.xlu0 %2006
      %2008 = vrot.lane.b32.xlu0 %v1869, 32
      %v2009 = vpop.permute.xlu0 %2008
      %2010 = vrot.lane.b32.xlu0 %v1870, 32
      %v2011 = vpop.permute.xlu0 %2010
      %2012 = vrot.lane.b32.xlu0 %v1871, 32
      %v2013 = vpop.permute.xlu0 %2012
      %2014 = vrot.lane.b32.xlu0 %v1872, 32
      %v2015 = vpop.permute.xlu0 %2014
      %2016 = vrot.lane.b32.xlu0 %v1873, 32
      %v2017 = vpop.permute.xlu0 %2016
      %2018 = vrot.lane.b32.xlu0 %v1874, 32
      %v2019 = vpop.permute.xlu0 %2018
      %2020 = vrot.lane.b32.xlu0 %v1875, 32
      %v2021 = vpop.permute.xlu0 %2020
      %2022 = vrot.lane.b32.xlu0 %v1876, 32
      %v2023 = vpop.permute.xlu0 %2022
      %2024 = vrot.lane.b32.xlu0 %v1877, 32
      %v2025 = vpop.permute.xlu0 %2024
      %2026 = vrot.lane.b32.xlu0 %v1878, 32
      %v2027 = vpop.permute.xlu0 %2026
      %2028 = vrot.lane.b32.xlu0 %v1879, 32
      %v2029 = vpop.permute.xlu0 %2028
      %2030 = vrot.lane.b32.xlu0 %v1880, 32
      %v2031 = vpop.permute.xlu0 %2030
      %2032 = vrot.lane.b32.xlu0 %v1881, 32
      %v2033 = vpop.permute.xlu0 %2032
      %2034 = vrot.lane.b32.xlu0 %v1882, 32
      %v2035 = vpop.permute.xlu0 %2034
      %2036 = vrot.lane.b32.xlu0 %v1883, 32
      %v2037 = vpop.permute.xlu0 %2036
      %2038 = vrot.lane.b32.xlu0 %v1884, 32
      %v2039 = vpop.permute.xlu0 %2038
      %2040 = vrot.lane.b32.xlu0 %v1885, 32
      %v2041 = vpop.permute.xlu0 %2040
      %2042 = vrot.lane.b32.xlu0 %v1886, 32
      %v2043 = vpop.permute.xlu0 %2042
      %2044 = vrot.lane.b32.xlu0 %v1887, 32
      %v2045 = vpop.permute.xlu0 %2044
      %2046 = vrot.lane.b32.xlu0 %v1888, 32
      %v2047 = vpop.permute.xlu0 %2046
      %2048 = vrot.lane.b32.xlu0 %v1889, 32
      %v2049 = vpop.permute.xlu0 %2048
      %2050 = vrot.lane.b32.xlu0 %v1890, 32
      %v2051 = vpop.permute.xlu0 %2050
      %2052 = vrot.lane.b32.xlu0 %v1891, 32
      %v2053 = vpop.permute.xlu0 %2052
      %2054 = vrot.lane.b32.xlu0 %v1892, 32
      %v2055 = vpop.permute.xlu0 %2054
      %2056 = vrot.lane.b32.xlu0 %v1893, 32
      %v2057 = vpop.permute.xlu0 %2056
      %2058 = vrot.lane.b32.xlu0 %v1894, 32
      %v2059 = vpop.permute.xlu0 %2058
      %2060 = vrot.lane.b32.xlu0 %v1895, 32
      %v2061 = vpop.permute.xlu0 %2060
      %2062 = vrot.lane.b32.xlu0 %v1896, 32
      %v2063 = vpop.permute.xlu0 %2062
      %2064 = vrot.lane.b32.xlu0 %v1897, 32
      %v2065 = vpop.permute.xlu0 %2064
      %2066 = vrot.lane.b32.xlu0 %v1898, 32
      %v2067 = vpop.permute.xlu0 %2066
      %2068 = vrot.lane.b32.xlu0 %v1899, 32
      %v2069 = vpop.permute.xlu0 %2068
      %2070 = vrot.lane.b32.xlu0 %v1900, 32
      %v2071 = vpop.permute.xlu0 %2070
      %2072 = vrot.lane.b32.xlu0 %v1901, 32
      %v2073 = vpop.permute.xlu0 %2072
      %2074 = vrot.lane.b32.xlu0 %v1902, 32
      %v2075 = vpop.permute.xlu0 %2074
      %2076 = vrot.lane.b32.xlu0 %v1903, 32
      %v2077 = vpop.permute.xlu0 %2076
      %2078 = vrot.lane.b32.xlu0 %v1904, 32
      %v2079 = vpop.permute.xlu0 %2078
      %2080 = vrot.lane.b32.xlu0 %v1905, 32
      %v2081 = vpop.permute.xlu0 %2080
      %2082 = vrot.lane.b32.xlu0 %v1906, 32
      %v2083 = vpop.permute.xlu0 %2082
      %2084 = vrot.lane.b32.xlu0 %v1907, 32
      %v2085 = vpop.permute.xlu0 %2084
      %2086 = vrot.lane.b32.xlu0 %v1908, 32
      %v2087 = vpop.permute.xlu0 %2086
      %2088 = vrot.lane.b32.xlu0 %v1909, 32
      %v2089 = vpop.permute.xlu0 %2088
      %2090 = vrot.lane.b32.xlu0 %v1910, 32
      %v2091 = vpop.permute.xlu0 %2090
      %2092 = vrot.lane.b32.xlu0 %v1911, 32
      %v2093 = vpop.permute.xlu0 %2092
      %2094 = vrot.lane.b32.xlu0 %v1912, 32
      %v2095 = vpop.permute.xlu0 %2094
      %2096 = vrot.lane.b32.xlu0 %v1913, 32
      %v2097 = vpop.permute.xlu0 %2096
      %2098 = vrot.lane.b32.xlu0 %v1914, 32
      %v2099 = vpop.permute.xlu0 %2098
      %2100 = vrot.lane.b32.xlu0 %v1915, 32
      %v2101 = vpop.permute.xlu0 %2100
      %2102 = vrot.lane.b32.xlu0 %v1916, 32
      %v2103 = vpop.permute.xlu0 %2102
      %2104 = vrot.lane.b32.xlu0 %v1917, 32
      %v2105 = vpop.permute.xlu0 %2104
      %2106 = vrot.lane.b32.xlu0 %v1918, 32
      %v2107 = vpop.permute.xlu0 %2106
      %2108 = vrot.lane.b32.xlu0 %v1919, 32
      %v2109 = vpop.permute.xlu0 %2108
      %2110 = vrot.lane.b32.xlu0 %v1920, 32
      %v2111 = vpop.permute.xlu0 %2110
      %2112 = vrot.lane.b32.xlu0 %v1921, 32
      %v2113 = vpop.permute.xlu0 %2112
      %2178 = vst.msk [vmem:[#allocation2 + $0x8] sm:$0xff] %vm894, %v1987
      %2179 = vst.msk [vmem:[#allocation2 + $0x20] sm:$0xff] %vm894, %v1989
      %2180 = vst.msk [vmem:[#allocation2 + $0x38] sm:$0xff] %vm894, %v1991
      %2181 = vst.msk [vmem:[#allocation2 + $0x50] sm:$0xff] %vm894, %v1993
      %2182 = vst.msk [vmem:[#allocation2 + $0x68] sm:$0xff] %vm894, %v1995
      %2183 = vst.msk [vmem:[#allocation2 + $0x80] sm:$0xff] %vm894, %v1997
      %2184 = vst.msk [vmem:[#allocation2 + $0x98] sm:$0xff] %vm894, %v1999
      %2185 = vst.msk [vmem:[#allocation2 + $0xb0] sm:$0xff] %vm894, %v2001
      %2186 = vst.msk [vmem:[#allocation2 + $0xc8] sm:$0xff] %vm894, %v2003
      %2187 = vst.msk [vmem:[#allocation2 + $0xe0] sm:$0xff] %vm894, %v2005
      %2188 = vst.msk [vmem:[#allocation2 + $0xf8] sm:$0xff] %vm894, %v2007
      %2189 = vst.msk [vmem:[#allocation2 + $0x110] sm:$0xff] %vm894, %v2009
      %2190 = vst.msk [vmem:[#allocation2 + $0x128] sm:$0xff] %vm894, %v2011
      %2191 = vst.msk [vmem:[#allocation2 + $0x140] sm:$0xff] %vm894, %v2013
      %2192 = vst.msk [vmem:[#allocation2 + $0x158] sm:$0xff] %vm894, %v2015
      %2193 = vst.msk [vmem:[#allocation2 + $0x170] sm:$0xff] %vm894, %v2017
      %2194 = vst.msk [vmem:[#allocation2 + $0x188] sm:$0xff] %vm894, %v2019
      %2195 = vst.msk [vmem:[#allocation2 + $0x1a0] sm:$0xff] %vm894, %v2021
      %2196 = vst.msk [vmem:[#allocation2 + $0x1b8] sm:$0xff] %vm894, %v2023
      %2197 = vst.msk [vmem:[#allocation2 + $0x1d0] sm:$0xff] %vm894, %v2025
      %2198 = vst.msk [vmem:[#allocation2 + $0x1e8] sm:$0xff] %vm894, %v2027
      %2199 = vst.msk [vmem:[#allocation2 + $0x200] sm:$0xff] %vm894, %v2029
      %2200 = vst.msk [vmem:[#allocation2 + $0x218] sm:$0xff] %vm894, %v2031
      %2201 = vst.msk [vmem:[#allocation2 + $0x230] sm:$0xff] %vm894, %v2033
      %2202 = vst.msk [vmem:[#allocation2 + $0x248] sm:$0xff] %vm894, %v2035
      %2203 = vst.msk [vmem:[#allocation2 + $0x260] sm:$0xff] %vm894, %v2037
      %2204 = vst.msk [vmem:[#allocation2 + $0x278] sm:$0xff] %vm894, %v2039
      %2205 = vst.msk [vmem:[#allocation2 + $0x290] sm:$0xff] %vm894, %v2041
      %2206 = vst.msk [vmem:[#allocation2 + $0x2a8] sm:$0xff] %vm894, %v2043
      %2207 = vst.msk [vmem:[#allocation2 + $0x2c0] sm:$0xff] %vm894, %v2045
      %2208 = vst.msk [vmem:[#allocation2 + $0x2d8] sm:$0xff] %vm894, %v2047
      %2209 = vst.msk [vmem:[#allocation2 + $0x2f0] sm:$0xff] %vm894, %v2049
      %2210 = vst.msk [vmem:[#allocation2 + $0x308] sm:$0xff] %vm894, %v2051
      %2211 = vst.msk [vmem:[#allocation2 + $0x320] sm:$0xff] %vm894, %v2053
      %2212 = vst.msk [vmem:[#allocation2 + $0x338] sm:$0xff] %vm894, %v2055
      %2213 = vst.msk [vmem:[#allocation2 + $0x350] sm:$0xff] %vm894, %v2057
      %2214 = vst.msk [vmem:[#allocation2 + $0x368] sm:$0xff] %vm894, %v2059
      %2215 = vst.msk [vmem:[#allocation2 + $0x380] sm:$0xff] %vm894, %v2061
      %2216 = vst.msk [vmem:[#allocation2 + $0x398] sm:$0xff] %vm894, %v2063
      %2217 = vst.msk [vmem:[#allocation2 + $0x3b0] sm:$0xff] %vm894, %v2065
      %2218 = vst.msk [vmem:[#allocation2 + $0x3c8] sm:$0xff] %vm894, %v2067
      %2219 = vst.msk [vmem:[#allocation2 + $0x3e0] sm:$0xff] %vm894, %v2069
      %2220 = vst.msk [vmem:[#allocation2 + $0x3f8] sm:$0xff] %vm894, %v2071
      %2221 = vst.msk [vmem:[#allocation2 + $0x410] sm:$0xff] %vm894, %v2073
      %2222 = vst.msk [vmem:[#allocation2 + $0x428] sm:$0xff] %vm894, %v2075
      %2223 = vst.msk [vmem:[#allocation2 + $0x440] sm:$0xff] %vm894, %v2077
      %2224 = vst.msk [vmem:[#allocation2 + $0x458] sm:$0xff] %vm894, %v2079
      %2225 = vst.msk [vmem:[#allocation2 + $0x470] sm:$0xff] %vm894, %v2081
      %2226 = vst.msk [vmem:[#allocation2 + $0x488] sm:$0xff] %vm894, %v2083
      %2227 = vst.msk [vmem:[#allocation2 + $0x4a0] sm:$0xff] %vm894, %v2085
      %2228 = vst.msk [vmem:[#allocation2 + $0x4b8] sm:$0xff] %vm894, %v2087
      %2229 = vst.msk [vmem:[#allocation2 + $0x4d0] sm:$0xff] %vm894, %v2089
      %2230 = vst.msk [vmem:[#allocation2 + $0x4e8] sm:$0xff] %vm894, %v2091
      %2231 = vst.msk [vmem:[#allocation2 + $0x500] sm:$0xff] %vm894, %v2093
      %2232 = vst.msk [vmem:[#allocation2 + $0x518] sm:$0xff] %vm894, %v2095
      %2233 = vst.msk [vmem:[#allocation2 + $0x530] sm:$0xff] %vm894, %v2097
      %2234 = vst.msk [vmem:[#allocation2 + $0x548] sm:$0xff] %vm894, %v2099
      %2235 = vst.msk [vmem:[#allocation2 + $0x560] sm:$0xff] %vm894, %v2101
      %2236 = vst.msk [vmem:[#allocation2 + $0x578] sm:$0xff] %vm894, %v2103
      %2237 = vst.msk [vmem:[#allocation2 + $0x590] sm:$0xff] %vm894, %v2105
      %2238 = vst.msk [vmem:[#allocation2 + $0x5a8] sm:$0xff] %vm894, %v2107
      %2239 = vst.msk [vmem:[#allocation2 + $0x5c0] sm:$0xff] %vm894, %v2109
      %2240 = vst.msk [vmem:[#allocation2 + $0x5d8] sm:$0xff] %vm894, %v2111
      %2241 = vst.msk [vmem:[#allocation2 + $0x5f0] sm:$0xff] %vm894, %v2113
      %s2242 = scalar_lea.vmem [#allocation3], 128
      %v2243 = vld [vmem:[%s2242 + $0x6] sm:$0xff]
      %v2244 = vld [vmem:[%s2242 + $0xe] sm:$0xff]
      %v2245 = vld [vmem:[%s2242 + $0x26] sm:$0xff]
      %v2246 = vld [vmem:[%s2242 + $0x2e] sm:$0xff]
      %v2247 = vld [vmem:[%s2242 + $0x46] sm:$0xff]
      %v2248 = vld [vmem:[%s2242 + $0x4e] sm:$0xff]
      %v2249 = vld [vmem:[%s2242 + $0x66] sm:$0xff]
      %v2250 = vld [vmem:[%s2242 + $0x6e] sm:$0xff]
      %v2251 = vld [vmem:[%s2242 + $0x86] sm:$0xff]
      %v2252 = vld [vmem:[%s2242 + $0x8e] sm:$0xff]
      %v2253 = vld [vmem:[%s2242 + $0xa6] sm:$0xff]
      %v2254 = vld [vmem:[%s2242 + $0xae] sm:$0xff]
      %v2255 = vld [vmem:[%s2242 + $0xc6] sm:$0xff]
      %v2256 = vld [vmem:[%s2242 + $0xce] sm:$0xff]
      %v2257 = vld [vmem:[%s2242 + $0xe6] sm:$0xff]
      %v2258 = vld [vmem:[%s2242 + $0xee] sm:$0xff]
      %v2259 = vld [vmem:[%s2242 + $0x106] sm:$0xff]
      %v2260 = vld [vmem:[%s2242 + $0x10e] sm:$0xff]
      %v2261 = vld [vmem:[%s2242 + $0x126] sm:$0xff]
      %v2262 = vld [vmem:[%s2242 + $0x12e] sm:$0xff]
      %v2263 = vld [vmem:[%s2242 + $0x146] sm:$0xff]
      %v2264 = vld [vmem:[%s2242 + $0x14e] sm:$0xff]
      %v2265 = vld [vmem:[%s2242 + $0x166] sm:$0xff]
      %v2266 = vld [vmem:[%s2242 + $0x16e] sm:$0xff]
      %v2267 = vld [vmem:[%s2242 + $0x186] sm:$0xff]
      %v2268 = vld [vmem:[%s2242 + $0x18e] sm:$0xff]
      %v2269 = vld [vmem:[%s2242 + $0x1a6] sm:$0xff]
      %v2270 = vld [vmem:[%s2242 + $0x1ae] sm:$0xff]
      %v2271 = vld [vmem:[%s2242 + $0x1c6] sm:$0xff]
      %v2272 = vld [vmem:[%s2242 + $0x1ce] sm:$0xff]
      %v2273 = vld [vmem:[%s2242 + $0x1e6] sm:$0xff]
      %v2274 = vld [vmem:[%s2242 + $0x1ee] sm:$0xff]
      %v2275 = vld [vmem:[%s2242 + $0x286] sm:$0xff]
      %v2276 = vld [vmem:[%s2242 + $0x28e] sm:$0xff]
      %v2277 = vld [vmem:[%s2242 + $0x2a6] sm:$0xff]
      %v2278 = vld [vmem:[%s2242 + $0x2ae] sm:$0xff]
      %v2279 = vld [vmem:[%s2242 + $0x2c6] sm:$0xff]
      %v2280 = vld [vmem:[%s2242 + $0x2ce] sm:$0xff]
      %v2281 = vld [vmem:[%s2242 + $0x2e6] sm:$0xff]
      %v2282 = vld [vmem:[%s2242 + $0x2ee] sm:$0xff]
      %v2283 = vld [vmem:[%s2242 + $0x306] sm:$0xff]
      %v2284 = vld [vmem:[%s2242 + $0x30e] sm:$0xff]
      %v2285 = vld [vmem:[%s2242 + $0x326] sm:$0xff]
      %v2286 = vld [vmem:[%s2242 + $0x32e] sm:$0xff]
      %v2287 = vld [vmem:[%s2242 + $0x346] sm:$0xff]
      %v2288 = vld [vmem:[%s2242 + $0x34e] sm:$0xff]
      %v2289 = vld [vmem:[%s2242 + $0x366] sm:$0xff]
      %v2290 = vld [vmem:[%s2242 + $0x36e] sm:$0xff]
      %v2291 = vld [vmem:[%s2242 + $0x386] sm:$0xff]
      %v2292 = vld [vmem:[%s2242 + $0x38e] sm:$0xff]
      %v2293 = vld [vmem:[%s2242 + $0x3a6] sm:$0xff]
      %v2294 = vld [vmem:[%s2242 + $0x3ae] sm:$0xff]
      %v2295 = vld [vmem:[%s2242 + $0x3c6] sm:$0xff]
      %v2296 = vld [vmem:[%s2242 + $0x3ce] sm:$0xff]
      %v2297 = vld [vmem:[%s2242 + $0x3e6] sm:$0xff]
      %v2298 = vld [vmem:[%s2242 + $0x3ee] sm:$0xff]
      %v2299 = vld [vmem:[%s2242 + $0x406] sm:$0xff]
      %v2300 = vld [vmem:[%s2242 + $0x40e] sm:$0xff]
      %v2301 = vld [vmem:[%s2242 + $0x426] sm:$0xff]
      %v2302 = vld [vmem:[%s2242 + $0x42e] sm:$0xff]
      %v2303 = vld [vmem:[%s2242 + $0x446] sm:$0xff]
      %v2304 = vld [vmem:[%s2242 + $0x44e] sm:$0xff]
      %v2305 = vld [vmem:[%s2242 + $0x466] sm:$0xff]
      %v2306 = vld [vmem:[%s2242 + $0x46e] sm:$0xff]
      %2371 = vrot.lane.b32.xlu0 %v2243, 64
      %v2372 = vpop.permute.xlu0 %2371
      %2373 = vrot.lane.b32.xlu0 %v2244, 64
      %v2374 = vpop.permute.xlu0 %2373
      %2375 = vrot.lane.b32.xlu0 %v2245, 64
      %v2376 = vpop.permute.xlu0 %2375
      %2377 = vrot.lane.b32.xlu0 %v2246, 64
      %v2378 = vpop.permute.xlu0 %2377
      %2379 = vrot.lane.b32.xlu0 %v2247, 64
      %v2380 = vpop.permute.xlu0 %2379
      %2381 = vrot.lane.b32.xlu0 %v2248, 64
      %v2382 = vpop.permute.xlu0 %2381
      %2383 = vrot.lane.b32.xlu0 %v2249, 64
      %v2384 = vpop.permute.xlu0 %2383
      %2385 = vrot.lane.b32.xlu0 %v2250, 64
      %v2386 = vpop.permute.xlu0 %2385
      %2387 = vrot.lane.b32.xlu0 %v2251, 64
      %v2388 = vpop.permute.xlu0 %2387
      %2389 = vrot.lane.b32.xlu0 %v2252, 64
      %v2390 = vpop.permute.xlu0 %2389
      %2391 = vrot.lane.b32.xlu0 %v2253, 64
      %v2392 = vpop.permute.xlu0 %2391
      %2393 = vrot.lane.b32.xlu0 %v2254, 64
      %v2394 = vpop.permute.xlu0 %2393
      %2395 = vrot.lane.b32.xlu0 %v2255, 64
      %v2396 = vpop.permute.xlu0 %2395
      %2397 = vrot.lane.b32.xlu0 %v2256, 64
      %v2398 = vpop.permute.xlu0 %2397
      %2399 = vrot.lane.b32.xlu0 %v2257, 64
      %v2400 = vpop.permute.xlu0 %2399
      %2401 = vrot.lane.b32.xlu0 %v2258, 64
      %v2402 = vpop.permute.xlu0 %2401
      %2403 = vrot.lane.b32.xlu0 %v2259, 64
      %v2404 = vpop.permute.xlu0 %2403
      %2405 = vrot.lane.b32.xlu0 %v2260, 64
      %v2406 = vpop.permute.xlu0 %2405
      %2407 = vrot.lane.b32.xlu0 %v2261, 64
      %v2408 = vpop.permute.xlu0 %2407
      %2409 = vrot.lane.b32.xlu0 %v2262, 64
      %v2410 = vpop.permute.xlu0 %2409
      %2411 = vrot.lane.b32.xlu0 %v2263, 64
      %v2412 = vpop.permute.xlu0 %2411
      %2413 = vrot.lane.b32.xlu0 %v2264, 64
      %v2414 = vpop.permute.xlu0 %2413
      %2415 = vrot.lane.b32.xlu0 %v2265, 64
      %v2416 = vpop.permute.xlu0 %2415
      %2417 = vrot.lane.b32.xlu0 %v2266, 64
      %v2418 = vpop.permute.xlu0 %2417
      %2419 = vrot.lane.b32.xlu0 %v2267, 64
      %v2420 = vpop.permute.xlu0 %2419
      %2421 = vrot.lane.b32.xlu0 %v2268, 64
      %v2422 = vpop.permute.xlu0 %2421
      %2423 = vrot.lane.b32.xlu0 %v2269, 64
      %v2424 = vpop.permute.xlu0 %2423
      %2425 = vrot.lane.b32.xlu0 %v2270, 64
      %v2426 = vpop.permute.xlu0 %2425
      %2427 = vrot.lane.b32.xlu0 %v2271, 64
      %v2428 = vpop.permute.xlu0 %2427
      %2429 = vrot.lane.b32.xlu0 %v2272, 64
      %v2430 = vpop.permute.xlu0 %2429
      %2431 = vrot.lane.b32.xlu0 %v2273, 64
      %v2432 = vpop.permute.xlu0 %2431
      %2433 = vrot.lane.b32.xlu0 %v2274, 64
      %v2434 = vpop.permute.xlu0 %2433
      %2435 = vrot.lane.b32.xlu0 %v2275, 64
      %v2436 = vpop.permute.xlu0 %2435
      %2437 = vrot.lane.b32.xlu0 %v2276, 64
      %v2438 = vpop.permute.xlu0 %2437
      %2439 = vrot.lane.b32.xlu0 %v2277, 64
      %v2440 = vpop.permute.xlu0 %2439
      %2441 = vrot.lane.b32.xlu0 %v2278, 64
      %v2442 = vpop.permute.xlu0 %2441
      %2443 = vrot.lane.b32.xlu0 %v2279, 64
      %v2444 = vpop.permute.xlu0 %2443
      %2445 = vrot.lane.b32.xlu0 %v2280, 64
      %v2446 = vpop.permute.xlu0 %2445
      %2447 = vrot.lane.b32.xlu0 %v2281, 64
      %v2448 = vpop.permute.xlu0 %2447
      %2449 = vrot.lane.b32.xlu0 %v2282, 64
      %v2450 = vpop.permute.xlu0 %2449
      %2451 = vrot.lane.b32.xlu0 %v2283, 64
      %v2452 = vpop.permute.xlu0 %2451
      %2453 = vrot.lane.b32.xlu0 %v2284, 64
      %v2454 = vpop.permute.xlu0 %2453
      %2455 = vrot.lane.b32.xlu0 %v2285, 64
      %v2456 = vpop.permute.xlu0 %2455
      %2457 = vrot.lane.b32.xlu0 %v2286, 64
      %v2458 = vpop.permute.xlu0 %2457
      %2459 = vrot.lane.b32.xlu0 %v2287, 64
      %v2460 = vpop.permute.xlu0 %2459
      %2461 = vrot.lane.b32.xlu0 %v2288, 64
      %v2462 = vpop.permute.xlu0 %2461
      %2463 = vrot.lane.b32.xlu0 %v2289, 64
      %v2464 = vpop.permute.xlu0 %2463
      %2465 = vrot.lane.b32.xlu0 %v2290, 64
      %v2466 = vpop.permute.xlu0 %2465
      %2467 = vrot.lane.b32.xlu0 %v2291, 64
      %v2468 = vpop.permute.xlu0 %2467
      %2469 = vrot.lane.b32.xlu0 %v2292, 64
      %v2470 = vpop.permute.xlu0 %2469
      %2471 = vrot.lane.b32.xlu0 %v2293, 64
      %v2472 = vpop.permute.xlu0 %2471
      %2473 = vrot.lane.b32.xlu0 %v2294, 64
      %v2474 = vpop.permute.xlu0 %2473
      %2475 = vrot.lane.b32.xlu0 %v2295, 64
      %v2476 = vpop.permute.xlu0 %2475
      %2477 = vrot.lane.b32.xlu0 %v2296, 64
      %v2478 = vpop.permute.xlu0 %2477
      %2479 = vrot.lane.b32.xlu0 %v2297, 64
      %v2480 = vpop.permute.xlu0 %2479
      %2481 = vrot.lane.b32.xlu0 %v2298, 64
      %v2482 = vpop.permute.xlu0 %2481
      %2483 = vrot.lane.b32.xlu0 %v2299, 64
      %v2484 = vpop.permute.xlu0 %2483
      %2485 = vrot.lane.b32.xlu0 %v2300, 64
      %v2486 = vpop.permute.xlu0 %2485
      %2487 = vrot.lane.b32.xlu0 %v2301, 64
      %v2488 = vpop.permute.xlu0 %2487
      %2489 = vrot.lane.b32.xlu0 %v2302, 64
      %v2490 = vpop.permute.xlu0 %2489
      %2491 = vrot.lane.b32.xlu0 %v2303, 64
      %v2492 = vpop.permute.xlu0 %2491
      %2493 = vrot.lane.b32.xlu0 %v2304, 64
      %v2494 = vpop.permute.xlu0 %2493
      %2495 = vrot.lane.b32.xlu0 %v2305, 64
      %v2496 = vpop.permute.xlu0 %2495
      %2497 = vrot.lane.b32.xlu0 %v2306, 64
      %v2498 = vpop.permute.xlu0 %2497
      %2563 = vst.msk [vmem:[#allocation2 + $0x8] sm:$0xff] %vm1279, %v2372
      %2564 = vst.msk [vmem:[#allocation2 + $0x20] sm:$0xff] %vm1279, %v2374
      %2565 = vst.msk [vmem:[#allocation2 + $0x38] sm:$0xff] %vm1279, %v2376
      %2566 = vst.msk [vmem:[#allocation2 + $0x50] sm:$0xff] %vm1279, %v2378
      %2567 = vst.msk [vmem:[#allocation2 + $0x68] sm:$0xff] %vm1279, %v2380
      %2568 = vst.msk [vmem:[#allocation2 + $0x80] sm:$0xff] %vm1279, %v2382
      %2569 = vst.msk [vmem:[#allocation2 + $0x98] sm:$0xff] %vm1279, %v2384
      %2570 = vst.msk [vmem:[#allocation2 + $0xb0] sm:$0xff] %vm1279, %v2386
      %2571 = vst.msk [vmem:[#allocation2 + $0xc8] sm:$0xff] %vm1279, %v2388
      %2572 = vst.msk [vmem:[#allocation2 + $0xe0] sm:$0xff] %vm1279, %v2390
      %2573 = vst.msk [vmem:[#allocation2 + $0xf8] sm:$0xff] %vm1279, %v2392
      %2574 = vst.msk [vmem:[#allocation2 + $0x110] sm:$0xff] %vm1279, %v2394
      %2575 = vst.msk [vmem:[#allocation2 + $0x128] sm:$0xff] %vm1279, %v2396
      %2576 = vst.msk [vmem:[#allocation2 + $0x140] sm:$0xff] %vm1279, %v2398
      %2577 = vst.msk [vmem:[#allocation2 + $0x158] sm:$0xff] %vm1279, %v2400
      %2578 = vst.msk [vmem:[#allocation2 + $0x170] sm:$0xff] %vm1279, %v2402
      %2579 = vst.msk [vmem:[#allocation2 + $0x188] sm:$0xff] %vm1279, %v2404
      %2580 = vst.msk [vmem:[#allocation2 + $0x1a0] sm:$0xff] %vm1279, %v2406
      %2581 = vst.msk [vmem:[#allocation2 + $0x1b8] sm:$0xff] %vm1279, %v2408
      %2582 = vst.msk [vmem:[#allocation2 + $0x1d0] sm:$0xff] %vm1279, %v2410
      %2583 = vst.msk [vmem:[#allocation2 + $0x1e8] sm:$0xff] %vm1279, %v2412
      %2584 = vst.msk [vmem:[#allocation2 + $0x200] sm:$0xff] %vm1279, %v2414
      %2585 = vst.msk [vmem:[#allocation2 + $0x218] sm:$0xff] %vm1279, %v2416
      %2586 = vst.msk [vmem:[#allocation2 + $0x230] sm:$0xff] %vm1279, %v2418
      %2587 = vst.msk [vmem:[#allocation2 + $0x248] sm:$0xff] %vm1279, %v2420
      %2588 = vst.msk [vmem:[#allocation2 + $0x260] sm:$0xff] %vm1279, %v2422
      %2589 = vst.msk [vmem:[#allocation2 + $0x278] sm:$0xff] %vm1279, %v2424
      %2590 = vst.msk [vmem:[#allocation2 + $0x290] sm:$0xff] %vm1279, %v2426
      %2591 = vst.msk [vmem:[#allocation2 + $0x2a8] sm:$0xff] %vm1279, %v2428
      %2592 = vst.msk [vmem:[#allocation2 + $0x2c0] sm:$0xff] %vm1279, %v2430
      %2593 = vst.msk [vmem:[#allocation2 + $0x2d8] sm:$0xff] %vm1279, %v2432
      %2594 = vst.msk [vmem:[#allocation2 + $0x2f0] sm:$0xff] %vm1279, %v2434
      %2595 = vst.msk [vmem:[#allocation2 + $0x308] sm:$0xff] %vm1279, %v2436
      %2596 = vst.msk [vmem:[#allocation2 + $0x320] sm:$0xff] %vm1279, %v2438
      %2597 = vst.msk [vmem:[#allocation2 + $0x338] sm:$0xff] %vm1279, %v2440
      %2598 = vst.msk [vmem:[#allocation2 + $0x350] sm:$0xff] %vm1279, %v2442
      %2599 = vst.msk [vmem:[#allocation2 + $0x368] sm:$0xff] %vm1279, %v2444
      %2600 = vst.msk [vmem:[#allocation2 + $0x380] sm:$0xff] %vm1279, %v2446
      %2601 = vst.msk [vmem:[#allocation2 + $0x398] sm:$0xff] %vm1279, %v2448
      %2602 = vst.msk [vmem:[#allocation2 + $0x3b0] sm:$0xff] %vm1279, %v2450
      %2603 = vst.msk [vmem:[#allocation2 + $0x3c8] sm:$0xff] %vm1279, %v2452
      %2604 = vst.msk [vmem:[#allocation2 + $0x3e0] sm:$0xff] %vm1279, %v2454
      %2605 = vst.msk [vmem:[#allocation2 + $0x3f8] sm:$0xff] %vm1279, %v2456
      %2606 = vst.msk [vmem:[#allocation2 + $0x410] sm:$0xff] %vm1279, %v2458
      %2607 = vst.msk [vmem:[#allocation2 + $0x428] sm:$0xff] %vm1279, %v2460
      %2608 = vst.msk [vmem:[#allocation2 + $0x440] sm:$0xff] %vm1279, %v2462
      %2609 = vst.msk [vmem:[#allocation2 + $0x458] sm:$0xff] %vm1279, %v2464
      %2610 = vst.msk [vmem:[#allocation2 + $0x470] sm:$0xff] %vm1279, %v2466
      %2611 = vst.msk [vmem:[#allocation2 + $0x488] sm:$0xff] %vm1279, %v2468
      %2612 = vst.msk [vmem:[#allocation2 + $0x4a0] sm:$0xff] %vm1279, %v2470
      %2613 = vst.msk [vmem:[#allocation2 + $0x4b8] sm:$0xff] %vm1279, %v2472
      %2614 = vst.msk [vmem:[#allocation2 + $0x4d0] sm:$0xff] %vm1279, %v2474
      %2615 = vst.msk [vmem:[#allocation2 + $0x4e8] sm:$0xff] %vm1279, %v2476
      %2616 = vst.msk [vmem:[#allocation2 + $0x500] sm:$0xff] %vm1279, %v2478
      %2617 = vst.msk [vmem:[#allocation2 + $0x518] sm:$0xff] %vm1279, %v2480
      %2618 = vst.msk [vmem:[#allocation2 + $0x530] sm:$0xff] %vm1279, %v2482
      %2619 = vst.msk [vmem:[#allocation2 + $0x548] sm:$0xff] %vm1279, %v2484
      %2620 = vst.msk [vmem:[#allocation2 + $0x560] sm:$0xff] %vm1279, %v2486
      %2621 = vst.msk [vmem:[#allocation2 + $0x578] sm:$0xff] %vm1279, %v2488
      %2622 = vst.msk [vmem:[#allocation2 + $0x590] sm:$0xff] %vm1279, %v2490
      %2623 = vst.msk [vmem:[#allocation2 + $0x5a8] sm:$0xff] %vm1279, %v2492
      %2624 = vst.msk [vmem:[#allocation2 + $0x5c0] sm:$0xff] %vm1279, %v2494
      %2625 = vst.msk [vmem:[#allocation2 + $0x5d8] sm:$0xff] %vm1279, %v2496
      %2626 = vst.msk [vmem:[#allocation2 + $0x5f0] sm:$0xff] %vm1279, %v2498
      %v2627 = vld [vmem:[%s2242 + $0x8] sm:$0xff]
      %v2628 = vld [vmem:[%s2242 + $0x10] sm:$0xff]
      %v2629 = vld [vmem:[%s2242 + $0x28] sm:$0xff]
      %v2630 = vld [vmem:[%s2242 + $0x30] sm:$0xff]
      %v2631 = vld [vmem:[%s2242 + $0x48] sm:$0xff]
      %v2632 = vld [vmem:[%s2242 + $0x50] sm:$0xff]
      %v2633 = vld [vmem:[%s2242 + $0x68] sm:$0xff]
      %v2634 = vld [vmem:[%s2242 + $0x70] sm:$0xff]
      %v2635 = vld [vmem:[%s2242 + $0x88] sm:$0xff]
      %v2636 = vld [vmem:[%s2242 + $0x90] sm:$0xff]
      %v2637 = vld [vmem:[%s2242 + $0xa8] sm:$0xff]
      %v2638 = vld [vmem:[%s2242 + $0xb0] sm:$0xff]
      %v2639 = vld [vmem:[%s2242 + $0xc8] sm:$0xff]
      %v2640 = vld [vmem:[%s2242 + $0xd0] sm:$0xff]
      %v2641 = vld [vmem:[%s2242 + $0xe8] sm:$0xff]
      %v2642 = vld [vmem:[%s2242 + $0xf0] sm:$0xff]
      %v2643 = vld [vmem:[%s2242 + $0x108] sm:$0xff]
      %v2644 = vld [vmem:[%s2242 + $0x110] sm:$0xff]
      %v2645 = vld [vmem:[%s2242 + $0x128] sm:$0xff]
      %v2646 = vld [vmem:[%s2242 + $0x130] sm:$0xff]
      %v2647 = vld [vmem:[%s2242 + $0x148] sm:$0xff]
      %v2648 = vld [vmem:[%s2242 + $0x150] sm:$0xff]
      %v2649 = vld [vmem:[%s2242 + $0x168] sm:$0xff]
      %v2650 = vld [vmem:[%s2242 + $0x170] sm:$0xff]
      %v2651 = vld [vmem:[%s2242 + $0x188] sm:$0xff]
      %v2652 = vld [vmem:[%s2242 + $0x190] sm:$0xff]
      %v2653 = vld [vmem:[%s2242 + $0x1a8] sm:$0xff]
      %v2654 = vld [vmem:[%s2242 + $0x1b0] sm:$0xff]
      %v2655 = vld [vmem:[%s2242 + $0x1c8] sm:$0xff]
      %v2656 = vld [vmem:[%s2242 + $0x1d0] sm:$0xff]
      %v2657 = vld [vmem:[%s2242 + $0x1e8] sm:$0xff]
      %v2658 = vld [vmem:[%s2242 + $0x1f0] sm:$0xff]
      %v2659 = vld [vmem:[%s2242 + $0x288] sm:$0xff]
      %v2660 = vld [vmem:[%s2242 + $0x290] sm:$0xff]
      %v2661 = vld [vmem:[%s2242 + $0x2a8] sm:$0xff]
      %v2662 = vld [vmem:[%s2242 + $0x2b0] sm:$0xff]
      %v2663 = vld [vmem:[%s2242 + $0x2c8] sm:$0xff]
      %v2664 = vld [vmem:[%s2242 + $0x2d0] sm:$0xff]
      %v2665 = vld [vmem:[%s2242 + $0x2e8] sm:$0xff]
      %v2666 = vld [vmem:[%s2242 + $0x2f0] sm:$0xff]
      %v2667 = vld [vmem:[%s2242 + $0x308] sm:$0xff]
      %v2668 = vld [vmem:[%s2242 + $0x310] sm:$0xff]
      %v2669 = vld [vmem:[%s2242 + $0x328] sm:$0xff]
      %v2670 = vld [vmem:[%s2242 + $0x330] sm:$0xff]
      %v2671 = vld [vmem:[%s2242 + $0x348] sm:$0xff]
      %v2672 = vld [vmem:[%s2242 + $0x350] sm:$0xff]
      %v2673 = vld [vmem:[%s2242 + $0x368] sm:$0xff]
      %v2674 = vld [vmem:[%s2242 + $0x370] sm:$0xff]
      %v2675 = vld [vmem:[%s2242 + $0x388] sm:$0xff]
      %v2676 = vld [vmem:[%s2242 + $0x390] sm:$0xff]
      %v2677 = vld [vmem:[%s2242 + $0x3a8] sm:$0xff]
      %v2678 = vld [vmem:[%s2242 + $0x3b0] sm:$0xff]
      %v2679 = vld [vmem:[%s2242 + $0x3c8] sm:$0xff]
      %v2680 = vld [vmem:[%s2242 + $0x3d0] sm:$0xff]
      %v2681 = vld [vmem:[%s2242 + $0x3e8] sm:$0xff]
      %v2682 = vld [vmem:[%s2242 + $0x3f0] sm:$0xff]
      %v2683 = vld [vmem:[%s2242 + $0x408] sm:$0xff]
      %v2684 = vld [vmem:[%s2242 + $0x410] sm:$0xff]
      %v2685 = vld [vmem:[%s2242 + $0x428] sm:$0xff]
      %v2686 = vld [vmem:[%s2242 + $0x430] sm:$0xff]
      %v2687 = vld [vmem:[%s2242 + $0x448] sm:$0xff]
      %v2688 = vld [vmem:[%s2242 + $0x450] sm:$0xff]
      %v2689 = vld [vmem:[%s2242 + $0x468] sm:$0xff]
      %v2690 = vld [vmem:[%s2242 + $0x470] sm:$0xff]
      %2755 = vrot.lane.b32.xlu0 %v2627, 96
      %v2756 = vpop.permute.xlu0 %2755
      %2757 = vrot.lane.b32.xlu0 %v2628, 96
      %v2758 = vpop.permute.xlu0 %2757
      %2759 = vrot.lane.b32.xlu0 %v2629, 96
      %v2760 = vpop.permute.xlu0 %2759
      %2761 = vrot.lane.b32.xlu0 %v2630, 96
      %v2762 = vpop.permute.xlu0 %2761
      %2763 = vrot.lane.b32.xlu0 %v2631, 96
      %v2764 = vpop.permute.xlu0 %2763
      %2765 = vrot.lane.b32.xlu0 %v2632, 96
      %v2766 = vpop.permute.xlu0 %2765
      %2767 = vrot.lane.b32.xlu0 %v2633, 96
      %v2768 = vpop.permute.xlu0 %2767
      %2769 = vrot.lane.b32.xlu0 %v2634, 96
      %v2770 = vpop.permute.xlu0 %2769
      %2771 = vrot.lane.b32.xlu0 %v2635, 96
      %v2772 = vpop.permute.xlu0 %2771
      %2773 = vrot.lane.b32.xlu0 %v2636, 96
      %v2774 = vpop.permute.xlu0 %2773
      %2775 = vrot.lane.b32.xlu0 %v2637, 96
      %v2776 = vpop.permute.xlu0 %2775
      %2777 = vrot.lane.b32.xlu0 %v2638, 96
      %v2778 = vpop.permute.xlu0 %2777
      %2779 = vrot.lane.b32.xlu0 %v2639, 96
      %v2780 = vpop.permute.xlu0 %2779
      %2781 = vrot.lane.b32.xlu0 %v2640, 96
      %v2782 = vpop.permute.xlu0 %2781
      %2783 = vrot.lane.b32.xlu0 %v2641, 96
      %v2784 = vpop.permute.xlu0 %2783
      %2785 = vrot.lane.b32.xlu0 %v2642, 96
      %v2786 = vpop.permute.xlu0 %2785
      %2787 = vrot.lane.b32.xlu0 %v2643, 96
      %v2788 = vpop.permute.xlu0 %2787
      %2789 = vrot.lane.b32.xlu0 %v2644, 96
      %v2790 = vpop.permute.xlu0 %2789
      %2791 = vrot.lane.b32.xlu0 %v2645, 96
      %v2792 = vpop.permute.xlu0 %2791
      %2793 = vrot.lane.b32.xlu0 %v2646, 96
      %v2794 = vpop.permute.xlu0 %2793
      %2795 = vrot.lane.b32.xlu0 %v2647, 96
      %v2796 = vpop.permute.xlu0 %2795
      %2797 = vrot.lane.b32.xlu0 %v2648, 96
      %v2798 = vpop.permute.xlu0 %2797
      %2799 = vrot.lane.b32.xlu0 %v2649, 96
      %v2800 = vpop.permute.xlu0 %2799
      %2801 = vrot.lane.b32.xlu0 %v2650, 96
      %v2802 = vpop.permute.xlu0 %2801
      %2803 = vrot.lane.b32.xlu0 %v2651, 96
      %v2804 = vpop.permute.xlu0 %2803
      %2805 = vrot.lane.b32.xlu0 %v2652, 96
      %v2806 = vpop.permute.xlu0 %2805
      %2807 = vrot.lane.b32.xlu0 %v2653, 96
      %v2808 = vpop.permute.xlu0 %2807
      %2809 = vrot.lane.b32.xlu0 %v2654, 96
      %v2810 = vpop.permute.xlu0 %2809
      %2811 = vrot.lane.b32.xlu0 %v2655, 96
      %v2812 = vpop.permute.xlu0 %2811
      %2813 = vrot.lane.b32.xlu0 %v2656, 96
      %v2814 = vpop.permute.xlu0 %2813
      %2815 = vrot.lane.b32.xlu0 %v2657, 96
      %v2816 = vpop.permute.xlu0 %2815
      %2817 = vrot.lane.b32.xlu0 %v2658, 96
      %v2818 = vpop.permute.xlu0 %2817
      %2819 = vrot.lane.b32.xlu0 %v2659, 96
      %v2820 = vpop.permute.xlu0 %2819
      %2821 = vrot.lane.b32.xlu0 %v2660, 96
      %v2822 = vpop.permute.xlu0 %2821
      %2823 = vrot.lane.b32.xlu0 %v2661, 96
      %v2824 = vpop.permute.xlu0 %2823
      %2825 = vrot.lane.b32.xlu0 %v2662, 96
      %v2826 = vpop.permute.xlu0 %2825
      %2827 = vrot.lane.b32.xlu0 %v2663, 96
      %v2828 = vpop.permute.xlu0 %2827
      %2829 = vrot.lane.b32.xlu0 %v2664, 96
      %v2830 = vpop.permute.xlu0 %2829
      %2831 = vrot.lane.b32.xlu0 %v2665, 96
      %v2832 = vpop.permute.xlu0 %2831
      %2833 = vrot.lane.b32.xlu0 %v2666, 96
      %v2834 = vpop.permute.xlu0 %2833
      %2835 = vrot.lane.b32.xlu0 %v2667, 96
      %v2836 = vpop.permute.xlu0 %2835
      %2837 = vrot.lane.b32.xlu0 %v2668, 96
      %v2838 = vpop.permute.xlu0 %2837
      %2839 = vrot.lane.b32.xlu0 %v2669, 96
      %v2840 = vpop.permute.xlu0 %2839
      %2841 = vrot.lane.b32.xlu0 %v2670, 96
      %v2842 = vpop.permute.xlu0 %2841
      %2843 = vrot.lane.b32.xlu0 %v2671, 96
      %v2844 = vpop.permute.xlu0 %2843
      %2845 = vrot.lane.b32.xlu0 %v2672, 96
      %v2846 = vpop.permute.xlu0 %2845
      %2847 = vrot.lane.b32.xlu0 %v2673, 96
      %v2848 = vpop.permute.xlu0 %2847
      %2849 = vrot.lane.b32.xlu0 %v2674, 96
      %v2850 = vpop.permute.xlu0 %2849
      %2851 = vrot.lane.b32.xlu0 %v2675, 96
      %v2852 = vpop.permute.xlu0 %2851
      %2853 = vrot.lane.b32.xlu0 %v2676, 96
      %v2854 = vpop.permute.xlu0 %2853
      %2855 = vrot.lane.b32.xlu0 %v2677, 96
      %v2856 = vpop.permute.xlu0 %2855
      %2857 = vrot.lane.b32.xlu0 %v2678, 96
      %v2858 = vpop.permute.xlu0 %2857
      %2859 = vrot.lane.b32.xlu0 %v2679, 96
      %v2860 = vpop.permute.xlu0 %2859
      %2861 = vrot.lane.b32.xlu0 %v2680, 96
      %v2862 = vpop.permute.xlu0 %2861
      %2863 = vrot.lane.b32.xlu0 %v2681, 96
      %v2864 = vpop.permute.xlu0 %2863
      %2865 = vrot.lane.b32.xlu0 %v2682, 96
      %v2866 = vpop.permute.xlu0 %2865
      %2867 = vrot.lane.b32.xlu0 %v2683, 96
      %v2868 = vpop.permute.xlu0 %2867
      %2869 = vrot.lane.b32.xlu0 %v2684, 96
      %v2870 = vpop.permute.xlu0 %2869
      %2871 = vrot.lane.b32.xlu0 %v2685, 96
      %v2872 = vpop.permute.xlu0 %2871
      %2873 = vrot.lane.b32.xlu0 %v2686, 96
      %v2874 = vpop.permute.xlu0 %2873
      %2875 = vrot.lane.b32.xlu0 %v2687, 96
      %v2876 = vpop.permute.xlu0 %2875
      %2877 = vrot.lane.b32.xlu0 %v2688, 96
      %v2878 = vpop.permute.xlu0 %2877
      %2879 = vrot.lane.b32.xlu0 %v2689, 96
      %v2880 = vpop.permute.xlu0 %2879
      %2881 = vrot.lane.b32.xlu0 %v2690, 96
      %v2882 = vpop.permute.xlu0 %2881
      %2947 = vst.msk [vmem:[#allocation2 + $0x8] sm:$0xff] %vm1665, %v2756
      %2948 = vst.msk [vmem:[#allocation2 + $0x20] sm:$0xff] %vm1665, %v2758
      %2949 = vst.msk [vmem:[#allocation2 + $0x38] sm:$0xff] %vm1665, %v2760
      %2950 = vst.msk [vmem:[#allocation2 + $0x50] sm:$0xff] %vm1665, %v2762
      %2951 = vst.msk [vmem:[#allocation2 + $0x68] sm:$0xff] %vm1665, %v2764
      %2952 = vst.msk [vmem:[#allocation2 + $0x80] sm:$0xff] %vm1665, %v2766
      %2953 = vst.msk [vmem:[#allocation2 + $0x98] sm:$0xff] %vm1665, %v2768
      %2954 = vst.msk [vmem:[#allocation2 + $0xb0] sm:$0xff] %vm1665, %v2770
      %2955 = vst.msk [vmem:[#allocation2 + $0xc8] sm:$0xff] %vm1665, %v2772
      %2956 = vst.msk [vmem:[#allocation2 + $0xe0] sm:$0xff] %vm1665, %v2774
      %2957 = vst.msk [vmem:[#allocation2 + $0xf8] sm:$0xff] %vm1665, %v2776
      %2958 = vst.msk [vmem:[#allocation2 + $0x110] sm:$0xff] %vm1665, %v2778
      %2959 = vst.msk [vmem:[#allocation2 + $0x128] sm:$0xff] %vm1665, %v2780
      %2960 = vst.msk [vmem:[#allocation2 + $0x140] sm:$0xff] %vm1665, %v2782
      %2961 = vst.msk [vmem:[#allocation2 + $0x158] sm:$0xff] %vm1665, %v2784
      %2962 = vst.msk [vmem:[#allocation2 + $0x170] sm:$0xff] %vm1665, %v2786
      %2963 = vst.msk [vmem:[#allocation2 + $0x188] sm:$0xff] %vm1665, %v2788
      %2964 = vst.msk [vmem:[#allocation2 + $0x1a0] sm:$0xff] %vm1665, %v2790
      %2965 = vst.msk [vmem:[#allocation2 + $0x1b8] sm:$0xff] %vm1665, %v2792
      %2966 = vst.msk [vmem:[#allocation2 + $0x1d0] sm:$0xff] %vm1665, %v2794
      %2967 = vst.msk [vmem:[#allocation2 + $0x1e8] sm:$0xff] %vm1665, %v2796
      %2968 = vst.msk [vmem:[#allocation2 + $0x200] sm:$0xff] %vm1665, %v2798
      %2969 = vst.msk [vmem:[#allocation2 + $0x218] sm:$0xff] %vm1665, %v2800
      %2970 = vst.msk [vmem:[#allocation2 + $0x230] sm:$0xff] %vm1665, %v2802
      %2971 = vst.msk [vmem:[#allocation2 + $0x248] sm:$0xff] %vm1665, %v2804
      %2972 = vst.msk [vmem:[#allocation2 + $0x260] sm:$0xff] %vm1665, %v2806
      %2973 = vst.msk [vmem:[#allocation2 + $0x278] sm:$0xff] %vm1665, %v2808
      %2974 = vst.msk [vmem:[#allocation2 + $0x290] sm:$0xff] %vm1665, %v2810
      %2975 = vst.msk [vmem:[#allocation2 + $0x2a8] sm:$0xff] %vm1665, %v2812
      %2976 = vst.msk [vmem:[#allocation2 + $0x2c0] sm:$0xff] %vm1665, %v2814
      %2977 = vst.msk [vmem:[#allocation2 + $0x2d8] sm:$0xff] %vm1665, %v2816
      %2978 = vst.msk [vmem:[#allocation2 + $0x2f0] sm:$0xff] %vm1665, %v2818
      %2979 = vst.msk [vmem:[#allocation2 + $0x308] sm:$0xff] %vm1665, %v2820
      %2980 = vst.msk [vmem:[#allocation2 + $0x320] sm:$0xff] %vm1665, %v2822
      %2981 = vst.msk [vmem:[#allocation2 + $0x338] sm:$0xff] %vm1665, %v2824
      %2982 = vst.msk [vmem:[#allocation2 + $0x350] sm:$0xff] %vm1665, %v2826
      %2983 = vst.msk [vmem:[#allocation2 + $0x368] sm:$0xff] %vm1665, %v2828
      %2984 = vst.msk [vmem:[#allocation2 + $0x380] sm:$0xff] %vm1665, %v2830
      %2985 = vst.msk [vmem:[#allocation2 + $0x398] sm:$0xff] %vm1665, %v2832
      %2986 = vst.msk [vmem:[#allocation2 + $0x3b0] sm:$0xff] %vm1665, %v2834
      %2987 = vst.msk [vmem:[#allocation2 + $0x3c8] sm:$0xff] %vm1665, %v2836
      %2988 = vst.msk [vmem:[#allocation2 + $0x3e0] sm:$0xff] %vm1665, %v2838
      %2989 = vst.msk [vmem:[#allocation2 + $0x3f8] sm:$0xff] %vm1665, %v2840
      %2990 = vst.msk [vmem:[#allocation2 + $0x410] sm:$0xff] %vm1665, %v2842
      %2991 = vst.msk [vmem:[#allocation2 + $0x428] sm:$0xff] %vm1665, %v2844
      %2992 = vst.msk [vmem:[#allocation2 + $0x440] sm:$0xff] %vm1665, %v2846
      %2993 = vst.msk [vmem:[#allocation2 + $0x458] sm:$0xff] %vm1665, %v2848
      %2994 = vst.msk [vmem:[#allocation2 + $0x470] sm:$0xff] %vm1665, %v2850
      %2995 = vst.msk [vmem:[#allocation2 + $0x488] sm:$0xff] %vm1665, %v2852
      %2996 = vst.msk [vmem:[#allocation2 + $0x4a0] sm:$0xff] %vm1665, %v2854
      %2997 = vst.msk [vmem:[#allocation2 + $0x4b8] sm:$0xff] %vm1665, %v2856
      %2998 = vst.msk [vmem:[#allocation2 + $0x4d0] sm:$0xff] %vm1665, %v2858
      %2999 = vst.msk [vmem:[#allocation2 + $0x4e8] sm:$0xff] %vm1665, %v2860
      %3000 = vst.msk [vmem:[#allocation2 + $0x500] sm:$0xff] %vm1665, %v2862
      %3001 = vst.msk [vmem:[#allocation2 + $0x518] sm:$0xff] %vm1665, %v2864
      %3002 = vst.msk [vmem:[#allocation2 + $0x530] sm:$0xff] %vm1665, %v2866
      %3003 = vst.msk [vmem:[#allocation2 + $0x548] sm:$0xff] %vm1665, %v2868
      %3004 = vst.msk [vmem:[#allocation2 + $0x560] sm:$0xff] %vm1665, %v2870
      %3005 = vst.msk [vmem:[#allocation2 + $0x578] sm:$0xff] %vm1665, %v2872
      %3006 = vst.msk [vmem:[#allocation2 + $0x590] sm:$0xff] %vm1665, %v2874
      %3007 = vst.msk [vmem:[#allocation2 + $0x5a8] sm:$0xff] %vm1665, %v2876
      %3008 = vst.msk [vmem:[#allocation2 + $0x5c0] sm:$0xff] %vm1665, %v2878
      %3009 = vst.msk [vmem:[#allocation2 + $0x5d8] sm:$0xff] %vm1665, %v2880
      %3010 = vst.msk [vmem:[#allocation2 + $0x5f0] sm:$0xff] %vm1665, %v2882
      %v3011 = vld [vmem:[%s2242 + $0xa] sm:$0xff]
      %v3012 = vld [vmem:[%s2242 + $0x12] sm:$0xff]
      %v3013 = vld [vmem:[%s2242 + $0x2a] sm:$0xff]
      %v3014 = vld [vmem:[%s2242 + $0x32] sm:$0xff]
      %v3015 = vld [vmem:[%s2242 + $0x4a] sm:$0xff]
      %v3016 = vld [vmem:[%s2242 + $0x52] sm:$0xff]
      %v3017 = vld [vmem:[%s2242 + $0x6a] sm:$0xff]
      %v3018 = vld [vmem:[%s2242 + $0x72] sm:$0xff]
      %v3019 = vld [vmem:[%s2242 + $0x8a] sm:$0xff]
      %v3020 = vld [vmem:[%s2242 + $0x92] sm:$0xff]
      %v3021 = vld [vmem:[%s2242 + $0xaa] sm:$0xff]
      %v3022 = vld [vmem:[%s2242 + $0xb2] sm:$0xff]
      %v3023 = vld [vmem:[%s2242 + $0xca] sm:$0xff]
      %v3024 = vld [vmem:[%s2242 + $0xd2] sm:$0xff]
      %v3025 = vld [vmem:[%s2242 + $0xea] sm:$0xff]
      %v3026 = vld [vmem:[%s2242 + $0xf2] sm:$0xff]
      %v3027 = vld [vmem:[%s2242 + $0x10a] sm:$0xff]
      %v3028 = vld [vmem:[%s2242 + $0x112] sm:$0xff]
      %v3029 = vld [vmem:[%s2242 + $0x12a] sm:$0xff]
      %v3030 = vld [vmem:[%s2242 + $0x132] sm:$0xff]
      %v3031 = vld [vmem:[%s2242 + $0x14a] sm:$0xff]
      %v3032 = vld [vmem:[%s2242 + $0x152] sm:$0xff]
      %v3033 = vld [vmem:[%s2242 + $0x16a] sm:$0xff]
      %v3034 = vld [vmem:[%s2242 + $0x172] sm:$0xff]
      %v3035 = vld [vmem:[%s2242 + $0x18a] sm:$0xff]
      %v3036 = vld [vmem:[%s2242 + $0x192] sm:$0xff]
      %v3037 = vld [vmem:[%s2242 + $0x1aa] sm:$0xff]
      %v3038 = vld [vmem:[%s2242 + $0x1b2] sm:$0xff]
      %v3039 = vld [vmem:[%s2242 + $0x1ca] sm:$0xff]
      %v3040 = vld [vmem:[%s2242 + $0x1d2] sm:$0xff]
      %v3041 = vld [vmem:[%s2242 + $0x1ea] sm:$0xff]
      %v3042 = vld [vmem:[%s2242 + $0x1f2] sm:$0xff]
      %v3043 = vld [vmem:[%s2242 + $0x28a] sm:$0xff]
      %v3044 = vld [vmem:[%s2242 + $0x292] sm:$0xff]
      %v3045 = vld [vmem:[%s2242 + $0x2aa] sm:$0xff]
      %v3046 = vld [vmem:[%s2242 + $0x2b2] sm:$0xff]
      %v3047 = vld [vmem:[%s2242 + $0x2ca] sm:$0xff]
      %v3048 = vld [vmem:[%s2242 + $0x2d2] sm:$0xff]
      %v3049 = vld [vmem:[%s2242 + $0x2ea] sm:$0xff]
      %v3050 = vld [vmem:[%s2242 + $0x2f2] sm:$0xff]
      %v3051 = vld [vmem:[%s2242 + $0x30a] sm:$0xff]
      %v3052 = vld [vmem:[%s2242 + $0x312] sm:$0xff]
      %v3053 = vld [vmem:[%s2242 + $0x32a] sm:$0xff]
      %v3054 = vld [vmem:[%s2242 + $0x332] sm:$0xff]
      %v3055 = vld [vmem:[%s2242 + $0x34a] sm:$0xff]
      %v3056 = vld [vmem:[%s2242 + $0x352] sm:$0xff]
      %v3057 = vld [vmem:[%s2242 + $0x36a] sm:$0xff]
      %v3058 = vld [vmem:[%s2242 + $0x372] sm:$0xff]
      %v3059 = vld [vmem:[%s2242 + $0x38a] sm:$0xff]
      %v3060 = vld [vmem:[%s2242 + $0x392] sm:$0xff]
      %v3061 = vld [vmem:[%s2242 + $0x3aa] sm:$0xff]
      %v3062 = vld [vmem:[%s2242 + $0x3b2] sm:$0xff]
      %v3063 = vld [vmem:[%s2242 + $0x3ca] sm:$0xff]
      %v3064 = vld [vmem:[%s2242 + $0x3d2] sm:$0xff]
      %v3065 = vld [vmem:[%s2242 + $0x3ea] sm:$0xff]
      %v3066 = vld [vmem:[%s2242 + $0x3f2] sm:$0xff]
      %v3067 = vld [vmem:[%s2242 + $0x40a] sm:$0xff]
      %v3068 = vld [vmem:[%s2242 + $0x412] sm:$0xff]
      %v3069 = vld [vmem:[%s2242 + $0x42a] sm:$0xff]
      %v3070 = vld [vmem:[%s2242 + $0x432] sm:$0xff]
      %v3071 = vld [vmem:[%s2242 + $0x44a] sm:$0xff]
      %v3072 = vld [vmem:[%s2242 + $0x452] sm:$0xff]
      %v3073 = vld [vmem:[%s2242 + $0x46a] sm:$0xff]
      %v3074 = vld [vmem:[%s2242 + $0x472] sm:$0xff]
      %3075 = vst.msk [vmem:[#allocation2 + $0x10] sm:$0xff] %vm509, %v3011
      %3076 = vst.msk [vmem:[#allocation2 + $0x28] sm:$0xff] %vm509, %v3012
      %3077 = vst.msk [vmem:[#allocation2 + $0x40] sm:$0xff] %vm509, %v3013
      %3078 = vst.msk [vmem:[#allocation2 + $0x58] sm:$0xff] %vm509, %v3014
      %3079 = vst.msk [vmem:[#allocation2 + $0x70] sm:$0xff] %vm509, %v3015
      %3080 = vst.msk [vmem:[#allocation2 + $0x88] sm:$0xff] %vm509, %v3016
      %3081 = vst.msk [vmem:[#allocation2 + $0xa0] sm:$0xff] %vm509, %v3017
      %3082 = vst.msk [vmem:[#allocation2 + $0xb8] sm:$0xff] %vm509, %v3018
      %3083 = vst.msk [vmem:[#allocation2 + $0xd0] sm:$0xff] %vm509, %v3019
      %3084 = vst.msk [vmem:[#allocation2 + $0xe8] sm:$0xff] %vm509, %v3020
      %3085 = vst.msk [vmem:[#allocation2 + $0x100] sm:$0xff] %vm509, %v3021
      %3086 = vst.msk [vmem:[#allocation2 + $0x118] sm:$0xff] %vm509, %v3022
      %3087 = vst.msk [vmem:[#allocation2 + $0x130] sm:$0xff] %vm509, %v3023
      %3088 = vst.msk [vmem:[#allocation2 + $0x148] sm:$0xff] %vm509, %v3024
      %3089 = vst.msk [vmem:[#allocation2 + $0x160] sm:$0xff] %vm509, %v3025
      %3090 = vst.msk [vmem:[#allocation2 + $0x178] sm:$0xff] %vm509, %v3026
      %3091 = vst.msk [vmem:[#allocation2 + $0x190] sm:$0xff] %vm509, %v3027
      %3092 = vst.msk [vmem:[#allocation2 + $0x1a8] sm:$0xff] %vm509, %v3028
      %3093 = vst.msk [vmem:[#allocation2 + $0x1c0] sm:$0xff] %vm509, %v3029
      %3094 = vst.msk [vmem:[#allocation2 + $0x1d8] sm:$0xff] %vm509, %v3030
      %3095 = vst.msk [vmem:[#allocation2 + $0x1f0] sm:$0xff] %vm509, %v3031
      %3096 = vst.msk [vmem:[#allocation2 + $0x208] sm:$0xff] %vm509, %v3032
      %3097 = vst.msk [vmem:[#allocation2 + $0x220] sm:$0xff] %vm509, %v3033
      %3098 = vst.msk [vmem:[#allocation2 + $0x238] sm:$0xff] %vm509, %v3034
      %3099 = vst.msk [vmem:[#allocation2 + $0x250] sm:$0xff] %vm509, %v3035
      %3100 = vst.msk [vmem:[#allocation2 + $0x268] sm:$0xff] %vm509, %v3036
      %3101 = vst.msk [vmem:[#allocation2 + $0x280] sm:$0xff] %vm509, %v3037
      %3102 = vst.msk [vmem:[#allocation2 + $0x298] sm:$0xff] %vm509, %v3038
      %3103 = vst.msk [vmem:[#allocation2 + $0x2b0] sm:$0xff] %vm509, %v3039
      %3104 = vst.msk [vmem:[#allocation2 + $0x2c8] sm:$0xff] %vm509, %v3040
      %3105 = vst.msk [vmem:[#allocation2 + $0x2e0] sm:$0xff] %vm509, %v3041
      %3106 = vst.msk [vmem:[#allocation2 + $0x2f8] sm:$0xff] %vm509, %v3042
      %3107 = vst.msk [vmem:[#allocation2 + $0x310] sm:$0xff] %vm509, %v3043
      %3108 = vst.msk [vmem:[#allocation2 + $0x328] sm:$0xff] %vm509, %v3044
      %3109 = vst.msk [vmem:[#allocation2 + $0x340] sm:$0xff] %vm509, %v3045
      %3110 = vst.msk [vmem:[#allocation2 + $0x358] sm:$0xff] %vm509, %v3046
      %3111 = vst.msk [vmem:[#allocation2 + $0x370] sm:$0xff] %vm509, %v3047
      %3112 = vst.msk [vmem:[#allocation2 + $0x388] sm:$0xff] %vm509, %v3048
      %3113 = vst.msk [vmem:[#allocation2 + $0x3a0] sm:$0xff] %vm509, %v3049
      %3114 = vst.msk [vmem:[#allocation2 + $0x3b8] sm:$0xff] %vm509, %v3050
      %3115 = vst.msk [vmem:[#allocation2 + $0x3d0] sm:$0xff] %vm509, %v3051
      %3116 = vst.msk [vmem:[#allocation2 + $0x3e8] sm:$0xff] %vm509, %v3052
      %3117 = vst.msk [vmem:[#allocation2 + $0x400] sm:$0xff] %vm509, %v3053
      %3118 = vst.msk [vmem:[#allocation2 + $0x418] sm:$0xff] %vm509, %v3054
      %3119 = vst.msk [vmem:[#allocation2 + $0x430] sm:$0xff] %vm509, %v3055
      %3120 = vst.msk [vmem:[#allocation2 + $0x448] sm:$0xff] %vm509, %v3056
      %3121 = vst.msk [vmem:[#allocation2 + $0x460] sm:$0xff] %vm509, %v3057
      %3122 = vst.msk [vmem:[#allocation2 + $0x478] sm:$0xff] %vm509, %v3058
      %3123 = vst.msk [vmem:[#allocation2 + $0x490] sm:$0xff] %vm509, %v3059
      %3124 = vst.msk [vmem:[#allocation2 + $0x4a8] sm:$0xff] %vm509, %v3060
      %3125 = vst.msk [vmem:[#allocation2 + $0x4c0] sm:$0xff] %vm509, %v3061
      %3126 = vst.msk [vmem:[#allocation2 + $0x4d8] sm:$0xff] %vm509, %v3062
      %3127 = vst.msk [vmem:[#allocation2 + $0x4f0] sm:$0xff] %vm509, %v3063
      %3128 = vst.msk [vmem:[#allocation2 + $0x508] sm:$0xff] %vm509, %v3064
      %3129 = vst.msk [vmem:[#allocation2 + $0x520] sm:$0xff] %vm509, %v3065
      %3130 = vst.msk [vmem:[#allocation2 + $0x538] sm:$0xff] %vm509, %v3066
      %3131 = vst.msk [vmem:[#allocation2 + $0x550] sm:$0xff] %vm509, %v3067
      %3132 = vst.msk [vmem:[#allocation2 + $0x568] sm:$0xff] %vm509, %v3068
      %3133 = vst.msk [vmem:[#allocation2 + $0x580] sm:$0xff] %vm509, %v3069
      %3134 = vst.msk [vmem:[#allocation2 + $0x598] sm:$0xff] %vm509, %v3070
      %3135 = vst.msk [vmem:[#allocation2 + $0x5b0] sm:$0xff] %vm509, %v3071
      %3136 = vst.msk [vmem:[#allocation2 + $0x5c8] sm:$0xff] %vm509, %v3072
      %3137 = vst.msk [vmem:[#allocation2 + $0x5e0] sm:$0xff] %vm509, %v3073
      %3138 = vst.msk [vmem:[#allocation2 + $0x5f8] sm:$0xff] %vm509, %v3074
      %v3139 = vld [vmem:[#allocation2] sm:$0xff]
      %v3140 = vld [vmem:[#allocation2 + $0x8] sm:$0xff]
      %v3141 = vld [vmem:[#allocation2 + $0x10] sm:$0xff]
      %v3142 = vld [vmem:[#allocation2 + $0x18] sm:$0xff]
      %v3143 = vld [vmem:[#allocation2 + $0x20] sm:$0xff]
      %v3144 = vld [vmem:[#allocation2 + $0x28] sm:$0xff]
      %v3145 = vld [vmem:[#allocation2 + $0x30] sm:$0xff]
      %v3146 = vld [vmem:[#allocation2 + $0x38] sm:$0xff]
      %v3147 = vld [vmem:[#allocation2 + $0x40] sm:$0xff]
      %v3148 = vld [vmem:[#allocation2 + $0x48] sm:$0xff]
      %v3149 = vld [vmem:[#allocation2 + $0x50] sm:$0xff]
      %v3150 = vld [vmem:[#allocation2 + $0x58] sm:$0xff]
      %v3151 = vld [vmem:[#allocation2 + $0x60] sm:$0xff]
      %v3152 = vld [vmem:[#allocation2 + $0x68] sm:$0xff]
      %v3153 = vld [vmem:[#allocation2 + $0x70] sm:$0xff]
      %v3154 = vld [vmem:[#allocation2 + $0x78] sm:$0xff]
      %v3155 = vld [vmem:[#allocation2 + $0x80] sm:$0xff]
      %v3156 = vld [vmem:[#allocation2 + $0x88] sm:$0xff]
      %v3157 = vld [vmem:[#allocation2 + $0x90] sm:$0xff]
      %v3158 = vld [vmem:[#allocation2 + $0x98] sm:$0xff]
      %v3159 = vld [vmem:[#allocation2 + $0xa0] sm:$0xff]
      %v3160 = vld [vmem:[#allocation2 + $0xa8] sm:$0xff]
      %v3161 = vld [vmem:[#allocation2 + $0xb0] sm:$0xff]
      %v3162 = vld [vmem:[#allocation2 + $0xb8] sm:$0xff]
      %v3163 = vld [vmem:[#allocation2 + $0xc0] sm:$0xff]
      %v3164 = vld [vmem:[#allocation2 + $0xc8] sm:$0xff]
      %v3165 = vld [vmem:[#allocation2 + $0xd0] sm:$0xff]
      %v3166 = vld [vmem:[#allocation2 + $0xd8] sm:$0xff]
      %v3167 = vld [vmem:[#allocation2 + $0xe0] sm:$0xff]
      %v3168 = vld [vmem:[#allocation2 + $0xe8] sm:$0xff]
      %v3169 = vld [vmem:[#allocation2 + $0xf0] sm:$0xff]
      %v3170 = vld [vmem:[#allocation2 + $0xf8] sm:$0xff]
      %v3171 = vld [vmem:[#allocation2 + $0x100] sm:$0xff]
      %v3172 = vld [vmem:[#allocation2 + $0x108] sm:$0xff]
      %v3173 = vld [vmem:[#allocation2 + $0x110] sm:$0xff]
      %v3174 = vld [vmem:[#allocation2 + $0x118] sm:$0xff]
      %v3175 = vld [vmem:[#allocation2 + $0x120] sm:$0xff]
      %v3176 = vld [vmem:[#allocation2 + $0x128] sm:$0xff]
      %v3177 = vld [vmem:[#allocation2 + $0x130] sm:$0xff]
      %v3178 = vld [vmem:[#allocation2 + $0x138] sm:$0xff]
      %v3179 = vld [vmem:[#allocation2 + $0x140] sm:$0xff]
      %v3180 = vld [vmem:[#allocation2 + $0x148] sm:$0xff]
      %v3181 = vld [vmem:[#allocation2 + $0x150] sm:$0xff]
      %v3182 = vld [vmem:[#allocation2 + $0x158] sm:$0xff]
      %v3183 = vld [vmem:[#allocation2 + $0x160] sm:$0xff]
      %v3184 = vld [vmem:[#allocation2 + $0x168] sm:$0xff]
      %v3185 = vld [vmem:[#allocation2 + $0x170] sm:$0xff]
      %v3186 = vld [vmem:[#allocation2 + $0x178] sm:$0xff]
      %v3187 = vld [vmem:[#allocation2 + $0x180] sm:$0xff]
      %v3188 = vld [vmem:[#allocation2 + $0x188] sm:$0xff]
      %v3189 = vld [vmem:[#allocation2 + $0x190] sm:$0xff]
      %v3190 = vld [vmem:[#allocation2 + $0x198] sm:$0xff]
      %v3191 = vld [vmem:[#allocation2 + $0x1a0] sm:$0xff]
      %v3192 = vld [vmem:[#allocation2 + $0x1a8] sm:$0xff]
      %v3193 = vld [vmem:[#allocation2 + $0x1b0] sm:$0xff]
      %v3194 = vld [vmem:[#allocation2 + $0x1b8] sm:$0xff]
      %v3195 = vld [vmem:[#allocation2 + $0x1c0] sm:$0xff]
      %v3196 = vld [vmem:[#allocation2 + $0x1c8] sm:$0xff]
      %v3197 = vld [vmem:[#allocation2 + $0x1d0] sm:$0xff]
      %v3198 = vld [vmem:[#allocation2 + $0x1d8] sm:$0xff]
      %v3199 = vld [vmem:[#allocation2 + $0x1e0] sm:$0xff]
      %v3200 = vld [vmem:[#allocation2 + $0x1e8] sm:$0xff]
      %v3201 = vld [vmem:[#allocation2 + $0x1f0] sm:$0xff]
      %v3202 = vld [vmem:[#allocation2 + $0x1f8] sm:$0xff]
      %v3203 = vld [vmem:[#allocation2 + $0x200] sm:$0xff]
      %v3204 = vld [vmem:[#allocation2 + $0x208] sm:$0xff]
      %v3205 = vld [vmem:[#allocation2 + $0x210] sm:$0xff]
      %v3206 = vld [vmem:[#allocation2 + $0x218] sm:$0xff]
      %v3207 = vld [vmem:[#allocation2 + $0x220] sm:$0xff]
      %v3208 = vld [vmem:[#allocation2 + $0x228] sm:$0xff]
      %v3209 = vld [vmem:[#allocation2 + $0x230] sm:$0xff]
      %v3210 = vld [vmem:[#allocation2 + $0x238] sm:$0xff]
      %v3211 = vld [vmem:[#allocation2 + $0x240] sm:$0xff]
      %v3212 = vld [vmem:[#allocation2 + $0x248] sm:$0xff]
      %v3213 = vld [vmem:[#allocation2 + $0x250] sm:$0xff]
      %v3214 = vld [vmem:[#allocation2 + $0x258] sm:$0xff]
      %v3215 = vld [vmem:[#allocation2 + $0x260] sm:$0xff]
      %v3216 = vld [vmem:[#allocation2 + $0x268] sm:$0xff]
      %v3217 = vld [vmem:[#allocation2 + $0x270] sm:$0xff]
      %v3218 = vld [vmem:[#allocation2 + $0x278] sm:$0xff]
      %v3219 = vld [vmem:[#allocation2 + $0x280] sm:$0xff]
      %v3220 = vld [vmem:[#allocation2 + $0x288] sm:$0xff]
      %v3221 = vld [vmem:[#allocation2 + $0x290] sm:$0xff]
      %v3222 = vld [vmem:[#allocation2 + $0x298] sm:$0xff]
      %v3223 = vld [vmem:[#allocation2 + $0x2a0] sm:$0xff]
      %v3224 = vld [vmem:[#allocation2 + $0x2a8] sm:$0xff]
      %v3225 = vld [vmem:[#allocation2 + $0x2b0] sm:$0xff]
      %v3226 = vld [vmem:[#allocation2 + $0x2b8] sm:$0xff]
      %v3227 = vld [vmem:[#allocation2 + $0x2c0] sm:$0xff]
      %v3228 = vld [vmem:[#allocation2 + $0x2c8] sm:$0xff]
      %v3229 = vld [vmem:[#allocation2 + $0x2d0] sm:$0xff]
      %v3230 = vld [vmem:[#allocation2 + $0x2d8] sm:$0xff]
      %v3231 = vld [vmem:[#allocation2 + $0x2e0] sm:$0xff]
      %v3232 = vld [vmem:[#allocation2 + $0x2e8] sm:$0xff]
      %v3233 = vld [vmem:[#allocation2 + $0x2f0] sm:$0xff]
      %v3234 = vld [vmem:[#allocation2 + $0x2f8] sm:$0xff]
      %v3235 = vld [vmem:[#allocation2 + $0x300] sm:$0xff]
      %v3236 = vld [vmem:[#allocation2 + $0x308] sm:$0xff]
      %v3237 = vld [vmem:[#allocation2 + $0x310] sm:$0xff]
      %v3238 = vld [vmem:[#allocation2 + $0x318] sm:$0xff]
      %v3239 = vld [vmem:[#allocation2 + $0x320] sm:$0xff]
      %v3240 = vld [vmem:[#allocation2 + $0x328] sm:$0xff]
      %v3241 = vld [vmem:[#allocation2 + $0x330] sm:$0xff]
      %v3242 = vld [vmem:[#allocation2 + $0x338] sm:$0xff]
      %v3243 = vld [vmem:[#allocation2 + $0x340] sm:$0xff]
      %v3244 = vld [vmem:[#allocation2 + $0x348] sm:$0xff]
      %v3245 = vld [vmem:[#allocation2 + $0x350] sm:$0xff]
      %v3246 = vld [vmem:[#allocation2 + $0x358] sm:$0xff]
      %v3247 = vld [vmem:[#allocation2 + $0x360] sm:$0xff]
      %v3248 = vld [vmem:[#allocation2 + $0x368] sm:$0xff]
      %v3249 = vld [vmem:[#allocation2 + $0x370] sm:$0xff]
      %v3250 = vld [vmem:[#allocation2 + $0x378] sm:$0xff]
      %v3251 = vld [vmem:[#allocation2 + $0x380] sm:$0xff]
      %v3252 = vld [vmem:[#allocation2 + $0x388] sm:$0xff]
      %v3253 = vld [vmem:[#allocation2 + $0x390] sm:$0xff]
      %v3254 = vld [vmem:[#allocation2 + $0x398] sm:$0xff]
      %v3255 = vld [vmem:[#allocation2 + $0x3a0] sm:$0xff]
      %v3256 = vld [vmem:[#allocation2 + $0x3a8] sm:$0xff]
      %v3257 = vld [vmem:[#allocation2 + $0x3b0] sm:$0xff]
      %v3258 = vld [vmem:[#allocation2 + $0x3b8] sm:$0xff]
      %v3259 = vld [vmem:[#allocation2 + $0x3c0] sm:$0xff]
      %v3260 = vld [vmem:[#allocation2 + $0x3c8] sm:$0xff]
      %v3261 = vld [vmem:[#allocation2 + $0x3d0] sm:$0xff]
      %v3262 = vld [vmem:[#allocation2 + $0x3d8] sm:$0xff]
      %v3263 = vld [vmem:[#allocation2 + $0x3e0] sm:$0xff]
      %v3264 = vld [vmem:[#allocation2 + $0x3e8] sm:$0xff]
      %v3265 = vld [vmem:[#allocation2 + $0x3f0] sm:$0xff]
      %v3266 = vld [vmem:[#allocation2 + $0x3f8] sm:$0xff]
      %v3267 = vld [vmem:[#allocation2 + $0x400] sm:$0xff]
      %v3268 = vld [vmem:[#allocation2 + $0x408] sm:$0xff]
      %v3269 = vld [vmem:[#allocation2 + $0x410] sm:$0xff]
      %v3270 = vld [vmem:[#allocation2 + $0x418] sm:$0xff]
      %v3271 = vld [vmem:[#allocation2 + $0x420] sm:$0xff]
      %v3272 = vld [vmem:[#allocation2 + $0x428] sm:$0xff]
      %v3273 = vld [vmem:[#allocation2 + $0x430] sm:$0xff]
      %v3274 = vld [vmem:[#allocation2 + $0x438] sm:$0xff]
      %v3275 = vld [vmem:[#allocation2 + $0x440] sm:$0xff]
      %v3276 = vld [vmem:[#allocation2 + $0x448] sm:$0xff]
      %v3277 = vld [vmem:[#allocation2 + $0x450] sm:$0xff]
      %v3278 = vld [vmem:[#allocation2 + $0x458] sm:$0xff]
      %v3279 = vld [vmem:[#allocation2 + $0x460] sm:$0xff]
      %v3280 = vld [vmem:[#allocation2 + $0x468] sm:$0xff]
      %v3281 = vld [vmem:[#allocation2 + $0x470] sm:$0xff]
      %v3282 = vld [vmem:[#allocation2 + $0x478] sm:$0xff]
      %v3283 = vld [vmem:[#allocation2 + $0x480] sm:$0xff]
      %v3284 = vld [vmem:[#allocation2 + $0x488] sm:$0xff]
      %v3285 = vld [vmem:[#allocation2 + $0x490] sm:$0xff]
      %v3286 = vld [vmem:[#allocation2 + $0x498] sm:$0xff]
      %v3287 = vld [vmem:[#allocation2 + $0x4a0] sm:$0xff]
      %v3288 = vld [vmem:[#allocation2 + $0x4a8] sm:$0xff]
      %v3289 = vld [vmem:[#allocation2 + $0x4b0] sm:$0xff]
      %v3290 = vld [vmem:[#allocation2 + $0x4b8] sm:$0xff]
      %v3291 = vld [vmem:[#allocation2 + $0x4c0] sm:$0xff]
      %v3292 = vld [vmem:[#allocation2 + $0x4c8] sm:$0xff]
      %v3293 = vld [vmem:[#allocation2 + $0x4d0] sm:$0xff]
      %v3294 = vld [vmem:[#allocation2 + $0x4d8] sm:$0xff]
      %v3295 = vld [vmem:[#allocation2 + $0x4e0] sm:$0xff]
      %v3296 = vld [vmem:[#allocation2 + $0x4e8] sm:$0xff]
      %v3297 = vld [vmem:[#allocation2 + $0x4f0] sm:$0xff]
      %v3298 = vld [vmem:[#allocation2 + $0x4f8] sm:$0xff]
      %v3299 = vld [vmem:[#allocation2 + $0x500] sm:$0xff]
      %v3300 = vld [vmem:[#allocation2 + $0x508] sm:$0xff]
      %v3301 = vld [vmem:[#allocation2 + $0x510] sm:$0xff]
      %v3302 = vld [vmem:[#allocation2 + $0x518] sm:$0xff]
      %v3303 = vld [vmem:[#allocation2 + $0x520] sm:$0xff]
      %v3304 = vld [vmem:[#allocation2 + $0x528] sm:$0xff]
      %v3305 = vld [vmem:[#allocation2 + $0x530] sm:$0xff]
      %v3306 = vld [vmem:[#allocation2 + $0x538] sm:$0xff]
      %v3307 = vld [vmem:[#allocation2 + $0x540] sm:$0xff]
      %v3308 = vld [vmem:[#allocation2 + $0x548] sm:$0xff]
      %v3309 = vld [vmem:[#allocation2 + $0x550] sm:$0xff]
      %v3310 = vld [vmem:[#allocation2 + $0x558] sm:$0xff]
      %v3311 = vld [vmem:[#allocation2 + $0x560] sm:$0xff]
      %v3312 = vld [vmem:[#allocation2 + $0x568] sm:$0xff]
      %v3313 = vld [vmem:[#allocation2 + $0x570] sm:$0xff]
      %v3314 = vld [vmem:[#allocation2 + $0x578] sm:$0xff]
      %v3315 = vld [vmem:[#allocation2 + $0x580] sm:$0xff]
      %v3316 = vld [vmem:[#allocation2 + $0x588] sm:$0xff]
      %v3317 = vld [vmem:[#allocation2 + $0x590] sm:$0xff]
      %v3318 = vld [vmem:[#allocation2 + $0x598] sm:$0xff]
      %v3319 = vld [vmem:[#allocation2 + $0x5a0] sm:$0xff]
      %v3320 = vld [vmem:[#allocation2 + $0x5a8] sm:$0xff]
      %v3321 = vld [vmem:[#allocation2 + $0x5b0] sm:$0xff]
      %v3322 = vld [vmem:[#allocation2 + $0x5b8] sm:$0xff]
      %v3323 = vld [vmem:[#allocation2 + $0x5c0] sm:$0xff]
      %v3324 = vld [vmem:[#allocation2 + $0x5c8] sm:$0xff]
      %v3325 = vld [vmem:[#allocation2 + $0x5d0] sm:$0xff]
      %v3326 = vld [vmem:[#allocation2 + $0x5d8] sm:$0xff]
      %v3327 = vld [vmem:[#allocation2 + $0x5e0] sm:$0xff]
      %v3328 = vld [vmem:[#allocation2 + $0x5e8] sm:$0xff]
      %v3329 = vld [vmem:[#allocation2 + $0x5f0] sm:$0xff]
      %v3330 = vld [vmem:[#allocation2 + $0x5f8] sm:$0xff]
      %v3331 = vld [vmem:[%s1] sm:$0xff]
      %v3332 = vld [vmem:[%s1 + $0x8] sm:$0xff]
      %v3333 = vld [vmem:[%s1 + $0x10] sm:$0xff]
      %v3334 = vld [vmem:[%s1 + $0x18] sm:$0xff]
      %v3335 = vld [vmem:[%s1 + $0x20] sm:$0xff]
      %v3336 = vld [vmem:[%s1 + $0x28] sm:$0xff]
      %v3337 = vld [vmem:[%s1 + $0x30] sm:$0xff]
      %v3338 = vld [vmem:[%s1 + $0x38] sm:$0xff]
      %v3339 = vld [vmem:[%s1 + $0x40] sm:$0xff]
      %v3340 = vld [vmem:[%s1 + $0x48] sm:$0xff]
      %v3341 = vld [vmem:[%s1 + $0x50] sm:$0xff]
      %v3342 = vld [vmem:[%s1 + $0x58] sm:$0xff]
      %v3343 = vld [vmem:[%s1 + $0x60] sm:$0xff]
      %v3344 = vld [vmem:[%s1 + $0x68] sm:$0xff]
      %v3345 = vld [vmem:[%s1 + $0x70] sm:$0xff]
      %v3346 = vld [vmem:[%s1 + $0x78] sm:$0xff]
      %v3347 = vld [vmem:[%s1 + $0x80] sm:$0xff]
      %v3348 = vld [vmem:[%s1 + $0x88] sm:$0xff]
      %v3349 = vld [vmem:[%s1 + $0x90] sm:$0xff]
      %v3350 = vld [vmem:[%s1 + $0x98] sm:$0xff]
      %v3351 = vld [vmem:[%s1 + $0xa0] sm:$0xff]
      %v3352 = vld [vmem:[%s1 + $0xa8] sm:$0xff]
      %v3353 = vld [vmem:[%s1 + $0xb0] sm:$0xff]
      %v3354 = vld [vmem:[%s1 + $0xb8] sm:$0xff]
      %v3355 = vld [vmem:[%s1 + $0xc0] sm:$0xff]
      %v3356 = vld [vmem:[%s1 + $0xc8] sm:$0xff]
      %v3357 = vld [vmem:[%s1 + $0xd0] sm:$0xff]
      %v3358 = vld [vmem:[%s1 + $0xd8] sm:$0xff]
      %v3359 = vld [vmem:[%s1 + $0xe0] sm:$0xff]
      %v3360 = vld [vmem:[%s1 + $0xe8] sm:$0xff]
      %v3361 = vld [vmem:[%s1 + $0xf0] sm:$0xff]
      %v3362 = vld [vmem:[%s1 + $0xf8] sm:$0xff]
      %v3363 = vld [vmem:[%s1 + $0x100] sm:$0xff]
      %v3364 = vld [vmem:[%s1 + $0x108] sm:$0xff]
      %v3365 = vld [vmem:[%s1 + $0x110] sm:$0xff]
      %v3366 = vld [vmem:[%s1 + $0x118] sm:$0xff]
      %v3367 = vld [vmem:[%s255] sm:$0xff]
      %v3368 = vld [vmem:[%s255 + $0x8] sm:$0xff]
      %v3369 = vld [vmem:[%s255 + $0x10] sm:$0xff]
      %v3370 = vld [vmem:[%s255 + $0x18] sm:$0xff]
      %v3371 = vld [vmem:[%s255 + $0x20] sm:$0xff]
      %v3372 = vld [vmem:[%s255 + $0x28] sm:$0xff]
      %v3373 = vld [vmem:[%s255 + $0x30] sm:$0xff]
      %v3374 = vld [vmem:[%s255 + $0x38] sm:$0xff]
      %v3375 = vld [vmem:[%s255 + $0x40] sm:$0xff]
      %v3376 = vld [vmem:[%s255 + $0x48] sm:$0xff]
      %v3377 = vld [vmem:[%s255 + $0x50] sm:$0xff]
      %v3378 = vld [vmem:[%s255 + $0x58] sm:$0xff]
      %v3379 = vld [vmem:[%s255 + $0x60] sm:$0xff]
      %v3380 = vld [vmem:[%s255 + $0x68] sm:$0xff]
      %v3381 = vld [vmem:[%s255 + $0x70] sm:$0xff]
      %v3382 = vld [vmem:[%s255 + $0x78] sm:$0xff]
      %v3383 = vld [vmem:[%s255 + $0x80] sm:$0xff]
      %v3384 = vld [vmem:[%s255 + $0x88] sm:$0xff]
      %v3385 = vld [vmem:[%s255 + $0x90] sm:$0xff]
      %v3386 = vld [vmem:[%s255 + $0x98] sm:$0xff]
      %v3387 = vld [vmem:[%s255 + $0xa0] sm:$0xff]
      %v3388 = vld [vmem:[%s255 + $0xa8] sm:$0xff]
      %v3389 = vld [vmem:[%s255 + $0xb0] sm:$0xff]
      %v3390 = vld [vmem:[%s255 + $0xb8] sm:$0xff]
      %v3391 = vld [vmem:[%s255 + $0xc0] sm:$0xff]
      %v3392 = vld [vmem:[%s255 + $0xc8] sm:$0xff]
      %v3393 = vld [vmem:[%s255 + $0xd0] sm:$0xff]
      %v3394 = vld [vmem:[%s255 + $0xd8] sm:$0xff]
      %v3395 = vld [vmem:[%s255 + $0xe0] sm:$0xff]
      %v3396 = vld [vmem:[%s255 + $0xe8] sm:$0xff]
      %v3397 = vld [vmem:[%s255 + $0xf0] sm:$0xff]
      %v3398 = vld [vmem:[%s255 + $0xf8] sm:$0xff]
      %v3399 = vld [vmem:[%s255 + $0x100] sm:$0xff]
      %v3400 = vld [vmem:[%s255 + $0x108] sm:$0xff]
      %v3401 = vld [vmem:[%s255 + $0x110] sm:$0xff]
      %v3402 = vld [vmem:[%s255 + $0x118] sm:$0xff]
      %v3403 = vld [vmem:[%s255 + $0x120] sm:$0xff]
      %v3404 = vld [vmem:[%s255 + $0x128] sm:$0xff]
      %v3405 = vld [vmem:[%s255 + $0x130] sm:$0xff]
      %v3406 = vld [vmem:[%s255 + $0x138] sm:$0xff]
      %v3407 = vld [vmem:[%s255 + $0x140] sm:$0xff]
      %v3408 = vld [vmem:[%s255 + $0x148] sm:$0xff]
      %v3409 = vld [vmem:[%s255 + $0x150] sm:$0xff]
      %v3410 = vld [vmem:[%s255 + $0x158] sm:$0xff]
      %v3411 = vld [vmem:[%s255 + $0x160] sm:$0xff]
      %v3412 = vld [vmem:[%s255 + $0x168] sm:$0xff]
      %v3413 = vld [vmem:[%s255 + $0x170] sm:$0xff]
      %v3414 = vld [vmem:[%s255 + $0x178] sm:$0xff]
      %v3415 = vld [vmem:[%s255 + $0x180] sm:$0xff]
      %v3416 = vld [vmem:[%s255 + $0x188] sm:$0xff]
      %v3417 = vld [vmem:[%s255 + $0x190] sm:$0xff]
      %v3418 = vld [vmem:[%s255 + $0x198] sm:$0xff]
      %v3419 = vld [vmem:[%s255 + $0x1a0] sm:$0xff]
      %v3420 = vld [vmem:[%s255 + $0x1a8] sm:$0xff]
      %v3421 = vld [vmem:[%s255 + $0x1b0] sm:$0xff]
      %v3422 = vld [vmem:[%s255 + $0x1b8] sm:$0xff]
      %v3423 = vld [vmem:[%s255 + $0x1c0] sm:$0xff]
      %v3424 = vld [vmem:[%s255 + $0x1c8] sm:$0xff]
      %v3425 = vld [vmem:[%s255 + $0x1d0] sm:$0xff]
      %v3426 = vld [vmem:[%s255 + $0x1d8] sm:$0xff]
      %v3427 = vld [vmem:[%s255 + $0x1e0] sm:$0xff]
      %v3428 = vld [vmem:[%s255 + $0x1e8] sm:$0xff]
      %v3429 = vld [vmem:[%s255 + $0x1f0] sm:$0xff]
      %v3430 = vld [vmem:[%s255 + $0x1f8] sm:$0xff]
      %v3431 = vld [vmem:[%s2] sm:$0xff]
      %v3432 = vld [vmem:[%s2 + $0x8] sm:$0xff]
      %v3433 = vld [vmem:[%s2 + $0x10] sm:$0x7]
      %vm3434 = vcmask 154624
      %v3436 = vsel %vm3434, %v3367, 0
      %v3439 = vsel %vm3434, %v3368, 0
      %v3442 = vsel %vm3434, %v3369, 0
      %v3445 = vsel %vm3434, %v3370, 0
      %v3448 = vsel %vm3434, %v3371, 0
      %v3451 = vsel %vm3434, %v3372, 0
      %v3454 = vsel %vm3434, %v3373, 0
      %v3457 = vsel %vm3434, %v3374, 0
      %v3460 = vsel %vm3434, %v3375, 0
      %v3463 = vsel %vm3434, %v3376, 0
      %v3466 = vsel %vm3434, %v3377, 0
      %v3469 = vsel %vm3434, %v3378, 0
      %v3472 = vsel %vm3434, %v3379, 0
      %v3475 = vsel %vm3434, %v3380, 0
      %v3478 = vsel %vm3434, %v3381, 0
      %v3481 = vsel %vm3434, %v3382, 0
      %v3484 = vsel %vm3434, %v3383, 0
      %v3487 = vsel %vm3434, %v3384, 0
      %v3490 = vsel %vm3434, %v3385, 0
      %v3493 = vsel %vm3434, %v3386, 0
      %v3496 = vsel %vm3434, %v3387, 0
      %v3499 = vsel %vm3434, %v3388, 0
      %v3502 = vsel %vm3434, %v3389, 0
      %v3505 = vsel %vm3434, %v3390, 0
      %v3508 = vsel %vm3434, %v3391, 0
      %v3511 = vsel %vm3434, %v3392, 0
      %v3514 = vsel %vm3434, %v3393, 0
      %v3517 = vsel %vm3434, %v3394, 0
      %v3520 = vsel %vm3434, %v3395, 0
      %v3523 = vsel %vm3434, %v3396, 0
      %v3526 = vsel %vm3434, %v3397, 0
      %v3529 = vsel %vm3434, %v3398, 0
      %v3532 = vsel %vm3434, %v3399, 0
      %v3535 = vsel %vm3434, %v3400, 0
      %v3538 = vsel %vm3434, %v3401, 0
      %v3541 = vsel %vm3434, %v3402, 0
      %v3544 = vsel %vm3434, %v3403, 0
      %v3547 = vsel %vm3434, %v3404, 0
      %v3550 = vsel %vm3434, %v3405, 0
      %v3553 = vsel %vm3434, %v3406, 0
      %v3556 = vsel %vm3434, %v3407, 0
      %v3559 = vsel %vm3434, %v3408, 0
      %v3562 = vsel %vm3434, %v3409, 0
      %v3565 = vsel %vm3434, %v3410, 0
      %v3568 = vsel %vm3434, %v3411, 0
      %v3571 = vsel %vm3434, %v3412, 0
      %v3574 = vsel %vm3434, %v3413, 0
      %v3577 = vsel %vm3434, %v3414, 0
      %v3580 = vsel %vm3434, %v3415, 0
      %v3583 = vsel %vm3434, %v3416, 0
      %v3586 = vsel %vm3434, %v3417, 0
      %v3589 = vsel %vm3434, %v3418, 0
      %v3592 = vsel %vm3434, %v3419, 0
      %v3595 = vsel %vm3434, %v3420, 0
      %v3598 = vsel %vm3434, %v3421, 0
      %v3601 = vsel %vm3434, %v3422, 0
      %v3604 = vsel %vm3434, %v3423, 0
      %v3607 = vsel %vm3434, %v3424, 0
      %v3610 = vsel %vm3434, %v3425, 0
      %v3613 = vsel %vm3434, %v3426, 0
      %v3616 = vsel %vm3434, %v3427, 0
      %v3619 = vsel %vm3434, %v3428, 0
      %v3622 = vsel %vm3434, %v3429, 0
      %v3625 = vsel %vm3434, %v3430, 0
      %vm3627 = vcmask 1042432
      %v3629 = vsel %vm3627, %v3433, 0
      %3631 = vmatprep.subr.mxu0 0.0
      %3632 = vmatpush1.msra.mxu0 0.0
      %3633 = vmatprep.subr.mxu0 0.0
      %3634 = vmatpush1.msra.mxu0 0.0
      %3635 = vmatprep.subr.mxu0 0.0
      %3636 = vmatpush1.msra.mxu0 0.0
      %3637 = vmatprep.subr.mxu0 0.0
      %3638 = vmatpush1.msra.mxu0 0.0
      %3639 = vmatprep.subr.mxu0 0.0
      %3640 = vmatpush1.msra.mxu0 0.0
      %3641 = vmatprep.subr.mxu0 0.0
      %3642 = vmatpush1.msra.mxu0 0.0
      %3643 = vmatprep.subr.mxu0 0.0
      %3644 = vmatpush1.msra.mxu0 0.0
      %3645 = vmatprep.subr.mxu0 0.0
      %3646 = vmatpush1.msra.mxu0 0.0
      %3647 = vmatprep.subr.mxu0 0.0
      %3648 = vmatpush1.msra.mxu0 0.0
      %3649 = vmatprep.subr.mxu0 0.0
      %3650 = vmatpush1.msra.mxu0 0.0
      %3651 = vmatprep.subr.mxu0 0.0
      %3652 = vmatpush1.msra.mxu0 0.0
      %3653 = vmatprep.subr.mxu0 0.0
      %3654 = vmatpush1.msra.mxu0 0.0
      %3655 = vmatprep.subr.mxu0 0.0
      %3656 = vmatpush1.msra.mxu0 0.0
      %3657 = vmatprep.subr.mxu0 0.0
      %3658 = vmatpush1.msra.mxu0 %v3629
      %3659 = vmatprep.subr.mxu0 0.0
      %3660 = vmatpush1.msra.mxu0 %v3432
      %3661 = vmatprep.subr.mxu0 0.0
      %3662 = vmatpush1.msra.mxu0 %v3431
      %3663 = vmatprep.subr.mxu0 0.0
      %3664 = vmatpush2.msra.mxu0 0.0
      %3665 = vmatprep.subr.mxu0 0.0
      %3666 = vmatpush2.msra.mxu0 0.0
      %3667 = vmatprep.subr.mxu0 0.0
      %3668 = vmatpush2.msra.mxu0 0.0
      %3669 = vmatprep.subr.mxu0 0.0
      %3670 = vmatpush2.msra.mxu0 0.0
      %3671 = vmatprep.subr.mxu0 0.0
      %3672 = vmatpush2.msra.mxu0 0.0
      %3673 = vmatprep.subr.mxu0 0.0
      %3674 = vmatpush2.msra.mxu0 0.0
      %3675 = vmatprep.subr.mxu0 0.0
      %3676 = vmatpush2.msra.mxu0 0.0
      %3677 = vmatprep.subr.mxu0 0.0
      %3678 = vmatpush2.msra.mxu0 0.0
      %3679 = vmatprep.subr.mxu0 0.0
      %3680 = vmatpush2.msra.mxu0 0.0
      %3681 = vmatprep.subr.mxu0 0.0
      %3682 = vmatpush2.msra.mxu0 0.0
      %3683 = vmatprep.subr.mxu0 0.0
      %3684 = vmatpush2.msra.mxu0 0.0
      %3685 = vmatprep.subr.mxu0 0.0
      %3686 = vmatpush2.msra.mxu0 0.0
      %3687 = vmatprep.subr.mxu0 0.0
      %3688 = vmatpush2.msra.mxu0 0.0
      %3689 = vmatprep.subr.mxu0 0.0
      %3690 = vmatpush2.msra.mxu0 0.0
      %3691 = vmatprep.subr.mxu0 0.0
      %3692 = vmatpush2.msra.mxu0 0.0
      %3693 = vmatprep.subr.mxu0 0.0
      %3694 = vmatpush2.msra.mxu0 0.0
      %3695 = vmatprep.mubr.f32.mxu0 0.0
      %3696 = vmatmul.mubr.f32.gmra.mxu0 %v3436
      %v3697 = vpop.f32.mrf.mxu0
      %v3698 = vadd.f32 0.0, %v3697
      %v3699 = vpop.f32.mrf.mxu0
      %3700 = vmatprep.mubr.f32.mxu0 0.0
      %3701 = vmatmul.mubr.f32.gmra.mxu0 %v3439
      %v3702 = vpop.f32.mrf.mxu0
      %v3703 = vadd.f32 0.0, %v3702
      %v3704 = vpop.f32.mrf.mxu0
      %3705 = vmatprep.mubr.f32.mxu0 0.0
      %3706 = vmatmul.mubr.f32.gmra.mxu0 %v3442
      %v3707 = vpop.f32.mrf.mxu0
      %v3708 = vadd.f32 0.0, %v3707
      %v3709 = vpop.f32.mrf.mxu0
      %3710 = vmatprep.mubr.f32.mxu0 0.0
      %3711 = vmatmul.mubr.f32.gmra.mxu0 %v3445
      %v3712 = vpop.f32.mrf.mxu0
      %v3713 = vadd.f32 0.0, %v3712
      %v3714 = vpop.f32.mrf.mxu0
      %3715 = vmatprep.mubr.f32.mxu0 0.0
      %3716 = vmatmul.mubr.f32.gmra.mxu0 %v3448
      %v3717 = vpop.f32.mrf.mxu0
      %v3718 = vadd.f32 0.0, %v3717
      %v3719 = vpop.f32.mrf.mxu0
      %3720 = vmatprep.mubr.f32.mxu0 0.0
      %3721 = vmatmul.mubr.f32.gmra.mxu0 %v3451
      %v3722 = vpop.f32.mrf.mxu0
      %v3723 = vadd.f32 0.0, %v3722
      %v3724 = vpop.f32.mrf.mxu0
      %3725 = vmatprep.mubr.f32.mxu0 0.0
      %3726 = vmatmul.mubr.f32.gmra.mxu0 %v3454
      %v3727 = vpop.f32.mrf.mxu0
      %v3728 = vadd.f32 0.0, %v3727
      %v3729 = vpop.f32.mrf.mxu0
      %3730 = vmatprep.mubr.f32.mxu0 0.0
      %3731 = vmatmul.mubr.f32.gmra.mxu0 %v3457
      %v3732 = vpop.f32.mrf.mxu0
      %v3733 = vadd.f32 0.0, %v3732
      %v3734 = vpop.f32.mrf.mxu0
      %3735 = vmatprep.mubr.f32.mxu0 0.0
      %3736 = vmatmul.mubr.f32.gmra.mxu0 %v3460
      %v3737 = vpop.f32.mrf.mxu0
      %v3738 = vadd.f32 0.0, %v3737
      %v3739 = vpop.f32.mrf.mxu0
      %3740 = vmatprep.mubr.f32.mxu0 0.0
      %3741 = vmatmul.mubr.f32.gmra.mxu0 %v3463
      %v3742 = vpop.f32.mrf.mxu0
      %v3743 = vadd.f32 0.0, %v3742
      %v3744 = vpop.f32.mrf.mxu0
      %3745 = vmatprep.mubr.f32.mxu0 0.0
      %3746 = vmatmul.mubr.f32.gmra.mxu0 %v3466
      %v3747 = vpop.f32.mrf.mxu0
      %v3748 = vadd.f32 0.0, %v3747
      %v3749 = vpop.f32.mrf.mxu0
      %3750 = vmatprep.mubr.f32.mxu0 0.0
      %3751 = vmatmul.mubr.f32.gmra.mxu0 %v3469
      %v3752 = vpop.f32.mrf.mxu0
      %v3753 = vadd.f32 0.0, %v3752
      %v3754 = vpop.f32.mrf.mxu0
      %3755 = vmatprep.mubr.f32.mxu0 0.0
      %3756 = vmatmul.mubr.f32.gmra.mxu0 %v3472
      %v3757 = vpop.f32.mrf.mxu0
      %v3758 = vadd.f32 0.0, %v3757
      %v3759 = vpop.f32.mrf.mxu0
      %3760 = vmatprep.mubr.f32.mxu0 0.0
      %3761 = vmatmul.mubr.f32.gmra.mxu0 %v3475
      %v3762 = vpop.f32.mrf.mxu0
      %v3763 = vadd.f32 0.0, %v3762
      %v3764 = vpop.f32.mrf.mxu0
      %3765 = vmatprep.mubr.f32.mxu0 0.0
      %3766 = vmatmul.mubr.f32.gmra.mxu0 %v3478
      %v3767 = vpop.f32.mrf.mxu0
      %v3768 = vadd.f32 0.0, %v3767
      %v3769 = vpop.f32.mrf.mxu0
      %3770 = vmatprep.mubr.f32.mxu0 0.0
      %3771 = vmatmul.mubr.f32.gmra.mxu0 %v3481
      %v3772 = vpop.f32.mrf.mxu0
      %v3773 = vadd.f32 0.0, %v3772
      %v3774 = vpop.f32.mrf.mxu0
      %3775 = vmatprep.mubr.f32.mxu0 0.0
      %3776 = vmatmul.mubr.f32.gmra.mxu0 %v3484
      %v3777 = vpop.f32.mrf.mxu0
      %v3778 = vadd.f32 0.0, %v3777
      %v3779 = vpop.f32.mrf.mxu0
      %3780 = vmatprep.mubr.f32.mxu0 0.0
      %3781 = vmatmul.mubr.f32.gmra.mxu0 %v3487
      %v3782 = vpop.f32.mrf.mxu0
      %v3783 = vadd.f32 0.0, %v3782
      %v3784 = vpop.f32.mrf.mxu0
      %3785 = vmatprep.mubr.f32.mxu0 0.0
      %3786 = vmatmul.mubr.f32.gmra.mxu0 %v3490
      %v3787 = vpop.f32.mrf.mxu0
      %v3788 = vadd.f32 0.0, %v3787
      %v3789 = vpop.f32.mrf.mxu0
      %3790 = vmatprep.mubr.f32.mxu0 0.0
      %3791 = vmatmul.mubr.f32.gmra.mxu0 %v3493
      %v3792 = vpop.f32.mrf.mxu0
      %v3793 = vadd.f32 0.0, %v3792
      %v3794 = vpop.f32.mrf.mxu0
      %3795 = vmatprep.mubr.f32.mxu0 0.0
      %3796 = vmatmul.mubr.f32.gmra.mxu0 %v3496
      %v3797 = vpop.f32.mrf.mxu0
      %v3798 = vadd.f32 0.0, %v3797
      %v3799 = vpop.f32.mrf.mxu0
      %3800 = vmatprep.mubr.f32.mxu0 0.0
      %3801 = vmatmul.mubr.f32.gmra.mxu0 %v3499
      %v3802 = vpop.f32.mrf.mxu0
      %v3803 = vadd.f32 0.0, %v3802
      %v3804 = vpop.f32.mrf.mxu0
      %3805 = vmatprep.mubr.f32.mxu0 0.0
      %3806 = vmatmul.mubr.f32.gmra.mxu0 %v3502
      %v3807 = vpop.f32.mrf.mxu0
      %v3808 = vadd.f32 0.0, %v3807
      %v3809 = vpop.f32.mrf.mxu0
      %3810 = vmatprep.mubr.f32.mxu0 0.0
      %3811 = vmatmul.mubr.f32.gmra.mxu0 %v3505
      %v3812 = vpop.f32.mrf.mxu0
      %v3813 = vadd.f32 0.0, %v3812
      %v3814 = vpop.f32.mrf.mxu0
      %3815 = vmatprep.mubr.f32.mxu0 0.0
      %3816 = vmatmul.mubr.f32.gmra.mxu0 %v3508
      %v3817 = vpop.f32.mrf.mxu0
      %v3818 = vadd.f32 0.0, %v3817
      %v3819 = vpop.f32.mrf.mxu0
      %3820 = vmatprep.mubr.f32.mxu0 0.0
      %3821 = vmatmul.mubr.f32.gmra.mxu0 %v3511
      %v3822 = vpop.f32.mrf.mxu0
      %v3823 = vadd.f32 0.0, %v3822
      %v3824 = vpop.f32.mrf.mxu0
      %3825 = vmatprep.mubr.f32.mxu0 0.0
      %3826 = vmatmul.mubr.f32.gmra.mxu0 %v3514
      %v3827 = vpop.f32.mrf.mxu0
      %v3828 = vadd.f32 0.0, %v3827
      %v3829 = vpop.f32.mrf.mxu0
      %3830 = vmatprep.mubr.f32.mxu0 0.0
      %3831 = vmatmul.mubr.f32.gmra.mxu0 %v3517
      %v3832 = vpop.f32.mrf.mxu0
      %v3833 = vadd.f32 0.0, %v3832
      %v3834 = vpop.f32.mrf.mxu0
      %3835 = vmatprep.mubr.f32.mxu0 0.0
      %3836 = vmatmul.mubr.f32.gmra.mxu0 %v3520
      %v3837 = vpop.f32.mrf.mxu0
      %v3838 = vadd.f32 0.0, %v3837
      %v3839 = vpop.f32.mrf.mxu0
      %3840 = vmatprep.mubr.f32.mxu0 0.0
      %3841 = vmatmul.mubr.f32.gmra.mxu0 %v3523
      %v3842 = vpop.f32.mrf.mxu0
      %v3843 = vadd.f32 0.0, %v3842
      %v3844 = vpop.f32.mrf.mxu0
      %3845 = vmatprep.mubr.f32.mxu0 0.0
      %3846 = vmatmul.mubr.f32.gmra.mxu0 %v3526
      %v3847 = vpop.f32.mrf.mxu0
      %v3848 = vadd.f32 0.0, %v3847
      %v3849 = vpop.f32.mrf.mxu0
      %3850 = vmatprep.mubr.f32.mxu0 0.0
      %3851 = vmatmul.mubr.f32.gmra.mxu0 %v3529
      %v3852 = vpop.f32.mrf.mxu0
      %v3853 = vadd.f32 0.0, %v3852
      %v3854 = vpop.f32.mrf.mxu0
      %3855 = vmatprep.mubr.f32.mxu0 0.0
      %3856 = vmatmul.mubr.f32.gmra.mxu0 %v3532
      %v3857 = vpop.f32.mrf.mxu0
      %v3858 = vadd.f32 0.0, %v3857
      %v3859 = vpop.f32.mrf.mxu0
      %3860 = vmatprep.mubr.f32.mxu0 0.0
      %3861 = vmatmul.mubr.f32.gmra.mxu0 %v3535
      %v3862 = vpop.f32.mrf.mxu0
      %v3863 = vadd.f32 0.0, %v3862
      %v3864 = vpop.f32.mrf.mxu0
      %3865 = vmatprep.mubr.f32.mxu0 0.0
      %3866 = vmatmul.mubr.f32.gmra.mxu0 %v3538
      %v3867 = vpop.f32.mrf.mxu0
      %v3868 = vadd.f32 0.0, %v3867
      %v3869 = vpop.f32.mrf.mxu0
      %3870 = vmatprep.mubr.f32.mxu0 0.0
      %3871 = vmatmul.mubr.f32.gmra.mxu0 %v3541
      %v3872 = vpop.f32.mrf.mxu0
      %v3873 = vadd.f32 0.0, %v3872
      %v3874 = vpop.f32.mrf.mxu0
      %3875 = vmatprep.mubr.f32.mxu0 0.0
      %3876 = vmatmul.mubr.f32.gmra.mxu0 %v3544
      %v3877 = vpop.f32.mrf.mxu0
      %v3878 = vadd.f32 0.0, %v3877
      %v3879 = vpop.f32.mrf.mxu0
      %3880 = vmatprep.mubr.f32.mxu0 0.0
      %3881 = vmatmul.mubr.f32.gmra.mxu0 %v3547
      %v3882 = vpop.f32.mrf.mxu0
      %v3883 = vadd.f32 0.0, %v3882
      %v3884 = vpop.f32.mrf.mxu0
      %3885 = vmatprep.mubr.f32.mxu0 0.0
      %3886 = vmatmul.mubr.f32.gmra.mxu0 %v3550
      %v3887 = vpop.f32.mrf.mxu0
      %v3888 = vadd.f32 0.0, %v3887
      %v3889 = vpop.f32.mrf.mxu0
      %3890 = vmatprep.mubr.f32.mxu0 0.0
      %3891 = vmatmul.mubr.f32.gmra.mxu0 %v3553
      %v3892 = vpop.f32.mrf.mxu0
      %v3893 = vadd.f32 0.0, %v3892
      %v3894 = vpop.f32.mrf.mxu0
      %3895 = vmatprep.mubr.f32.mxu0 0.0
      %3896 = vmatmul.mubr.f32.gmra.mxu0 %v3556
      %v3897 = vpop.f32.mrf.mxu0
      %v3898 = vadd.f32 0.0, %v3897
      %v3899 = vpop.f32.mrf.mxu0
      %3900 = vmatprep.mubr.f32.mxu0 0.0
      %3901 = vmatmul.mubr.f32.gmra.mxu0 %v3559
      %v3902 = vpop.f32.mrf.mxu0
      %v3903 = vadd.f32 0.0, %v3902
      %v3904 = vpop.f32.mrf.mxu0
      %3905 = vmatprep.mubr.f32.mxu0 0.0
      %3906 = vmatmul.mubr.f32.gmra.mxu0 %v3562
      %v3907 = vpop.f32.mrf.mxu0
      %v3908 = vadd.f32 0.0, %v3907
      %v3909 = vpop.f32.mrf.mxu0
      %3910 = vmatprep.mubr.f32.mxu0 0.0
      %3911 = vmatmul.mubr.f32.gmra.mxu0 %v3565
      %v3912 = vpop.f32.mrf.mxu0
      %v3913 = vadd.f32 0.0, %v3912
      %v3914 = vpop.f32.mrf.mxu0
      %3915 = vmatprep.mubr.f32.mxu0 0.0
      %3916 = vmatmul.mubr.f32.gmra.mxu0 %v3568
      %v3917 = vpop.f32.mrf.mxu0
      %v3918 = vadd.f32 0.0, %v3917
      %v3919 = vpop.f32.mrf.mxu0
      %3920 = vmatprep.mubr.f32.mxu0 0.0
      %3921 = vmatmul.mubr.f32.gmra.mxu0 %v3571
      %v3922 = vpop.f32.mrf.mxu0
      %v3923 = vadd.f32 0.0, %v3922
      %v3924 = vpop.f32.mrf.mxu0
      %3925 = vmatprep.mubr.f32.mxu0 0.0
      %3926 = vmatmul.mubr.f32.gmra.mxu0 %v3574
      %v3927 = vpop.f32.mrf.mxu0
      %v3928 = vadd.f32 0.0, %v3927
      %v3929 = vpop.f32.mrf.mxu0
      %3930 = vmatprep.mubr.f32.mxu0 0.0
      %3931 = vmatmul.mubr.f32.gmra.mxu0 %v3577
      %v3932 = vpop.f32.mrf.mxu0
      %v3933 = vadd.f32 0.0, %v3932
      %v3934 = vpop.f32.mrf.mxu0
      %3935 = vmatprep.mubr.f32.mxu0 0.0
      %3936 = vmatmul.mubr.f32.gmra.mxu0 %v3580
      %v3937 = vpop.f32.mrf.mxu0
      %v3938 = vadd.f32 0.0, %v3937
      %v3939 = vpop.f32.mrf.mxu0
      %3940 = vmatprep.mubr.f32.mxu0 0.0
      %3941 = vmatmul.mubr.f32.gmra.mxu0 %v3583
      %v3942 = vpop.f32.mrf.mxu0
      %v3943 = vadd.f32 0.0, %v3942
      %v3944 = vpop.f32.mrf.mxu0
      %3945 = vmatprep.mubr.f32.mxu0 0.0
      %3946 = vmatmul.mubr.f32.gmra.mxu0 %v3586
      %v3947 = vpop.f32.mrf.mxu0
      %v3948 = vadd.f32 0.0, %v3947
      %v3949 = vpop.f32.mrf.mxu0
      %3950 = vmatprep.mubr.f32.mxu0 0.0
      %3951 = vmatmul.mubr.f32.gmra.mxu0 %v3589
      %v3952 = vpop.f32.mrf.mxu0
      %v3953 = vadd.f32 0.0, %v3952
      %v3954 = vpop.f32.mrf.mxu0
      %3955 = vmatprep.mubr.f32.mxu0 0.0
      %3956 = vmatmul.mubr.f32.gmra.mxu0 %v3592
      %v3957 = vpop.f32.mrf.mxu0
      %v3958 = vadd.f32 0.0, %v3957
      %v3959 = vpop.f32.mrf.mxu0
      %3960 = vmatprep.mubr.f32.mxu0 0.0
      %3961 = vmatmul.mubr.f32.gmra.mxu0 %v3595
      %v3962 = vpop.f32.mrf.mxu0
      %v3963 = vadd.f32 0.0, %v3962
      %v3964 = vpop.f32.mrf.mxu0
      %3965 = vmatprep.mubr.f32.mxu0 0.0
      %3966 = vmatmul.mubr.f32.gmra.mxu0 %v3598
      %v3967 = vpop.f32.mrf.mxu0
      %v3968 = vadd.f32 0.0, %v3967
      %v3969 = vpop.f32.mrf.mxu0
      %3970 = vmatprep.mubr.f32.mxu0 0.0
      %3971 = vmatmul.mubr.f32.gmra.mxu0 %v3601
      %v3972 = vpop.f32.mrf.mxu0
      %v3973 = vadd.f32 0.0, %v3972
      %v3974 = vpop.f32.mrf.mxu0
      %3975 = vmatprep.mubr.f32.mxu0 0.0
      %3976 = vmatmul.mubr.f32.gmra.mxu0 %v3604
      %v3977 = vpop.f32.mrf.mxu0
      %v3978 = vadd.f32 0.0, %v3977
      %v3979 = vpop.f32.mrf.mxu0
      %3980 = vmatprep.mubr.f32.mxu0 0.0
      %3981 = vmatmul.mubr.f32.gmra.mxu0 %v3607
      %v3982 = vpop.f32.mrf.mxu0
      %v3983 = vadd.f32 0.0, %v3982
      %v3984 = vpop.f32.mrf.mxu0
      %3985 = vmatprep.mubr.f32.mxu0 0.0
      %3986 = vmatmul.mubr.f32.gmra.mxu0 %v3610
      %v3987 = vpop.f32.mrf.mxu0
      %v3988 = vadd.f32 0.0, %v3987
      %v3989 = vpop.f32.mrf.mxu0
      %3990 = vmatprep.mubr.f32.mxu0 0.0
      %3991 = vmatmul.mubr.f32.gmra.mxu0 %v3613
      %v3992 = vpop.f32.mrf.mxu0
      %v3993 = vadd.f32 0.0, %v3992
      %v3994 = vpop.f32.mrf.mxu0
      %3995 = vmatprep.mubr.f32.mxu0 0.0
      %3996 = vmatmul.mubr.f32.gmra.mxu0 %v3616
      %v3997 = vpop.f32.mrf.mxu0
      %v3998 = vadd.f32 0.0, %v3997
      %v3999 = vpop.f32.mrf.mxu0
      %4000 = vmatprep.mubr.f32.mxu0 0.0
      %4001 = vmatmul.mubr.f32.gmra.mxu0 %v3619
      %v4002 = vpop.f32.mrf.mxu0
      %v4003 = vadd.f32 0.0, %v4002
      %v4004 = vpop.f32.mrf.mxu0
      %4005 = vmatprep.mubr.f32.mxu0 0.0
      %4006 = vmatmul.mubr.f32.gmra.mxu0 %v3622
      %v4007 = vpop.f32.mrf.mxu0
      %v4008 = vadd.f32 0.0, %v4007
      %v4009 = vpop.f32.mrf.mxu0
      %4010 = vmatprep.mubr.f32.mxu0 0.0
      %4011 = vmatmul.mubr.f32.gmra.mxu0 %v3625
      %v4012 = vpop.f32.mrf.mxu0
      %v4013 = vadd.f32 0.0, %v4012
      %v4014 = vpop.f32.mrf.mxu0
      %4015 = vdwg.mxu0
      %v4017 = vsel %vm509, %v3141, 0
      %v4020 = vsel %vm509, %v3144, 0
      %v4023 = vsel %vm509, %v3147, 0
      %v4026 = vsel %vm509, %v3150, 0
      %v4029 = vsel %vm509, %v3153, 0
      %v4032 = vsel %vm509, %v3156, 0
      %v4035 = vsel %vm509, %v3159, 0
      %v4038 = vsel %vm509, %v3162, 0
      %v4041 = vsel %vm509, %v3165, 0
      %v4044 = vsel %vm509, %v3168, 0
      %v4047 = vsel %vm509, %v3171, 0
      %v4050 = vsel %vm509, %v3174, 0
      %v4053 = vsel %vm509, %v3177, 0
      %v4056 = vsel %vm509, %v3180, 0
      %v4059 = vsel %vm509, %v3183, 0
      %v4062 = vsel %vm509, %v3186, 0
      %v4065 = vsel %vm509, %v3189, 0
      %v4068 = vsel %vm509, %v3192, 0
      %v4071 = vsel %vm509, %v3195, 0
      %v4074 = vsel %vm509, %v3198, 0
      %v4077 = vsel %vm509, %v3201, 0
      %v4080 = vsel %vm509, %v3204, 0
      %v4083 = vsel %vm509, %v3207, 0
      %v4086 = vsel %vm509, %v3210, 0
      %v4089 = vsel %vm509, %v3213, 0
      %v4092 = vsel %vm509, %v3216, 0
      %v4095 = vsel %vm509, %v3219, 0
      %v4098 = vsel %vm509, %v3222, 0
      %v4101 = vsel %vm509, %v3225, 0
      %v4104 = vsel %vm509, %v3228, 0
      %v4107 = vsel %vm509, %v3231, 0
      %v4110 = vsel %vm509, %v3234, 0
      %v4113 = vsel %vm509, %v3237, 0
      %v4116 = vsel %vm509, %v3240, 0
      %v4119 = vsel %vm509, %v3243, 0
      %v4122 = vsel %vm509, %v3246, 0
      %v4125 = vsel %vm509, %v3249, 0
      %v4128 = vsel %vm509, %v3252, 0
      %v4131 = vsel %vm509, %v3255, 0
      %v4134 = vsel %vm509, %v3258, 0
      %v4137 = vsel %vm509, %v3261, 0
      %v4140 = vsel %vm509, %v3264, 0
      %v4143 = vsel %vm509, %v3267, 0
      %v4146 = vsel %vm509, %v3270, 0
      %v4149 = vsel %vm509, %v3273, 0
      %v4152 = vsel %vm509, %v3276, 0
      %v4155 = vsel %vm509, %v3279, 0
      %v4158 = vsel %vm509, %v3282, 0
      %v4161 = vsel %vm509, %v3285, 0
      %v4164 = vsel %vm509, %v3288, 0
      %v4167 = vsel %vm509, %v3291, 0
      %v4170 = vsel %vm509, %v3294, 0
      %v4173 = vsel %vm509, %v3297, 0
      %v4176 = vsel %vm509, %v3300, 0
      %v4179 = vsel %vm509, %v3303, 0
      %v4182 = vsel %vm509, %v3306, 0
      %v4185 = vsel %vm509, %v3309, 0
      %v4188 = vsel %vm509, %v3312, 0
      %v4191 = vsel %vm509, %v3315, 0
      %v4194 = vsel %vm509, %v3318, 0
      %v4197 = vsel %vm509, %v3321, 0
      %v4200 = vsel %vm509, %v3324, 0
      %v4203 = vsel %vm509, %v3327, 0
      %v4206 = vsel %vm509, %v3330, 0
      %4208 = vmatprep.subr.mxu0 0.0
      %4209 = vmatpush1.msra.mxu0 %v3346
      %4210 = vmatprep.subr.mxu0 0.0
      %4211 = vmatpush1.msra.mxu0 %v3345
      %4212 = vmatprep.subr.mxu0 0.0
      %4213 = vmatpush1.msra.mxu0 %v3344
      %4214 = vmatprep.subr.mxu0 0.0
      %4215 = vmatpush1.msra.mxu0 %v3343
      %4216 = vmatprep.subr.mxu0 0.0
      %4217 = vmatpush1.msra.mxu0 %v3342
      %4218 = vmatprep.subr.mxu0 0.0
      %4219 = vmatpush1.msra.mxu0 %v3341
      %4220 = vmatprep.subr.mxu0 0.0
      %4221 = vmatpush1.msra.mxu0 %v3340
      %4222 = vmatprep.subr.mxu0 0.0
      %4223 = vmatpush1.msra.mxu0 %v3339
      %4224 = vmatprep.subr.mxu0 0.0
      %4225 = vmatpush1.msra.mxu0 %v3338
      %4226 = vmatprep.subr.mxu0 0.0
      %4227 = vmatpush1.msra.mxu0 %v3337
      %4228 = vmatprep.subr.mxu0 0.0
      %4229 = vmatpush1.msra.mxu0 %v3336
      %4230 = vmatprep.subr.mxu0 0.0
      %4231 = vmatpush1.msra.mxu0 %v3335
      %4232 = vmatprep.subr.mxu0 0.0
      %4233 = vmatpush1.msra.mxu0 %v3334
      %4234 = vmatprep.subr.mxu0 0.0
      %4235 = vmatpush1.msra.mxu0 %v3333
      %4236 = vmatprep.subr.mxu0 0.0
      %4237 = vmatpush1.msra.mxu0 %v3332
      %4238 = vmatprep.subr.mxu0 0.0
      %4239 = vmatpush1.msra.mxu0 %v3331
      %4240 = vmatprep.subr.mxu0 0.0
      %4241 = vmatpush2.msra.mxu0 %v3362
      %4242 = vmatprep.subr.mxu0 0.0
      %4243 = vmatpush2.msra.mxu0 %v3361
      %4244 = vmatprep.subr.mxu0 0.0
      %4245 = vmatpush2.msra.mxu0 %v3360
      %4246 = vmatprep.subr.mxu0 0.0
      %4247 = vmatpush2.msra.mxu0 %v3359
      %4248 = vmatprep.subr.mxu0 0.0
      %4249 = vmatpush2.msra.mxu0 %v3358
      %4250 = vmatprep.subr.mxu0 0.0
      %4251 = vmatpush2.msra.mxu0 %v3357
      %4252 = vmatprep.subr.mxu0 0.0
      %4253 = vmatpush2.msra.mxu0 %v3356
      %4254 = vmatprep.subr.mxu0 0.0
      %4255 = vmatpush2.msra.mxu0 %v3355
      %4256 = vmatprep.subr.mxu0 0.0
      %4257 = vmatpush2.msra.mxu0 %v3354
      %4258 = vmatprep.subr.mxu0 0.0
      %4259 = vmatpush2.msra.mxu0 %v3353
      %4260 = vmatprep.subr.mxu0 0.0
      %4261 = vmatpush2.msra.mxu0 %v3352
      %4262 = vmatprep.subr.mxu0 0.0
      %4263 = vmatpush2.msra.mxu0 %v3351
      %4264 = vmatprep.subr.mxu0 0.0
      %4265 = vmatpush2.msra.mxu0 %v3350
      %4266 = vmatprep.subr.mxu0 0.0
      %4267 = vmatpush2.msra.mxu0 %v3349
      %4268 = vmatprep.subr.mxu0 0.0
      %4269 = vmatpush2.msra.mxu0 %v3348
      %4270 = vmatprep.subr.mxu0 0.0
      %4271 = vmatpush2.msra.mxu0 %v3347
      %4272 = vmatprep.mubr.f32.mxu0 %v3140
      %4273 = vmatmul.mubr.f32.gmra.mxu0 %v3139
      %v4274 = vpop.f32.mrf.mxu0
      %v4275 = vadd.f32 %v3698, %v4274
      %v4276 = vpop.f32.mrf.mxu0
      %4277 = vmatprep.mubr.f32.mxu0 %v3143
      %4278 = vmatmul.mubr.f32.gmra.mxu0 %v3142
      %v4279 = vpop.f32.mrf.mxu0
      %v4280 = vadd.f32 %v3703, %v4279
      %v4281 = vpop.f32.mrf.mxu0
      %4282 = vmatprep.mubr.f32.mxu0 %v3146
      %4283 = vmatmul.mubr.f32.gmra.mxu0 %v3145
      %v4284 = vpop.f32.mrf.mxu0
      %v4285 = vadd.f32 %v3708, %v4284
      %v4286 = vpop.f32.mrf.mxu0
      %4287 = vmatprep.mubr.f32.mxu0 %v3149
      %4288 = vmatmul.mubr.f32.gmra.mxu0 %v3148
      %v4289 = vpop.f32.mrf.mxu0
      %v4290 = vadd.f32 %v3713, %v4289
      %v4291 = vpop.f32.mrf.mxu0
      %4292 = vmatprep.mubr.f32.mxu0 %v3152
      %4293 = vmatmul.mubr.f32.gmra.mxu0 %v3151
      %v4294 = vpop.f32.mrf.mxu0
      %v4295 = vadd.f32 %v3718, %v4294
      %v4296 = vpop.f32.mrf.mxu0
      %4297 = vmatprep.mubr.f32.mxu0 %v3155
      %4298 = vmatmul.mubr.f32.gmra.mxu0 %v3154
      %v4299 = vpop.f32.mrf.mxu0
      %v4300 = vadd.f32 %v3723, %v4299
      %v4301 = vpop.f32.mrf.mxu0
      %4302 = vmatprep.mubr.f32.mxu0 %v3158
      %4303 = vmatmul.mubr.f32.gmra.mxu0 %v3157
      %v4304 = vpop.f32.mrf.mxu0
      %v4305 = vadd.f32 %v3728, %v4304
      %v4306 = vpop.f32.mrf.mxu0
      %4307 = vmatprep.mubr.f32.mxu0 %v3161
      %4308 = vmatmul.mubr.f32.gmra.mxu0 %v3160
      %v4309 = vpop.f32.mrf.mxu0
      %v4310 = vadd.f32 %v3733, %v4309
      %v4311 = vpop.f32.mrf.mxu0
      %4312 = vmatprep.mubr.f32.mxu0 %v3164
      %4313 = vmatmul.mubr.f32.gmra.mxu0 %v3163
      %v4314 = vpop.f32.mrf.mxu0
      %v4315 = vadd.f32 %v3738, %v4314
      %v4316 = vpop.f32.mrf.mxu0
      %4317 = vmatprep.mubr.f32.mxu0 %v3167
      %4318 = vmatmul.mubr.f32.gmra.mxu0 %v3166
      %v4319 = vpop.f32.mrf.mxu0
      %v4320 = vadd.f32 %v3743, %v4319
      %v4321 = vpop.f32.mrf.mxu0
      %4322 = vmatprep.mubr.f32.mxu0 %v3170
      %4323 = vmatmul.mubr.f32.gmra.mxu0 %v3169
      %v4324 = vpop.f32.mrf.mxu0
      %v4325 = vadd.f32 %v3748, %v4324
      %v4326 = vpop.f32.mrf.mxu0
      %4327 = vmatprep.mubr.f32.mxu0 %v3173
      %4328 = vmatmul.mubr.f32.gmra.mxu0 %v3172
      %v4329 = vpop.f32.mrf.mxu0
      %v4330 = vadd.f32 %v3753, %v4329
      %v4331 = vpop.f32.mrf.mxu0
      %4332 = vmatprep.mubr.f32.mxu0 %v3176
      %4333 = vmatmul.mubr.f32.gmra.mxu0 %v3175
      %v4334 = vpop.f32.mrf.mxu0
      %v4335 = vadd.f32 %v3758, %v4334
      %v4336 = vpop.f32.mrf.mxu0
      %4337 = vmatprep.mubr.f32.mxu0 %v3179
      %4338 = vmatmul.mubr.f32.gmra.mxu0 %v3178
      %v4339 = vpop.f32.mrf.mxu0
      %v4340 = vadd.f32 %v3763, %v4339
      %v4341 = vpop.f32.mrf.mxu0
      %4342 = vmatprep.mubr.f32.mxu0 %v3182
      %4343 = vmatmul.mubr.f32.gmra.mxu0 %v3181
      %v4344 = vpop.f32.mrf.mxu0
      %v4345 = vadd.f32 %v3768, %v4344
      %v4346 = vpop.f32.mrf.mxu0
      %4347 = vmatprep.mubr.f32.mxu0 %v3185
      %4348 = vmatmul.mubr.f32.gmra.mxu0 %v3184
      %v4349 = vpop.f32.mrf.mxu0
      %v4350 = vadd.f32 %v3773, %v4349
      %v4351 = vpop.f32.mrf.mxu0
      %4352 = vmatprep.mubr.f32.mxu0 %v3188
      %4353 = vmatmul.mubr.f32.gmra.mxu0 %v3187
      %v4354 = vpop.f32.mrf.mxu0
      %v4355 = vadd.f32 %v3778, %v4354
      %v4356 = vpop.f32.mrf.mxu0
      %4357 = vmatprep.mubr.f32.mxu0 %v3191
      %4358 = vmatmul.mubr.f32.gmra.mxu0 %v3190
      %v4359 = vpop.f32.mrf.mxu0
      %v4360 = vadd.f32 %v3783, %v4359
      %v4361 = vpop.f32.mrf.mxu0
      %4362 = vmatprep.mubr.f32.mxu0 %v3194
      %4363 = vmatmul.mubr.f32.gmra.mxu0 %v3193
      %v4364 = vpop.f32.mrf.mxu0
      %v4365 = vadd.f32 %v3788, %v4364
      %v4366 = vpop.f32.mrf.mxu0
      %4367 = vmatprep.mubr.f32.mxu0 %v3197
      %4368 = vmatmul.mubr.f32.gmra.mxu0 %v3196
      %v4369 = vpop.f32.mrf.mxu0
      %v4370 = vadd.f32 %v3793, %v4369
      %v4371 = vpop.f32.mrf.mxu0
      %4372 = vmatprep.mubr.f32.mxu0 %v3200
      %4373 = vmatmul.mubr.f32.gmra.mxu0 %v3199
      %v4374 = vpop.f32.mrf.mxu0
      %v4375 = vadd.f32 %v3798, %v4374
      %v4376 = vpop.f32.mrf.mxu0
      %4377 = vmatprep.mubr.f32.mxu0 %v3203
      %4378 = vmatmul.mubr.f32.gmra.mxu0 %v3202
      %v4379 = vpop.f32.mrf.mxu0
      %v4380 = vadd.f32 %v3803, %v4379
      %v4381 = vpop.f32.mrf.mxu0
      %4382 = vmatprep.mubr.f32.mxu0 %v3206
      %4383 = vmatmul.mubr.f32.gmra.mxu0 %v3205
      %v4384 = vpop.f32.mrf.mxu0
      %v4385 = vadd.f32 %v3808, %v4384
      %v4386 = vpop.f32.mrf.mxu0
      %4387 = vmatprep.mubr.f32.mxu0 %v3209
      %4388 = vmatmul.mubr.f32.gmra.mxu0 %v3208
      %v4389 = vpop.f32.mrf.mxu0
      %v4390 = vadd.f32 %v3813, %v4389
      %v4391 = vpop.f32.mrf.mxu0
      %4392 = vmatprep.mubr.f32.mxu0 %v3212
      %4393 = vmatmul.mubr.f32.gmra.mxu0 %v3211
      %v4394 = vpop.f32.mrf.mxu0
      %v4395 = vadd.f32 %v3818, %v4394
      %v4396 = vpop.f32.mrf.mxu0
      %4397 = vmatprep.mubr.f32.mxu0 %v3215
      %4398 = vmatmul.mubr.f32.gmra.mxu0 %v3214
      %v4399 = vpop.f32.mrf.mxu0
      %v4400 = vadd.f32 %v3823, %v4399
      %v4401 = vpop.f32.mrf.mxu0
      %4402 = vmatprep.mubr.f32.mxu0 %v3218
      %4403 = vmatmul.mubr.f32.gmra.mxu0 %v3217
      %v4404 = vpop.f32.mrf.mxu0
      %v4405 = vadd.f32 %v3828, %v4404
      %v4406 = vpop.f32.mrf.mxu0
      %4407 = vmatprep.mubr.f32.mxu0 %v3221
      %4408 = vmatmul.mubr.f32.gmra.mxu0 %v3220
      %v4409 = vpop.f32.mrf.mxu0
      %v4410 = vadd.f32 %v3833, %v4409
      %v4411 = vpop.f32.mrf.mxu0
      %4412 = vmatprep.mubr.f32.mxu0 %v3224
      %4413 = vmatmul.mubr.f32.gmra.mxu0 %v3223
      %v4414 = vpop.f32.mrf.mxu0
      %v4415 = vadd.f32 %v3838, %v4414
      %v4416 = vpop.f32.mrf.mxu0
      %4417 = vmatprep.mubr.f32.mxu0 %v3227
      %4418 = vmatmul.mubr.f32.gmra.mxu0 %v3226
      %v4419 = vpop.f32.mrf.mxu0
      %v4420 = vadd.f32 %v3843, %v4419
      %v4421 = vpop.f32.mrf.mxu0
      %4422 = vmatprep.mubr.f32.mxu0 %v3230
      %4423 = vmatmul.mubr.f32.gmra.mxu0 %v3229
      %v4424 = vpop.f32.mrf.mxu0
      %v4425 = vadd.f32 %v3848, %v4424
      %v4426 = vpop.f32.mrf.mxu0
      %4427 = vmatprep.mubr.f32.mxu0 %v3233
      %4428 = vmatmul.mubr.f32.gmra.mxu0 %v3232
      %v4429 = vpop.f32.mrf.mxu0
      %v4430 = vadd.f32 %v3853, %v4429
      %v4431 = vpop.f32.mrf.mxu0
      %4432 = vmatprep.mubr.f32.mxu0 %v3236
      %4433 = vmatmul.mubr.f32.gmra.mxu0 %v3235
      %v4434 = vpop.f32.mrf.mxu0
      %v4435 = vadd.f32 %v3858, %v4434
      %v4436 = vpop.f32.mrf.mxu0
      %4437 = vmatprep.mubr.f32.mxu0 %v3239
      %4438 = vmatmul.mubr.f32.gmra.mxu0 %v3238
      %v4439 = vpop.f32.mrf.mxu0
      %v4440 = vadd.f32 %v3863, %v4439
      %v4441 = vpop.f32.mrf.mxu0
      %4442 = vmatprep.mubr.f32.mxu0 %v3242
      %4443 = vmatmul.mubr.f32.gmra.mxu0 %v3241
      %v4444 = vpop.f32.mrf.mxu0
      %v4445 = vadd.f32 %v3868, %v4444
      %v4446 = vpop.f32.mrf.mxu0
      %4447 = vmatprep.mubr.f32.mxu0 %v3245
      %4448 = vmatmul.mubr.f32.gmra.mxu0 %v3244
      %v4449 = vpop.f32.mrf.mxu0
      %v4450 = vadd.f32 %v3873, %v4449
      %v4451 = vpop.f32.mrf.mxu0
      %4452 = vmatprep.mubr.f32.mxu0 %v3248
      %4453 = vmatmul.mubr.f32.gmra.mxu0 %v3247
      %v4454 = vpop.f32.mrf.mxu0
      %v4455 = vadd.f32 %v3878, %v4454
      %v4456 = vpop.f32.mrf.mxu0
      %4457 = vmatprep.mubr.f32.mxu0 %v3251
      %4458 = vmatmul.mubr.f32.gmra.mxu0 %v3250
      %v4459 = vpop.f32.mrf.mxu0
      %v4460 = vadd.f32 %v3883, %v4459
      %v4461 = vpop.f32.mrf.mxu0
      %4462 = vmatprep.mubr.f32.mxu0 %v3254
      %4463 = vmatmul.mubr.f32.gmra.mxu0 %v3253
      %v4464 = vpop.f32.mrf.mxu0
      %v4465 = vadd.f32 %v3888, %v4464
      %v4466 = vpop.f32.mrf.mxu0
      %4467 = vmatprep.mubr.f32.mxu0 %v3257
      %4468 = vmatmul.mubr.f32.gmra.mxu0 %v3256
      %v4469 = vpop.f32.mrf.mxu0
      %v4470 = vadd.f32 %v3893, %v4469
      %v4471 = vpop.f32.mrf.mxu0
      %4472 = vmatprep.mubr.f32.mxu0 %v3260
      %4473 = vmatmul.mubr.f32.gmra.mxu0 %v3259
      %v4474 = vpop.f32.mrf.mxu0
      %v4475 = vadd.f32 %v3898, %v4474
      %v4476 = vpop.f32.mrf.mxu0
      %4477 = vmatprep.mubr.f32.mxu0 %v3263
      %4478 = vmatmul.mubr.f32.gmra.mxu0 %v3262
      %v4479 = vpop.f32.mrf.mxu0
      %v4480 = vadd.f32 %v3903, %v4479
      %v4481 = vpop.f32.mrf.mxu0
      %4482 = vmatprep.mubr.f32.mxu0 %v3266
      %4483 = vmatmul.mubr.f32.gmra.mxu0 %v3265
      %v4484 = vpop.f32.mrf.mxu0
      %v4485 = vadd.f32 %v3908, %v4484
      %v4486 = vpop.f32.mrf.mxu0
      %4487 = vmatprep.mubr.f32.mxu0 %v3269
      %4488 = vmatmul.mubr.f32.gmra.mxu0 %v3268
      %v4489 = vpop.f32.mrf.mxu0
      %v4490 = vadd.f32 %v3913, %v4489
      %v4491 = vpop.f32.mrf.mxu0
      %4492 = vmatprep.mubr.f32.mxu0 %v3272
      %4493 = vmatmul.mubr.f32.gmra.mxu0 %v3271
      %v4494 = vpop.f32.mrf.mxu0
      %v4495 = vadd.f32 %v3918, %v4494
      %v4496 = vpop.f32.mrf.mxu0
      %4497 = vmatprep.mubr.f32.mxu0 %v3275
      %4498 = vmatmul.mubr.f32.gmra.mxu0 %v3274
      %v4499 = vpop.f32.mrf.mxu0
      %v4500 = vadd.f32 %v3923, %v4499
      %v4501 = vpop.f32.mrf.mxu0
      %4502 = vmatprep.mubr.f32.mxu0 %v3278
      %4503 = vmatmul.mubr.f32.gmra.mxu0 %v3277
      %v4504 = vpop.f32.mrf.mxu0
      %v4505 = vadd.f32 %v3928, %v4504
      %v4506 = vpop.f32.mrf.mxu0
      %4507 = vmatprep.mubr.f32.mxu0 %v3281
      %4508 = vmatmul.mubr.f32.gmra.mxu0 %v3280
      %v4509 = vpop.f32.mrf.mxu0
      %v4510 = vadd.f32 %v3933, %v4509
      %v4511 = vpop.f32.mrf.mxu0
      %4512 = vmatprep.mubr.f32.mxu0 %v3284
      %4513 = vmatmul.mubr.f32.gmra.mxu0 %v3283
      %v4514 = vpop.f32.mrf.mxu0
      %v4515 = vadd.f32 %v3938, %v4514
      %v4516 = vpop.f32.mrf.mxu0
      %4517 = vmatprep.mubr.f32.mxu0 %v3287
      %4518 = vmatmul.mubr.f32.gmra.mxu0 %v3286
      %v4519 = vpop.f32.mrf.mxu0
      %v4520 = vadd.f32 %v3943, %v4519
      %v4521 = vpop.f32.mrf.mxu0
      %4522 = vmatprep.mubr.f32.mxu0 %v3290
      %4523 = vmatmul.mubr.f32.gmra.mxu0 %v3289
      %v4524 = vpop.f32.mrf.mxu0
      %v4525 = vadd.f32 %v3948, %v4524
      %v4526 = vpop.f32.mrf.mxu0
      %4527 = vmatprep.mubr.f32.mxu0 %v3293
      %4528 = vmatmul.mubr.f32.gmra.mxu0 %v3292
      %v4529 = vpop.f32.mrf.mxu0
      %v4530 = vadd.f32 %v3953, %v4529
      %v4531 = vpop.f32.mrf.mxu0
      %4532 = vmatprep.mubr.f32.mxu0 %v3296
      %4533 = vmatmul.mubr.f32.gmra.mxu0 %v3295
      %v4534 = vpop.f32.mrf.mxu0
      %v4535 = vadd.f32 %v3958, %v4534
      %v4536 = vpop.f32.mrf.mxu0
      %4537 = vmatprep.mubr.f32.mxu0 %v3299
      %4538 = vmatmul.mubr.f32.gmra.mxu0 %v3298
      %v4539 = vpop.f32.mrf.mxu0
      %v4540 = vadd.f32 %v3963, %v4539
      %v4541 = vpop.f32.mrf.mxu0
      %4542 = vmatprep.mubr.f32.mxu0 %v3302
      %4543 = vmatmul.mubr.f32.gmra.mxu0 %v3301
      %v4544 = vpop.f32.mrf.mxu0
      %v4545 = vadd.f32 %v3968, %v4544
      %v4546 = vpop.f32.mrf.mxu0
      %4547 = vmatprep.mubr.f32.mxu0 %v3305
      %4548 = vmatmul.mubr.f32.gmra.mxu0 %v3304
      %v4549 = vpop.f32.mrf.mxu0
      %v4550 = vadd.f32 %v3973, %v4549
      %v4551 = vpop.f32.mrf.mxu0
      %4552 = vmatprep.mubr.f32.mxu0 %v3308
      %4553 = vmatmul.mubr.f32.gmra.mxu0 %v3307
      %v4554 = vpop.f32.mrf.mxu0
      %v4555 = vadd.f32 %v3978, %v4554
      %v4556 = vpop.f32.mrf.mxu0
      %4557 = vmatprep.mubr.f32.mxu0 %v3311
      %4558 = vmatmul.mubr.f32.gmra.mxu0 %v3310
      %v4559 = vpop.f32.mrf.mxu0
      %v4560 = vadd.f32 %v3983, %v4559
      %v4561 = vpop.f32.mrf.mxu0
      %4562 = vmatprep.mubr.f32.mxu0 %v3314
      %4563 = vmatmul.mubr.f32.gmra.mxu0 %v3313
      %v4564 = vpop.f32.mrf.mxu0
      %v4565 = vadd.f32 %v3988, %v4564
      %v4566 = vpop.f32.mrf.mxu0
      %4567 = vmatprep.mubr.f32.mxu0 %v3317
      %4568 = vmatmul.mubr.f32.gmra.mxu0 %v3316
      %v4569 = vpop.f32.mrf.mxu0
      %v4570 = vadd.f32 %v3993, %v4569
      %v4571 = vpop.f32.mrf.mxu0
      %4572 = vmatprep.mubr.f32.mxu0 %v3320
      %4573 = vmatmul.mubr.f32.gmra.mxu0 %v3319
      %v4574 = vpop.f32.mrf.mxu0
      %v4575 = vadd.f32 %v3998, %v4574
      %v4576 = vpop.f32.mrf.mxu0
      %4577 = vmatprep.mubr.f32.mxu0 %v3323
      %4578 = vmatmul.mubr.f32.gmra.mxu0 %v3322
      %v4579 = vpop.f32.mrf.mxu0
      %v4580 = vadd.f32 %v4003, %v4579
      %v4581 = vpop.f32.mrf.mxu0
      %4582 = vmatprep.mubr.f32.mxu0 %v3326
      %4583 = vmatmul.mubr.f32.gmra.mxu0 %v3325
      %v4584 = vpop.f32.mrf.mxu0
      %v4585 = vadd.f32 %v4008, %v4584
      %v4586 = vpop.f32.mrf.mxu0
      %4587 = vmatprep.mubr.f32.mxu0 %v3329
      %4588 = vmatmul.mubr.f32.gmra.mxu0 %v3328
      %v4589 = vpop.f32.mrf.mxu0
      %v4590 = vadd.f32 %v4013, %v4589
      %v4591 = vpop.f32.mrf.mxu0
      %4592 = vdwg.mxu0
      %4593 = vmatprep.subr.mxu0 0.0
      %4594 = vmatpush1.msra.mxu0 0.0
      %4595 = vmatprep.subr.mxu0 0.0
      %4596 = vmatpush1.msra.mxu0 0.0
      %4597 = vmatprep.subr.mxu0 0.0
      %4598 = vmatpush1.msra.mxu0 0.0
      %4599 = vmatprep.subr.mxu0 0.0
      %4600 = vmatpush1.msra.mxu0 0.0
      %4601 = vmatprep.subr.mxu0 0.0
      %4602 = vmatpush1.msra.mxu0 0.0
      %4603 = vmatprep.subr.mxu0 0.0
      %4604 = vmatpush1.msra.mxu0 0.0
      %4605 = vmatprep.subr.mxu0 0.0
      %4606 = vmatpush1.msra.mxu0 0.0
      %4607 = vmatprep.subr.mxu0 0.0
      %4608 = vmatpush1.msra.mxu0 0.0
      %4609 = vmatprep.subr.mxu0 0.0
      %4610 = vmatpush1.msra.mxu0 0.0
      %4611 = vmatprep.subr.mxu0 0.0
      %4612 = vmatpush1.msra.mxu0 0.0
      %4613 = vmatprep.subr.mxu0 0.0
      %4614 = vmatpush1.msra.mxu0 0.0
      %4615 = vmatprep.subr.mxu0 0.0
      %4616 = vmatpush1.msra.mxu0 0.0
      %4617 = vmatprep.subr.mxu0 0.0
      %4618 = vmatpush1.msra.mxu0 %v3366
      %4619 = vmatprep.subr.mxu0 0.0
      %4620 = vmatpush1.msra.mxu0 %v3365
      %4621 = vmatprep.subr.mxu0 0.0
      %4622 = vmatpush1.msra.mxu0 %v3364
      %4623 = vmatprep.subr.mxu0 0.0
      %4624 = vmatpush1.msra.mxu0 %v3363
      %4625 = vmatprep.subr.mxu0 0.0
      %4626 = vmatpush2.msra.mxu0 0.0
      %4627 = vmatprep.subr.mxu0 0.0
      %4628 = vmatpush2.msra.mxu0 0.0
      %4629 = vmatprep.subr.mxu0 0.0
      %4630 = vmatpush2.msra.mxu0 0.0
      %4631 = vmatprep.subr.mxu0 0.0
      %4632 = vmatpush2.msra.mxu0 0.0
      %4633 = vmatprep.subr.mxu0 0.0
      %4634 = vmatpush2.msra.mxu0 0.0
      %4635 = vmatprep.subr.mxu0 0.0
      %4636 = vmatpush2.msra.mxu0 0.0
      %4637 = vmatprep.subr.mxu0 0.0
      %4638 = vmatpush2.msra.mxu0 0.0
      %4639 = vmatprep.subr.mxu0 0.0
      %4640 = vmatpush2.msra.mxu0 0.0
      %4641 = vmatprep.subr.mxu0 0.0
      %4642 = vmatpush2.msra.mxu0 0.0
      %4643 = vmatprep.subr.mxu0 0.0
      %4644 = vmatpush2.msra.mxu0 0.0
      %4645 = vmatprep.subr.mxu0 0.0
      %4646 = vmatpush2.msra.mxu0 0.0
      %4647 = vmatprep.subr.mxu0 0.0
      %4648 = vmatpush2.msra.mxu0 0.0
      %4649 = vmatprep.subr.mxu0 0.0
      %4650 = vmatpush2.msra.mxu0 0.0
      %4651 = vmatprep.subr.mxu0 0.0
      %4652 = vmatpush2.msra.mxu0 0.0
      %4653 = vmatprep.subr.mxu0 0.0
      %4654 = vmatpush2.msra.mxu0 0.0
      %4655 = vmatprep.subr.mxu0 0.0
      %4656 = vmatpush2.msra.mxu0 0.0
      %4657 = vmatprep.mubr.f32.mxu0 0.0
      %4658 = vmatmul.mubr.f32.gmra.mxu0 %v4017
      %v4659 = vpop.f32.mrf.mxu0
      %v4660 = vadd.f32 %v4275, %v4659
      %v4661 = vpop.f32.mrf.mxu0
      %4662 = vmatprep.mubr.f32.mxu0 0.0
      %4663 = vmatmul.mubr.f32.gmra.mxu0 %v4020
      %v4664 = vpop.f32.mrf.mxu0
      %v4665 = vadd.f32 %v4280, %v4664
      %v4666 = vpop.f32.mrf.mxu0
      %4667 = vmatprep.mubr.f32.mxu0 0.0
      %4668 = vmatmul.mubr.f32.gmra.mxu0 %v4023
      %v4669 = vpop.f32.mrf.mxu0
      %v4670 = vadd.f32 %v4285, %v4669
      %v4671 = vpop.f32.mrf.mxu0
      %4672 = vmatprep.mubr.f32.mxu0 0.0
      %4673 = vmatmul.mubr.f32.gmra.mxu0 %v4026
      %v4674 = vpop.f32.mrf.mxu0
      %v4675 = vadd.f32 %v4290, %v4674
      %v4676 = vpop.f32.mrf.mxu0
      %4677 = vmatprep.mubr.f32.mxu0 0.0
      %4678 = vmatmul.mubr.f32.gmra.mxu0 %v4029
      %v4679 = vpop.f32.mrf.mxu0
      %v4680 = vadd.f32 %v4295, %v4679
      %v4681 = vpop.f32.mrf.mxu0
      %4682 = vmatprep.mubr.f32.mxu0 0.0
      %4683 = vmatmul.mubr.f32.gmra.mxu0 %v4032
      %v4684 = vpop.f32.mrf.mxu0
      %v4685 = vadd.f32 %v4300, %v4684
      %v4686 = vpop.f32.mrf.mxu0
      %4687 = vmatprep.mubr.f32.mxu0 0.0
      %4688 = vmatmul.mubr.f32.gmra.mxu0 %v4035
      %v4689 = vpop.f32.mrf.mxu0
      %v4690 = vadd.f32 %v4305, %v4689
      %v4691 = vpop.f32.mrf.mxu0
      %4692 = vmatprep.mubr.f32.mxu0 0.0
      %4693 = vmatmul.mubr.f32.gmra.mxu0 %v4038
      %v4694 = vpop.f32.mrf.mxu0
      %v4695 = vadd.f32 %v4310, %v4694
      %v4696 = vpop.f32.mrf.mxu0
      %4697 = vmatprep.mubr.f32.mxu0 0.0
      %4698 = vmatmul.mubr.f32.gmra.mxu0 %v4041
      %v4699 = vpop.f32.mrf.mxu0
      %v4700 = vadd.f32 %v4315, %v4699
      %v4701 = vpop.f32.mrf.mxu0
      %4702 = vmatprep.mubr.f32.mxu0 0.0
      %4703 = vmatmul.mubr.f32.gmra.mxu0 %v4044
      %v4704 = vpop.f32.mrf.mxu0
      %v4705 = vadd.f32 %v4320, %v4704
      %v4706 = vpop.f32.mrf.mxu0
      %4707 = vmatprep.mubr.f32.mxu0 0.0
      %4708 = vmatmul.mubr.f32.gmra.mxu0 %v4047
      %v4709 = vpop.f32.mrf.mxu0
      %v4710 = vadd.f32 %v4325, %v4709
      %v4711 = vpop.f32.mrf.mxu0
      %4712 = vmatprep.mubr.f32.mxu0 0.0
      %4713 = vmatmul.mubr.f32.gmra.mxu0 %v4050
      %v4714 = vpop.f32.mrf.mxu0
      %v4715 = vadd.f32 %v4330, %v4714
      %v4716 = vpop.f32.mrf.mxu0
      %4717 = vmatprep.mubr.f32.mxu0 0.0
      %4718 = vmatmul.mubr.f32.gmra.mxu0 %v4053
      %v4719 = vpop.f32.mrf.mxu0
      %v4720 = vadd.f32 %v4335, %v4719
      %v4721 = vpop.f32.mrf.mxu0
      %4722 = vmatprep.mubr.f32.mxu0 0.0
      %4723 = vmatmul.mubr.f32.gmra.mxu0 %v4056
      %v4724 = vpop.f32.mrf.mxu0
      %v4725 = vadd.f32 %v4340, %v4724
      %v4726 = vpop.f32.mrf.mxu0
      %4727 = vmatprep.mubr.f32.mxu0 0.0
      %4728 = vmatmul.mubr.f32.gmra.mxu0 %v4059
      %v4729 = vpop.f32.mrf.mxu0
      %v4730 = vadd.f32 %v4345, %v4729
      %v4731 = vpop.f32.mrf.mxu0
      %4732 = vmatprep.mubr.f32.mxu0 0.0
      %4733 = vmatmul.mubr.f32.gmra.mxu0 %v4062
      %v4734 = vpop.f32.mrf.mxu0
      %v4735 = vadd.f32 %v4350, %v4734
      %v4736 = vpop.f32.mrf.mxu0
      %4737 = vmatprep.mubr.f32.mxu0 0.0
      %4738 = vmatmul.mubr.f32.gmra.mxu0 %v4065
      %v4739 = vpop.f32.mrf.mxu0
      %v4740 = vadd.f32 %v4355, %v4739
      %v4741 = vpop.f32.mrf.mxu0
      %4742 = vmatprep.mubr.f32.mxu0 0.0
      %4743 = vmatmul.mubr.f32.gmra.mxu0 %v4068
      %v4744 = vpop.f32.mrf.mxu0
      %v4745 = vadd.f32 %v4360, %v4744
      %v4746 = vpop.f32.mrf.mxu0
      %4747 = vmatprep.mubr.f32.mxu0 0.0
      %4748 = vmatmul.mubr.f32.gmra.mxu0 %v4071
      %v4749 = vpop.f32.mrf.mxu0
      %v4750 = vadd.f32 %v4365, %v4749
      %v4751 = vpop.f32.mrf.mxu0
      %4752 = vmatprep.mubr.f32.mxu0 0.0
      %4753 = vmatmul.mubr.f32.gmra.mxu0 %v4074
      %v4754 = vpop.f32.mrf.mxu0
      %v4755 = vadd.f32 %v4370, %v4754
      %v4756 = vpop.f32.mrf.mxu0
      %4757 = vmatprep.mubr.f32.mxu0 0.0
      %4758 = vmatmul.mubr.f32.gmra.mxu0 %v4077
      %v4759 = vpop.f32.mrf.mxu0
      %v4760 = vadd.f32 %v4375, %v4759
      %v4761 = vpop.f32.mrf.mxu0
      %4762 = vmatprep.mubr.f32.mxu0 0.0
      %4763 = vmatmul.mubr.f32.gmra.mxu0 %v4080
      %v4764 = vpop.f32.mrf.mxu0
      %v4765 = vadd.f32 %v4380, %v4764
      %v4766 = vpop.f32.mrf.mxu0
      %4767 = vmatprep.mubr.f32.mxu0 0.0
      %4768 = vmatmul.mubr.f32.gmra.mxu0 %v4083
      %v4769 = vpop.f32.mrf.mxu0
      %v4770 = vadd.f32 %v4385, %v4769
      %v4771 = vpop.f32.mrf.mxu0
      %4772 = vmatprep.mubr.f32.mxu0 0.0
      %4773 = vmatmul.mubr.f32.gmra.mxu0 %v4086
      %v4774 = vpop.f32.mrf.mxu0
      %v4775 = vadd.f32 %v4390, %v4774
      %v4776 = vpop.f32.mrf.mxu0
      %4777 = vmatprep.mubr.f32.mxu0 0.0
      %4778 = vmatmul.mubr.f32.gmra.mxu0 %v4089
      %v4779 = vpop.f32.mrf.mxu0
      %v4780 = vadd.f32 %v4395, %v4779
      %v4781 = vpop.f32.mrf.mxu0
      %4782 = vmatprep.mubr.f32.mxu0 0.0
      %4783 = vmatmul.mubr.f32.gmra.mxu0 %v4092
      %v4784 = vpop.f32.mrf.mxu0
      %v4785 = vadd.f32 %v4400, %v4784
      %v4786 = vpop.f32.mrf.mxu0
      %4787 = vmatprep.mubr.f32.mxu0 0.0
      %4788 = vmatmul.mubr.f32.gmra.mxu0 %v4095
      %v4789 = vpop.f32.mrf.mxu0
      %v4790 = vadd.f32 %v4405, %v4789
      %v4791 = vpop.f32.mrf.mxu0
      %4792 = vmatprep.mubr.f32.mxu0 0.0
      %4793 = vmatmul.mubr.f32.gmra.mxu0 %v4098
      %v4794 = vpop.f32.mrf.mxu0
      %v4795 = vadd.f32 %v4410, %v4794
      %v4796 = vpop.f32.mrf.mxu0
      %4797 = vmatprep.mubr.f32.mxu0 0.0
      %4798 = vmatmul.mubr.f32.gmra.mxu0 %v4101
      %v4799 = vpop.f32.mrf.mxu0
      %v4800 = vadd.f32 %v4415, %v4799
      %v4801 = vpop.f32.mrf.mxu0
      %4802 = vmatprep.mubr.f32.mxu0 0.0
      %4803 = vmatmul.mubr.f32.gmra.mxu0 %v4104
      %v4804 = vpop.f32.mrf.mxu0
      %v4805 = vadd.f32 %v4420, %v4804
      %v4806 = vpop.f32.mrf.mxu0
      %4807 = vmatprep.mubr.f32.mxu0 0.0
      %4808 = vmatmul.mubr.f32.gmra.mxu0 %v4107
      %v4809 = vpop.f32.mrf.mxu0
      %v4810 = vadd.f32 %v4425, %v4809
      %v4811 = vpop.f32.mrf.mxu0
      %4812 = vmatprep.mubr.f32.mxu0 0.0
      %4813 = vmatmul.mubr.f32.gmra.mxu0 %v4110
      %v4814 = vpop.f32.mrf.mxu0
      %v4815 = vadd.f32 %v4430, %v4814
      %v4816 = vpop.f32.mrf.mxu0
      %4817 = vmatprep.mubr.f32.mxu0 0.0
      %4818 = vmatmul.mubr.f32.gmra.mxu0 %v4113
      %v4819 = vpop.f32.mrf.mxu0
      %v4820 = vadd.f32 %v4435, %v4819
      %v4821 = vpop.f32.mrf.mxu0
      %4822 = vmatprep.mubr.f32.mxu0 0.0
      %4823 = vmatmul.mubr.f32.gmra.mxu0 %v4116
      %v4824 = vpop.f32.mrf.mxu0
      %v4825 = vadd.f32 %v4440, %v4824
      %v4826 = vpop.f32.mrf.mxu0
      %4827 = vmatprep.mubr.f32.mxu0 0.0
      %4828 = vmatmul.mubr.f32.gmra.mxu0 %v4119
      %v4829 = vpop.f32.mrf.mxu0
      %v4830 = vadd.f32 %v4445, %v4829
      %v4831 = vpop.f32.mrf.mxu0
      %4832 = vmatprep.mubr.f32.mxu0 0.0
      %4833 = vmatmul.mubr.f32.gmra.mxu0 %v4122
      %v4834 = vpop.f32.mrf.mxu0
      %v4835 = vadd.f32 %v4450, %v4834
      %v4836 = vpop.f32.mrf.mxu0
      %4837 = vmatprep.mubr.f32.mxu0 0.0
      %4838 = vmatmul.mubr.f32.gmra.mxu0 %v4125
      %v4839 = vpop.f32.mrf.mxu0
      %v4840 = vadd.f32 %v4455, %v4839
      %v4841 = vpop.f32.mrf.mxu0
      %4842 = vmatprep.mubr.f32.mxu0 0.0
      %4843 = vmatmul.mubr.f32.gmra.mxu0 %v4128
      %v4844 = vpop.f32.mrf.mxu0
      %v4845 = vadd.f32 %v4460, %v4844
      %v4846 = vpop.f32.mrf.mxu0
      %4847 = vmatprep.mubr.f32.mxu0 0.0
      %4848 = vmatmul.mubr.f32.gmra.mxu0 %v4131
      %v4849 = vpop.f32.mrf.mxu0
      %v4850 = vadd.f32 %v4465, %v4849
      %v4851 = vpop.f32.mrf.mxu0
      %4852 = vmatprep.mubr.f32.mxu0 0.0
      %4853 = vmatmul.mubr.f32.gmra.mxu0 %v4134
      %v4854 = vpop.f32.mrf.mxu0
      %v4855 = vadd.f32 %v4470, %v4854
      %v4856 = vpop.f32.mrf.mxu0
      %4857 = vmatprep.mubr.f32.mxu0 0.0
      %4858 = vmatmul.mubr.f32.gmra.mxu0 %v4137
      %v4859 = vpop.f32.mrf.mxu0
      %v4860 = vadd.f32 %v4475, %v4859
      %v4861 = vpop.f32.mrf.mxu0
      %4862 = vmatprep.mubr.f32.mxu0 0.0
      %4863 = vmatmul.mubr.f32.gmra.mxu0 %v4140
      %v4864 = vpop.f32.mrf.mxu0
      %v4865 = vadd.f32 %v4480, %v4864
      %v4866 = vpop.f32.mrf.mxu0
      %4867 = vmatprep.mubr.f32.mxu0 0.0
      %4868 = vmatmul.mubr.f32.gmra.mxu0 %v4143
      %v4869 = vpop.f32.mrf.mxu0
      %v4870 = vadd.f32 %v4485, %v4869
      %v4871 = vpop.f32.mrf.mxu0
      %4872 = vmatprep.mubr.f32.mxu0 0.0
      %4873 = vmatmul.mubr.f32.gmra.mxu0 %v4146
      %v4874 = vpop.f32.mrf.mxu0
      %v4875 = vadd.f32 %v4490, %v4874
      %v4876 = vpop.f32.mrf.mxu0
      %4877 = vmatprep.mubr.f32.mxu0 0.0
      %4878 = vmatmul.mubr.f32.gmra.mxu0 %v4149
      %v4879 = vpop.f32.mrf.mxu0
      %v4880 = vadd.f32 %v4495, %v4879
      %v4881 = vpop.f32.mrf.mxu0
      %4882 = vmatprep.mubr.f32.mxu0 0.0
      %4883 = vmatmul.mubr.f32.gmra.mxu0 %v4152
      %v4884 = vpop.f32.mrf.mxu0
      %v4885 = vadd.f32 %v4500, %v4884
      %v4886 = vpop.f32.mrf.mxu0
      %4887 = vmatprep.mubr.f32.mxu0 0.0
      %4888 = vmatmul.mubr.f32.gmra.mxu0 %v4155
      %v4889 = vpop.f32.mrf.mxu0
      %v4890 = vadd.f32 %v4505, %v4889
      %v4891 = vpop.f32.mrf.mxu0
      %4892 = vmatprep.mubr.f32.mxu0 0.0
      %4893 = vmatmul.mubr.f32.gmra.mxu0 %v4158
      %v4894 = vpop.f32.mrf.mxu0
      %v4895 = vadd.f32 %v4510, %v4894
      %v4896 = vpop.f32.mrf.mxu0
      %4897 = vmatprep.mubr.f32.mxu0 0.0
      %4898 = vmatmul.mubr.f32.gmra.mxu0 %v4161
      %v4899 = vpop.f32.mrf.mxu0
      %v4900 = vadd.f32 %v4515, %v4899
      %v4901 = vpop.f32.mrf.mxu0
      %4902 = vmatprep.mubr.f32.mxu0 0.0
      %4903 = vmatmul.mubr.f32.gmra.mxu0 %v4164
      %v4904 = vpop.f32.mrf.mxu0
      %v4905 = vadd.f32 %v4520, %v4904
      %v4906 = vpop.f32.mrf.mxu0
      %4907 = vmatprep.mubr.f32.mxu0 0.0
      %4908 = vmatmul.mubr.f32.gmra.mxu0 %v4167
      %v4909 = vpop.f32.mrf.mxu0
      %v4910 = vadd.f32 %v4525, %v4909
      %v4911 = vpop.f32.mrf.mxu0
      %4912 = vmatprep.mubr.f32.mxu0 0.0
      %4913 = vmatmul.mubr.f32.gmra.mxu0 %v4170
      %v4914 = vpop.f32.mrf.mxu0
      %v4915 = vadd.f32 %v4530, %v4914
      %v4916 = vpop.f32.mrf.mxu0
      %4917 = vmatprep.mubr.f32.mxu0 0.0
      %4918 = vmatmul.mubr.f32.gmra.mxu0 %v4173
      %v4919 = vpop.f32.mrf.mxu0
      %v4920 = vadd.f32 %v4535, %v4919
      %v4921 = vpop.f32.mrf.mxu0
      %4922 = vmatprep.mubr.f32.mxu0 0.0
      %4923 = vmatmul.mubr.f32.gmra.mxu0 %v4176
      %v4924 = vpop.f32.mrf.mxu0
      %v4925 = vadd.f32 %v4540, %v4924
      %v4926 = vpop.f32.mrf.mxu0
      %4927 = vmatprep.mubr.f32.mxu0 0.0
      %4928 = vmatmul.mubr.f32.gmra.mxu0 %v4179
      %v4929 = vpop.f32.mrf.mxu0
      %v4930 = vadd.f32 %v4545, %v4929
      %v4931 = vpop.f32.mrf.mxu0
      %4932 = vmatprep.mubr.f32.mxu0 0.0
      %4933 = vmatmul.mubr.f32.gmra.mxu0 %v4182
      %v4934 = vpop.f32.mrf.mxu0
      %v4935 = vadd.f32 %v4550, %v4934
      %v4936 = vpop.f32.mrf.mxu0
      %4937 = vmatprep.mubr.f32.mxu0 0.0
      %4938 = vmatmul.mubr.f32.gmra.mxu0 %v4185
      %v4939 = vpop.f32.mrf.mxu0
      %v4940 = vadd.f32 %v4555, %v4939
      %v4941 = vpop.f32.mrf.mxu0
      %4942 = vmatprep.mubr.f32.mxu0 0.0
      %4943 = vmatmul.mubr.f32.gmra.mxu0 %v4188
      %v4944 = vpop.f32.mrf.mxu0
      %v4945 = vadd.f32 %v4560, %v4944
      %v4946 = vpop.f32.mrf.mxu0
      %4947 = vmatprep.mubr.f32.mxu0 0.0
      %4948 = vmatmul.mubr.f32.gmra.mxu0 %v4191
      %v4949 = vpop.f32.mrf.mxu0
      %v4950 = vadd.f32 %v4565, %v4949
      %v4951 = vpop.f32.mrf.mxu0
      %4952 = vmatprep.mubr.f32.mxu0 0.0
      %4953 = vmatmul.mubr.f32.gmra.mxu0 %v4194
      %v4954 = vpop.f32.mrf.mxu0
      %v4955 = vadd.f32 %v4570, %v4954
      %v4956 = vpop.f32.mrf.mxu0
      %4957 = vmatprep.mubr.f32.mxu0 0.0
      %4958 = vmatmul.mubr.f32.gmra.mxu0 %v4197
      %v4959 = vpop.f32.mrf.mxu0
      %v4960 = vadd.f32 %v4575, %v4959
      %v4961 = vpop.f32.mrf.mxu0
      %4962 = vmatprep.mubr.f32.mxu0 0.0
      %4963 = vmatmul.mubr.f32.gmra.mxu0 %v4200
      %v4964 = vpop.f32.mrf.mxu0
      %v4965 = vadd.f32 %v4580, %v4964
      %v4966 = vpop.f32.mrf.mxu0
      %4967 = vmatprep.mubr.f32.mxu0 0.0
      %4968 = vmatmul.mubr.f32.gmra.mxu0 %v4203
      %v4969 = vpop.f32.mrf.mxu0
      %v4970 = vadd.f32 %v4585, %v4969
      %v4971 = vpop.f32.mrf.mxu0
      %4972 = vmatprep.mubr.f32.mxu0 0.0
      %4973 = vmatmul.mubr.f32.gmra.mxu0 %v4206
      %v4974 = vpop.f32.mrf.mxu0
      %v4975 = vadd.f32 %v4590, %v4974
      %v4976 = vpop.f32.mrf.mxu0
      %4977 = vdwg.mxu0
      %vm4978 = vcmp.ge.f32.partialorder %v4660, 0.0
      %vm4979 = vcmp.ge.f32.partialorder %v4665, 0.0
      %vm4980 = vcmp.ge.f32.partialorder %v4670, 0.0
      %vm4981 = vcmp.ge.f32.partialorder %v4675, 0.0
      %vm4982 = vcmp.ge.f32.partialorder %v4680, 0.0
      %vm4983 = vcmp.ge.f32.partialorder %v4685, 0.0
      %vm4984 = vcmp.ge.f32.partialorder %v4690, 0.0
      %vm4985 = vcmp.ge.f32.partialorder %v4695, 0.0
      %vm4986 = vcmp.ge.f32.partialorder %v4700, 0.0
      %vm4987 = vcmp.ge.f32.partialorder %v4705, 0.0
      %vm4988 = vcmp.ge.f32.partialorder %v4710, 0.0
      %vm4989 = vcmp.ge.f32.partialorder %v4715, 0.0
      %vm4990 = vcmp.ge.f32.partialorder %v4720, 0.0
      %vm4991 = vcmp.ge.f32.partialorder %v4725, 0.0
      %vm4992 = vcmp.ge.f32.partialorder %v4730, 0.0
      %vm4993 = vcmp.ge.f32.partialorder %v4735, 0.0
      %vm4994 = vcmp.ge.f32.partialorder %v4740, 0.0
      %vm4995 = vcmp.ge.f32.partialorder %v4745, 0.0
      %vm4996 = vcmp.ge.f32.partialorder %v4750, 0.0
      %vm4997 = vcmp.ge.f32.partialorder %v4755, 0.0
      %vm4998 = vcmp.ge.f32.partialorder %v4760, 0.0
      %vm4999 = vcmp.ge.f32.partialorder %v4765, 0.0
      %vm5000 = vcmp.ge.f32.partialorder %v4770, 0.0
      %vm5001 = vcmp.ge.f32.partialorder %v4775, 0.0
      %vm5002 = vcmp.ge.f32.partialorder %v4780, 0.0
      %vm5003 = vcmp.ge.f32.partialorder %v4785, 0.0
      %vm5004 = vcmp.ge.f32.partialorder %v4790, 0.0
      %vm5005 = vcmp.ge.f32.partialorder %v4795, 0.0
      %vm5006 = vcmp.ge.f32.partialorder %v4800, 0.0
      %vm5007 = vcmp.ge.f32.partialorder %v4805, 0.0
      %vm5008 = vcmp.ge.f32.partialorder %v4810, 0.0
      %vm5009 = vcmp.ge.f32.partialorder %v4815, 0.0
      %vm5010 = vcmp.ge.f32.partialorder %v4820, 0.0
      %vm5011 = vcmp.ge.f32.partialorder %v4825, 0.0
      %vm5012 = vcmp.ge.f32.partialorder %v4830, 0.0
      %vm5013 = vcmp.ge.f32.partialorder %v4835, 0.0
      %vm5014 = vcmp.ge.f32.partialorder %v4840, 0.0
      %vm5015 = vcmp.ge.f32.partialorder %v4845, 0.0
      %vm5016 = vcmp.ge.f32.partialorder %v4850, 0.0
      %vm5017 = vcmp.ge.f32.partialorder %v4855, 0.0
      %vm5018 = vcmp.ge.f32.partialorder %v4860, 0.0
      %vm5019 = vcmp.ge.f32.partialorder %v4865, 0.0
      %vm5020 = vcmp.ge.f32.partialorder %v4870, 0.0
      %vm5021 = vcmp.ge.f32.partialorder %v4875, 0.0
      %vm5022 = vcmp.ge.f32.partialorder %v4880, 0.0
      %vm5023 = vcmp.ge.f32.partialorder %v4885, 0.0
      %vm5024 = vcmp.ge.f32.partialorder %v4890, 0.0
      %vm5025 = vcmp.ge.f32.partialorder %v4895, 0.0
      %vm5026 = vcmp.ge.f32.partialorder %v4900, 0.0
      %vm5027 = vcmp.ge.f32.partialorder %v4905, 0.0
      %vm5028 = vcmp.ge.f32.partialorder %v4910, 0.0
      %vm5029 = vcmp.ge.f32.partialorder %v4915, 0.0
      %vm5030 = vcmp.ge.f32.partialorder %v4920, 0.0
      %vm5031 = vcmp.ge.f32.partialorder %v4925, 0.0
      %vm5032 = vcmp.ge.f32.partialorder %v4930, 0.0
      %vm5033 = vcmp.ge.f32.partialorder %v4935, 0.0
      %vm5034 = vcmp.ge.f32.partialorder %v4940, 0.0
      %vm5035 = vcmp.ge.f32.partialorder %v4945, 0.0
      %vm5036 = vcmp.ge.f32.partialorder %v4950, 0.0
      %vm5037 = vcmp.ge.f32.partialorder %v4955, 0.0
      %vm5038 = vcmp.ge.f32.partialorder %v4960, 0.0
      %vm5039 = vcmp.ge.f32.partialorder %v4965, 0.0
      %vm5040 = vcmp.ge.f32.partialorder %v4970, 0.0
      %vm5041 = vcmp.ge.f32.partialorder %v4975, 0.0
      %v5042 = vmul.f32 %v4660, 0.01
      %v5043 = vmul.f32 %v4665, 0.01
      %v5044 = vmul.f32 %v4670, 0.01
      %v5045 = vmul.f32 %v4675, 0.01
      %v5046 = vmul.f32 %v4680, 0.01
      %v5047 = vmul.f32 %v4685, 0.01
      %v5048 = vmul.f32 %v4690, 0.01
      %v5049 = vmul.f32 %v4695, 0.01
      %v5050 = vmul.f32 %v4700, 0.01
      %v5051 = vmul.f32 %v4705, 0.01
      %v5052 = vmul.f32 %v4710, 0.01
      %v5053 = vmul.f32 %v4715, 0.01
      %v5054 = vmul.f32 %v4720, 0.01
      %v5055 = vmul.f32 %v4725, 0.01
      %v5056 = vmul.f32 %v4730, 0.01
      %v5057 = vmul.f32 %v4735, 0.01
      %v5058 = vmul.f32 %v4740, 0.01
      %v5059 = vmul.f32 %v4745, 0.01
      %v5060 = vmul.f32 %v4750, 0.01
      %v5061 = vmul.f32 %v4755, 0.01
      %v5062 = vmul.f32 %v4760, 0.01
      %v5063 = vmul.f32 %v4765, 0.01
      %v5064 = vmul.f32 %v4770, 0.01
      %v5065 = vmul.f32 %v4775, 0.01
      %v5066 = vmul.f32 %v4780, 0.01
      %v5067 = vmul.f32 %v4785, 0.01
      %v5068 = vmul.f32 %v4790, 0.01
      %v5069 = vmul.f32 %v4795, 0.01
      %v5070 = vmul.f32 %v4800, 0.01
      %v5071 = vmul.f32 %v4805, 0.01
      %v5072 = vmul.f32 %v4810, 0.01
      %v5073 = vmul.f32 %v4815, 0.01
      %v5074 = vmul.f32 %v4820, 0.01
      %v5075 = vmul.f32 %v4825, 0.01
      %v5076 = vmul.f32 %v4830, 0.01
      %v5077 = vmul.f32 %v4835, 0.01
      %v5078 = vmul.f32 %v4840, 0.01
      %v5079 = vmul.f32 %v4845, 0.01
      %v5080 = vmul.f32 %v4850, 0.01
      %v5081 = vmul.f32 %v4855, 0.01
      %v5082 = vmul.f32 %v4860, 0.01
      %v5083 = vmul.f32 %v4865, 0.01
      %v5084 = vmul.f32 %v4870, 0.01
      %v5085 = vmul.f32 %v4875, 0.01
      %v5086 = vmul.f32 %v4880, 0.01
      %v5087 = vmul.f32 %v4885, 0.01
      %v5088 = vmul.f32 %v4890, 0.01
      %v5089 = vmul.f32 %v4895, 0.01
      %v5090 = vmul.f32 %v4900, 0.01
      %v5091 = vmul.f32 %v4905, 0.01
      %v5092 = vmul.f32 %v4910, 0.01
      %v5093 = vmul.f32 %v4915, 0.01
      %v5094 = vmul.f32 %v4920, 0.01
      %v5095 = vmul.f32 %v4925, 0.01
      %v5096 = vmul.f32 %v4930, 0.01
      %v5097 = vmul.f32 %v4935, 0.01
      %v5098 = vmul.f32 %v4940, 0.01
      %v5099 = vmul.f32 %v4945, 0.01
      %v5100 = vmul.f32 %v4950, 0.01
      %v5101 = vmul.f32 %v4955, 0.01
      %v5102 = vmul.f32 %v4960, 0.01
      %v5103 = vmul.f32 %v4965, 0.01
      %v5104 = vmul.f32 %v4970, 0.01
      %v5105 = vmul.f32 %v4975, 0.01
      %v5106 = vsel %vm4978, %v4660, %v5042
      %v5107 = vsel %vm4979, %v4665, %v5043
      %v5108 = vsel %vm4980, %v4670, %v5044
      %v5109 = vsel %vm4981, %v4675, %v5045
      %v5110 = vsel %vm4982, %v4680, %v5046
      %v5111 = vsel %vm4983, %v4685, %v5047
      %v5112 = vsel %vm4984, %v4690, %v5048
      %v5113 = vsel %vm4985, %v4695, %v5049
      %v5114 = vsel %vm4986, %v4700, %v5050
      %v5115 = vsel %vm4987, %v4705, %v5051
      %v5116 = vsel %vm4988, %v4710, %v5052
      %v5117 = vsel %vm4989, %v4715, %v5053
      %v5118 = vsel %vm4990, %v4720, %v5054
      %v5119 = vsel %vm4991, %v4725, %v5055
      %v5120 = vsel %vm4992, %v4730, %v5056
      %v5121 = vsel %vm4993, %v4735, %v5057
      %v5122 = vsel %vm4994, %v4740, %v5058
      %v5123 = vsel %vm4995, %v4745, %v5059
      %v5124 = vsel %vm4996, %v4750, %v5060
      %v5125 = vsel %vm4997, %v4755, %v5061
      %v5126 = vsel %vm4998, %v4760, %v5062
      %v5127 = vsel %vm4999, %v4765, %v5063
      %v5128 = vsel %vm5000, %v4770, %v5064
      %v5129 = vsel %vm5001, %v4775, %v5065
      %v5130 = vsel %vm5002, %v4780, %v5066
      %v5131 = vsel %vm5003, %v4785, %v5067
      %v5132 = vsel %vm5004, %v4790, %v5068
      %v5133 = vsel %vm5005, %v4795, %v5069
      %v5134 = vsel %vm5006, %v4800, %v5070
      %v5135 = vsel %vm5007, %v4805, %v5071
      %v5136 = vsel %vm5008, %v4810, %v5072
      %v5137 = vsel %vm5009, %v4815, %v5073
      %v5138 = vsel %vm5010, %v4820, %v5074
      %v5139 = vsel %vm5011, %v4825, %v5075
      %v5140 = vsel %vm5012, %v4830, %v5076
      %v5141 = vsel %vm5013, %v4835, %v5077
      %v5142 = vsel %vm5014, %v4840, %v5078
      %v5143 = vsel %vm5015, %v4845, %v5079
      %v5144 = vsel %vm5016, %v4850, %v5080
      %v5145 = vsel %vm5017, %v4855, %v5081
      %v5146 = vsel %vm5018, %v4860, %v5082
      %v5147 = vsel %vm5019, %v4865, %v5083
      %v5148 = vsel %vm5020, %v4870, %v5084
      %v5149 = vsel %vm5021, %v4875, %v5085
      %v5150 = vsel %vm5022, %v4880, %v5086
      %v5151 = vsel %vm5023, %v4885, %v5087
      %v5152 = vsel %vm5024, %v4890, %v5088
      %v5153 = vsel %vm5025, %v4895, %v5089
      %v5154 = vsel %vm5026, %v4900, %v5090
      %v5155 = vsel %vm5027, %v4905, %v5091
      %v5156 = vsel %vm5028, %v4910, %v5092
      %v5157 = vsel %vm5029, %v4915, %v5093
      %v5158 = vsel %vm5030, %v4920, %v5094
      %v5159 = vsel %vm5031, %v4925, %v5095
      %v5160 = vsel %vm5032, %v4930, %v5096
      %v5161 = vsel %vm5033, %v4935, %v5097
      %v5162 = vsel %vm5034, %v4940, %v5098
      %v5163 = vsel %vm5035, %v4945, %v5099
      %v5164 = vsel %vm5036, %v4950, %v5100
      %v5165 = vsel %vm5037, %v4955, %v5101
      %v5166 = vsel %vm5038, %v4960, %v5102
      %v5167 = vsel %vm5039, %v4965, %v5103
      %v5168 = vsel %vm5040, %v4970, %v5104
      %v5169 = vsel %vm5041, %v4975, %v5105
      %5170 = vst.msk [vmem:[%s1344 + $0x8] sm:$0xff] %vm509, %v5106
      %5171 = vst.msk [vmem:[%s1344 + $0x10] sm:$0xff] %vm509, %v5107
      %5172 = vst.msk [vmem:[%s1344 + $0x28] sm:$0xff] %vm509, %v5108
      %5173 = vst.msk [vmem:[%s1344 + $0x30] sm:$0xff] %vm509, %v5109
      %5174 = vst.msk [vmem:[%s1344 + $0x48] sm:$0xff] %vm509, %v5110
      %5175 = vst.msk [vmem:[%s1344 + $0x50] sm:$0xff] %vm509, %v5111
      %5176 = vst.msk [vmem:[%s1344 + $0x68] sm:$0xff] %vm509, %v5112
      %5177 = vst.msk [vmem:[%s1344 + $0x70] sm:$0xff] %vm509, %v5113
      %5178 = vst.msk [vmem:[%s1344 + $0x88] sm:$0xff] %vm509, %v5114
      %5179 = vst.msk [vmem:[%s1344 + $0x90] sm:$0xff] %vm509, %v5115
      %5180 = vst.msk [vmem:[%s1344 + $0xa8] sm:$0xff] %vm509, %v5116
      %5181 = vst.msk [vmem:[%s1344 + $0xb0] sm:$0xff] %vm509, %v5117
      %5182 = vst.msk [vmem:[%s1344 + $0xc8] sm:$0xff] %vm509, %v5118
      %5183 = vst.msk [vmem:[%s1344 + $0xd0] sm:$0xff] %vm509, %v5119
      %5184 = vst.msk [vmem:[%s1344 + $0xe8] sm:$0xff] %vm509, %v5120
      %5185 = vst.msk [vmem:[%s1344 + $0xf0] sm:$0xff] %vm509, %v5121
      %5186 = vst.msk [vmem:[%s1344 + $0x108] sm:$0xff] %vm509, %v5122
      %5187 = vst.msk [vmem:[%s1344 + $0x110] sm:$0xff] %vm509, %v5123
      %5188 = vst.msk [vmem:[%s1344 + $0x128] sm:$0xff] %vm509, %v5124
      %5189 = vst.msk [vmem:[%s1344 + $0x130] sm:$0xff] %vm509, %v5125
      %5190 = vst.msk [vmem:[%s1344 + $0x148] sm:$0xff] %vm509, %v5126
      %5191 = vst.msk [vmem:[%s1344 + $0x150] sm:$0xff] %vm509, %v5127
      %5192 = vst.msk [vmem:[%s1344 + $0x168] sm:$0xff] %vm509, %v5128
      %5193 = vst.msk [vmem:[%s1344 + $0x170] sm:$0xff] %vm509, %v5129
      %5194 = vst.msk [vmem:[%s1344 + $0x188] sm:$0xff] %vm509, %v5130
      %5195 = vst.msk [vmem:[%s1344 + $0x190] sm:$0xff] %vm509, %v5131
      %5196 = vst.msk [vmem:[%s1344 + $0x1a8] sm:$0xff] %vm509, %v5132
      %5197 = vst.msk [vmem:[%s1344 + $0x1b0] sm:$0xff] %vm509, %v5133
      %5198 = vst.msk [vmem:[%s1344 + $0x1c8] sm:$0xff] %vm509, %v5134
      %5199 = vst.msk [vmem:[%s1344 + $0x1d0] sm:$0xff] %vm509, %v5135
      %5200 = vst.msk [vmem:[%s1344 + $0x1e8] sm:$0xff] %vm509, %v5136
      %5201 = vst.msk [vmem:[%s1344 + $0x1f0] sm:$0xff] %vm509, %v5137
      %5202 = vst.msk [vmem:[%s1344 + $0x288] sm:$0xff] %vm509, %v5138
      %5203 = vst.msk [vmem:[%s1344 + $0x290] sm:$0xff] %vm509, %v5139
      %5204 = vst.msk [vmem:[%s1344 + $0x2a8] sm:$0xff] %vm509, %v5140
      %5205 = vst.msk [vmem:[%s1344 + $0x2b0] sm:$0xff] %vm509, %v5141
      %5206 = vst.msk [vmem:[%s1344 + $0x2c8] sm:$0xff] %vm509, %v5142
      %5207 = vst.msk [vmem:[%s1344 + $0x2d0] sm:$0xff] %vm509, %v5143
      %5208 = vst.msk [vmem:[%s1344 + $0x2e8] sm:$0xff] %vm509, %v5144
      %5209 = vst.msk [vmem:[%s1344 + $0x2f0] sm:$0xff] %vm509, %v5145
      %5210 = vst.msk [vmem:[%s1344 + $0x308] sm:$0xff] %vm509, %v5146
      %5211 = vst.msk [vmem:[%s1344 + $0x310] sm:$0xff] %vm509, %v5147
      %5212 = vst.msk [vmem:[%s1344 + $0x328] sm:$0xff] %vm509, %v5148
      %5213 = vst.msk [vmem:[%s1344 + $0x330] sm:$0xff] %vm509, %v5149
      %5214 = vst.msk [vmem:[%s1344 + $0x348] sm:$0xff] %vm509, %v5150
      %5215 = vst.msk [vmem:[%s1344 + $0x350] sm:$0xff] %vm509, %v5151
      %5216 = vst.msk [vmem:[%s1344 + $0x368] sm:$0xff] %vm509, %v5152
      %5217 = vst.msk [vmem:[%s1344 + $0x370] sm:$0xff] %vm509, %v5153
      %5218 = vst.msk [vmem:[%s1344 + $0x388] sm:$0xff] %vm509, %v5154
      %5219 = vst.msk [vmem:[%s1344 + $0x390] sm:$0xff] %vm509, %v5155
      %5220 = vst.msk [vmem:[%s1344 + $0x3a8] sm:$0xff] %vm509, %v5156
      %5221 = vst.msk [vmem:[%s1344 + $0x3b0] sm:$0xff] %vm509, %v5157
      %5222 = vst.msk [vmem:[%s1344 + $0x3c8] sm:$0xff] %vm509, %v5158
      %5223 = vst.msk [vmem:[%s1344 + $0x3d0] sm:$0xff] %vm509, %v5159
      %5224 = vst.msk [vmem:[%s1344 + $0x3e8] sm:$0xff] %vm509, %v5160
      %5225 = vst.msk [vmem:[%s1344 + $0x3f0] sm:$0xff] %vm509, %v5161
      %5226 = vst.msk [vmem:[%s1344 + $0x408] sm:$0xff] %vm509, %v5162
      %5227 = vst.msk [vmem:[%s1344 + $0x410] sm:$0xff] %vm509, %v5163
      %5228 = vst.msk [vmem:[%s1344 + $0x428] sm:$0xff] %vm509, %v5164
      %5229 = vst.msk [vmem:[%s1344 + $0x430] sm:$0xff] %vm509, %v5165
      %5230 = vst.msk [vmem:[%s1344 + $0x448] sm:$0xff] %vm509, %v5166
      %5231 = vst.msk [vmem:[%s1344 + $0x450] sm:$0xff] %vm509, %v5167
      %5232 = vst.msk [vmem:[%s1344 + $0x468] sm:$0xff] %vm509, %v5168
      %5233 = vst.msk [vmem:[%s1344 + $0x470] sm:$0xff] %vm509, %v5169
      %v5234 = vld [vmem:[%s3] sm:$0xff]
      %v5235 = vld [vmem:[%s3 + $0x8] sm:$0xff]
      %v5236 = vld [vmem:[%s3 + $0x10] sm:$0xff]
      %v5237 = vld [vmem:[%s3 + $0x18] sm:$0xff]
      %v5239 = vsel %vm509, %v5234, 0
      %v5242 = vsel %vm509, %v5235, 0
      %v5245 = vsel %vm509, %v5236, 0
      %v5248 = vsel %vm509, %v5237, 0
      %v5251 = vsel %vm509, %v5106, 0
      %v5254 = vsel %vm509, %v5107, 0
      %v5257 = vsel %vm509, %v5108, 0
      %v5260 = vsel %vm509, %v5109, 0
      %v5263 = vsel %vm509, %v5110, 0
      %v5266 = vsel %vm509, %v5111, 0
      %v5269 = vsel %vm509, %v5112, 0
      %v5272 = vsel %vm509, %v5113, 0
      %v5275 = vsel %vm509, %v5114, 0
      %v5278 = vsel %vm509, %v5115, 0
      %v5281 = vsel %vm509, %v5116, 0
      %v5284 = vsel %vm509, %v5117, 0
      %v5287 = vsel %vm509, %v5118, 0
      %v5290 = vsel %vm509, %v5119, 0
      %v5293 = vsel %vm509, %v5120, 0
      %v5296 = vsel %vm509, %v5121, 0
      %v5299 = vsel %vm509, %v5122, 0
      %v5302 = vsel %vm509, %v5123, 0
      %v5305 = vsel %vm509, %v5124, 0
      %v5308 = vsel %vm509, %v5125, 0
      %v5311 = vsel %vm509, %v5126, 0
      %v5314 = vsel %vm509, %v5127, 0
      %v5317 = vsel %vm509, %v5128, 0
      %v5320 = vsel %vm509, %v5129, 0
      %v5323 = vsel %vm509, %v5130, 0
      %v5326 = vsel %vm509, %v5131, 0
      %v5329 = vsel %vm509, %v5132, 0
      %v5332 = vsel %vm509, %v5133, 0
      %v5335 = vsel %vm509, %v5134, 0
      %v5338 = vsel %vm509, %v5135, 0
      %v5341 = vsel %vm509, %v5136, 0
      %v5344 = vsel %vm509, %v5137, 0
      %v5347 = vsel %vm509, %v5138, 0
      %v5350 = vsel %vm509, %v5139, 0
      %v5353 = vsel %vm509, %v5140, 0
      %v5356 = vsel %vm509, %v5141, 0
      %v5359 = vsel %vm509, %v5142, 0
      %v5362 = vsel %vm509, %v5143, 0
      %v5365 = vsel %vm509, %v5144, 0
      %v5368 = vsel %vm509, %v5145, 0
      %v5371 = vsel %vm509, %v5146, 0
      %v5374 = vsel %vm509, %v5147, 0
      %v5377 = vsel %vm509, %v5148, 0
      %v5380 = vsel %vm509, %v5149, 0
      %v5383 = vsel %vm509, %v5150, 0
      %v5386 = vsel %vm509, %v5151, 0
      %v5389 = vsel %vm509, %v5152, 0
      %v5392 = vsel %vm509, %v5153, 0
      %v5395 = vsel %vm509, %v5154, 0
      %v5398 = vsel %vm509, %v5155, 0
      %v5401 = vsel %vm509, %v5156, 0
      %v5404 = vsel %vm509, %v5157, 0
      %v5407 = vsel %vm509, %v5158, 0
      %v5410 = vsel %vm509, %v5159, 0
      %v5413 = vsel %vm509, %v5160, 0
      %v5416 = vsel %vm509, %v5161, 0
      %v5419 = vsel %vm509, %v5162, 0
      %v5422 = vsel %vm509, %v5163, 0
      %v5425 = vsel %vm509, %v5164, 0
      %v5428 = vsel %vm509, %v5165, 0
      %v5431 = vsel %vm509, %v5166, 0
      %v5434 = vsel %vm509, %v5167, 0
      %v5437 = vsel %vm509, %v5168, 0
      %v5440 = vsel %vm509, %v5169, 0
      %5442 = vmatprep.subr.mxu0 0.0
      %5443 = vmatpush1.xpose.msra.mxu0 %v5296
      %5444 = vmatprep.subr.mxu0 0.0
      %5445 = vmatpush1.xpose.msra.mxu0 %v5293
      %5446 = vmatprep.subr.mxu0 0.0
      %5447 = vmatpush1.xpose.msra.mxu0 %v5290
      %5448 = vmatprep.subr.mxu0 0.0
      %5449 = vmatpush1.xpose.msra.mxu0 %v5287
      %5450 = vmatprep.subr.mxu0 0.0
      %5451 = vmatpush1.xpose.msra.mxu0 %v5284
      %5452 = vmatprep.subr.mxu0 0.0
      %5453 = vmatpush1.xpose.msra.mxu0 %v5281
      %5454 = vmatprep.subr.mxu0 0.0
      %5455 = vmatpush1.xpose.msra.mxu0 %v5278
      %5456 = vmatprep.subr.mxu0 0.0
      %5457 = vmatpush1.xpose.msra.mxu0 %v5275
      %5458 = vmatprep.subr.mxu0 0.0
      %5459 = vmatpush1.xpose.msra.mxu0 %v5272
      %5460 = vmatprep.subr.mxu0 0.0
      %5461 = vmatpush1.xpose.msra.mxu0 %v5269
      %5462 = vmatprep.subr.mxu0 0.0
      %5463 = vmatpush1.xpose.msra.mxu0 %v5266
      %5464 = vmatprep.subr.mxu0 0.0
      %5465 = vmatpush1.xpose.msra.mxu0 %v5263
      %5466 = vmatprep.subr.mxu0 0.0
      %5467 = vmatpush1.xpose.msra.mxu0 %v5260
      %5468 = vmatprep.subr.mxu0 0.0
      %5469 = vmatpush1.xpose.msra.mxu0 %v5257
      %5470 = vmatprep.subr.mxu0 0.0
      %5471 = vmatpush1.xpose.msra.mxu0 %v5254
      %5472 = vmatprep.subr.mxu0 0.0
      %5473 = vmatpush1.xpose.msra.mxu0 %v5251
      %5474 = vmatprep.subr.mxu0 0.0
      %5475 = vmatpush2.xpose.msra.mxu0 %v5344
      %5476 = vmatprep.subr.mxu0 0.0
      %5477 = vmatpush2.xpose.msra.mxu0 %v5341
      %5478 = vmatprep.subr.mxu0 0.0
      %5479 = vmatpush2.xpose.msra.mxu0 %v5338
      %5480 = vmatprep.subr.mxu0 0.0
      %5481 = vmatpush2.xpose.msra.mxu0 %v5335
      %5482 = vmatprep.subr.mxu0 0.0
      %5483 = vmatpush2.xpose.msra.mxu0 %v5332
      %5484 = vmatprep.subr.mxu0 0.0
      %5485 = vmatpush2.xpose.msra.mxu0 %v5329
      %5486 = vmatprep.subr.mxu0 0.0
      %5487 = vmatpush2.xpose.msra.mxu0 %v5326
      %5488 = vmatprep.subr.mxu0 0.0
      %5489 = vmatpush2.xpose.msra.mxu0 %v5323
      %5490 = vmatprep.subr.mxu0 0.0
      %5491 = vmatpush2.xpose.msra.mxu0 %v5320
      %5492 = vmatprep.subr.mxu0 0.0
      %5493 = vmatpush2.xpose.msra.mxu0 %v5317
      %5494 = vmatprep.subr.mxu0 0.0
      %5495 = vmatpush2.xpose.msra.mxu0 %v5314
      %5496 = vmatprep.subr.mxu0 0.0
      %5497 = vmatpush2.xpose.msra.mxu0 %v5311
      %5498 = vmatprep.subr.mxu0 0.0
      %5499 = vmatpush2.xpose.msra.mxu0 %v5308
      %5500 = vmatprep.subr.mxu0 0.0
      %5501 = vmatpush2.xpose.msra.mxu0 %v5305
      %5502 = vmatprep.subr.mxu0 0.0
      %5503 = vmatpush2.xpose.msra.mxu0 %v5302
      %5504 = vmatprep.subr.mxu0 0.0
      %5505 = vmatpush2.xpose.msra.mxu0 %v5299
      %5506 = vmatprep.mubr.f32.mxu0 0.0
      %5507 = vmatmul.mubr.f32.gmra.mxu0 %v5239
      %v5508 = vpop.f32.mrf.mxu0
      %v5509 = vadd.f32 0.0, %v5508
      %v5510 = vpop.f32.mrf.mxu0
      %v5511 = vadd.f32 0.0, %v5510
      %5512 = vmatprep.mubr.f32.mxu0 0.0
      %5513 = vmatmul.mubr.f32.gmra.mxu0 %v5242
      %v5514 = vpop.f32.mrf.mxu0
      %v5515 = vadd.f32 0.0, %v5514
      %v5516 = vpop.f32.mrf.mxu0
      %v5517 = vadd.f32 0.0, %v5516
      %5518 = vmatprep.mubr.f32.mxu0 0.0
      %5519 = vmatmul.mubr.f32.gmra.mxu0 %v5245
      %v5520 = vpop.f32.mrf.mxu0
      %v5521 = vadd.f32 0.0, %v5520
      %v5522 = vpop.f32.mrf.mxu0
      %v5523 = vadd.f32 0.0, %v5522
      %5524 = vmatprep.mubr.f32.mxu0 0.0
      %5525 = vmatmul.mubr.f32.gmra.mxu0 %v5248
      %v5526 = vpop.f32.mrf.mxu0
      %v5527 = vadd.f32 0.0, %v5526
      %v5528 = vpop.f32.mrf.mxu0
      %v5529 = vadd.f32 0.0, %v5528
      %5530 = vdwg.mxu0
      %5531 = vmatprep.subr.mxu0 0.0
      %5532 = vmatpush1.xpose.msra.mxu0 %v5392
      %5533 = vmatprep.subr.mxu0 0.0
      %5534 = vmatpush1.xpose.msra.mxu0 %v5389
      %5535 = vmatprep.subr.mxu0 0.0
      %5536 = vmatpush1.xpose.msra.mxu0 %v5386
      %5537 = vmatprep.subr.mxu0 0.0
      %5538 = vmatpush1.xpose.msra.mxu0 %v5383
      %5539 = vmatprep.subr.mxu0 0.0
      %5540 = vmatpush1.xpose.msra.mxu0 %v5380
      %5541 = vmatprep.subr.mxu0 0.0
      %5542 = vmatpush1.xpose.msra.mxu0 %v5377
      %5543 = vmatprep.subr.mxu0 0.0
      %5544 = vmatpush1.xpose.msra.mxu0 %v5374
      %5545 = vmatprep.subr.mxu0 0.0
      %5546 = vmatpush1.xpose.msra.mxu0 %v5371
      %5547 = vmatprep.subr.mxu0 0.0
      %5548 = vmatpush1.xpose.msra.mxu0 %v5368
      %5549 = vmatprep.subr.mxu0 0.0
      %5550 = vmatpush1.xpose.msra.mxu0 %v5365
      %5551 = vmatprep.subr.mxu0 0.0
      %5552 = vmatpush1.xpose.msra.mxu0 %v5362
      %5553 = vmatprep.subr.mxu0 0.0
      %5554 = vmatpush1.xpose.msra.mxu0 %v5359
      %5555 = vmatprep.subr.mxu0 0.0
      %5556 = vmatpush1.xpose.msra.mxu0 %v5356
      %5557 = vmatprep.subr.mxu0 0.0
      %5558 = vmatpush1.xpose.msra.mxu0 %v5353
      %5559 = vmatprep.subr.mxu0 0.0
      %5560 = vmatpush1.xpose.msra.mxu0 %v5350
      %5561 = vmatprep.subr.mxu0 0.0
      %5562 = vmatpush1.xpose.msra.mxu0 %v5347
      %5563 = vmatprep.subr.mxu0 0.0
      %5564 = vmatpush2.xpose.msra.mxu0 %v5440
      %5565 = vmatprep.subr.mxu0 0.0
      %5566 = vmatpush2.xpose.msra.mxu0 %v5437
      %5567 = vmatprep.subr.mxu0 0.0
      %5568 = vmatpush2.xpose.msra.mxu0 %v5434
      %5569 = vmatprep.subr.mxu0 0.0
      %5570 = vmatpush2.xpose.msra.mxu0 %v5431
      %5571 = vmatprep.subr.mxu0 0.0
      %5572 = vmatpush2.xpose.msra.mxu0 %v5428
      %5573 = vmatprep.subr.mxu0 0.0
      %5574 = vmatpush2.xpose.msra.mxu0 %v5425
      %5575 = vmatprep.subr.mxu0 0.0
      %5576 = vmatpush2.xpose.msra.mxu0 %v5422
      %5577 = vmatprep.subr.mxu0 0.0
      %5578 = vmatpush2.xpose.msra.mxu0 %v5419
      %5579 = vmatprep.subr.mxu0 0.0
      %5580 = vmatpush2.xpose.msra.mxu0 %v5416
      %5581 = vmatprep.subr.mxu0 0.0
      %5582 = vmatpush2.xpose.msra.mxu0 %v5413
      %5583 = vmatprep.subr.mxu0 0.0
      %5584 = vmatpush2.xpose.msra.mxu0 %v5410
      %5585 = vmatprep.subr.mxu0 0.0
      %5586 = vmatpush2.xpose.msra.mxu0 %v5407
      %5587 = vmatprep.subr.mxu0 0.0
      %5588 = vmatpush2.xpose.msra.mxu0 %v5404
      %5589 = vmatprep.subr.mxu0 0.0
      %5590 = vmatpush2.xpose.msra.mxu0 %v5401
      %5591 = vmatprep.subr.mxu0 0.0
      %5592 = vmatpush2.xpose.msra.mxu0 %v5398
      %5593 = vmatprep.subr.mxu0 0.0
      %5594 = vmatpush2.xpose.msra.mxu0 %v5395
      %5595 = vmatprep.mubr.f32.mxu0 0.0
      %5596 = vmatmul.mubr.f32.gmra.mxu0 %v5239
      %v5597 = vpop.f32.mrf.mxu0
      %v5598 = vadd.f32 0.0, %v5597
      %v5599 = vpop.f32.mrf.mxu0
      %v5600 = vadd.f32 0.0, %v5599
      %5601 = vmatprep.mubr.f32.mxu0 0.0
      %5602 = vmatmul.mubr.f32.gmra.mxu0 %v5242
      %v5603 = vpop.f32.mrf.mxu0
      %v5604 = vadd.f32 0.0, %v5603
      %v5605 = vpop.f32.mrf.mxu0
      %v5606 = vadd.f32 0.0, %v5605
      %5607 = vmatprep.mubr.f32.mxu0 0.0
      %5608 = vmatmul.mubr.f32.gmra.mxu0 %v5245
      %v5609 = vpop.f32.mrf.mxu0
      %v5610 = vadd.f32 0.0, %v5609
      %v5611 = vpop.f32.mrf.mxu0
      %v5612 = vadd.f32 0.0, %v5611
      %5613 = vmatprep.mubr.f32.mxu0 0.0
      %5614 = vmatmul.mubr.f32.gmra.mxu0 %v5248
      %v5615 = vpop.f32.mrf.mxu0
      %v5616 = vadd.f32 0.0, %v5615
      %v5617 = vpop.f32.mrf.mxu0
      %v5618 = vadd.f32 0.0, %v5617
      %5619 = vdwg.mxu0
      %5620 = vst [vmem:[%s274] sm:$0xff] %v5509
      %5621 = vst [vmem:[%s274 + $0x8] sm:$0xff] %v5511
      %5622 = vst [vmem:[%s274 + $0x10] sm:$0xff] %v5515
      %5623 = vst [vmem:[%s274 + $0x18] sm:$0xff] %v5517
      %5624 = vst [vmem:[%s274 + $0x20] sm:$0xff] %v5521
      %5625 = vst [vmem:[%s274 + $0x28] sm:$0xff] %v5523
      %5626 = vst [vmem:[%s274 + $0x30] sm:$0xff] %v5527
      %5627 = vst [vmem:[%s274 + $0x38] sm:$0xff] %v5529
      %s5628 = scalar_lea.vmem %s274, 64
      %5629 = vst [vmem:[%s5628] sm:$0xff] %v5598
      %5630 = vst [vmem:[%s5628 + $0x8] sm:$0xff] %v5600
      %5631 = vst [vmem:[%s5628 + $0x10] sm:$0xff] %v5604
      %5632 = vst [vmem:[%s5628 + $0x18] sm:$0xff] %v5606
      %5633 = vst [vmem:[%s5628 + $0x20] sm:$0xff] %v5610
      %5634 = vst [vmem:[%s5628 + $0x28] sm:$0xff] %v5612
      %5635 = vst [vmem:[%s5628 + $0x30] sm:$0xff] %v5616
      %5636 = vst [vmem:[%s5628 + $0x38] sm:$0xff] %v5618
      %s5637 = smul.u32 %s19, 3
      %s5638 = smul.u32 %s19, 2
      %s5639 = ssub.s32 1, %s5638
      %s5640 = smul.u32 %s5639, %s20
      %s5641 = sadd.s32 %s5637, %s5640
      %p5642 = scmp.lt.s32.totalorder %s19, 1
      %s5643 = scalar_select %p5642, %s19, 1
      %p5644 = scmp.lt.s32.totalorder %s5641, 3
      %s5645 = scalar_select %p5644, %s5641, 3
      %s5646 = smul.addr %s5645, 16
      %s5647 = smul.addr %s5643, 64
      %s5648 = sadd.s32 %s5646, %s5647
      %s5649 = smul.addr %s5648, 8
      %s5650 = scalar_lea.vmem %s4, %s5649
      // Predicated region
      $region41: #{bcrnn_forward.1} parent=35 // pred_check
        %p5651 = pneg %p156
      $region42: #{bcrnn_forward.1} parent=35 // pred_check_branch
        %5653 = sbr.rel (%p5651) target = $region44
      $region43: #{bcrnn_forward.1} parent=35 // pred_region
        %s5654 = smul.u32 %s19, 3
        %s5655 = smul.u32 %s19, 2
        %s5656 = ssub.s32 1, %s5655
        %s5657 = smul.u32 %s5656, %s20
        %s5658 = sadd.s32 %s5654, %s5657
      $region44: #{bcrnn_forward.1} parent=35 // pred_fallthru
        _
    $region36: #{bcrnn_forward.1} parent=5 // pred_fallthru
      _
    %p5659 = scmp.le.s32.totalorder 2, %s10
    // Predicated region
    $region45: #{bcrnn_forward.1} parent=5 // pred_check
      %p5660 = pneg %p5659
    $region46: #{bcrnn_forward.1} parent=5 // pred_check_branch
      %5662 = sbr.rel (%p5660) target = $region48
    $region47: #{bcrnn_forward.1} parent=5 // pred_region
      %s5663 = ssub.s32 %s10, 2
      // Predicated region
      $region49: #{bcrnn_forward.1} parent=47 // pred_check
        %p5664 = pneg %p162
      $region50: #{bcrnn_forward.1} parent=47 // pred_check_branch
        %5666 = sbr.rel (%p5664) target = $region52
      $region51: #{bcrnn_forward.1} parent=47 // pred_region
        %s5667 = smul.u32 %s21, 3
        %s5668 = smul.u32 %s21, 2
        %s5669 = ssub.s32 1, %s5668
        %s5670 = smul.u32 %s5669, %s22
        %s5671 = sadd.s32 %s5667, %s5670
        %p5672 = scmp.lt.s32.totalorder %s21, 1
        %s5673 = scalar_select %p5672, %s21, 1
        %p5674 = scmp.lt.s32.totalorder %s5671, 3
        %s5675 = scalar_select %p5674, %s5671, 3
        %s5676 = smul.addr %s5675, 16
        %s5677 = smul.addr %s5673, 64
        %s5678 = sadd.s32 %s5676, %s5677
        %s5679 = smul.addr %s5678, 8
        %s5680 = scalar_lea.vmem %s4, %s5679
      $region52: #{bcrnn_forward.1} parent=47 // pred_fallthru
        _
    $region48: #{bcrnn_forward.1} parent=5 // pred_fallthru
      _
  $region6: #{bcrnn_forward.1} parent=0 // loop_footer
    %s14 = sadd.s32 1, %s10
  $region7: #{bcrnn_forward.1} parent=0 // loop_footer_branch
    %9 = sbr.rel target = $region3
  $region8: #{bcrnn_forward.1} parent=0 // loop_exit
    _

</llo_original>
